<compile_context>
chip_gen: v7x
topology: tpu7x:2x2x1
jax: 0.10.0
libtpu: 0.0.40
codegen_flags: <defaults>
</compile_context>

<pallas_src>
from math import sqrt

import jax
import jax.numpy as jnp
from jax.experimental import pallas as pl
from jax.experimental.pallas import tpu as pltpu


# ----------------------------- Pallas kernels ------------------------------

def _matmul_bias_kernel(x_ref, w_ref, b_ref, o_ref):
    # x_ref : (1, K, T)    bf16  -- K = 9*Cin (3x3 taps folded into contraction)
    # w_ref : (Cout, K)    bf16
    # b_ref : (Cout, 1)    f32
    # o_ref : (1, Cout, T) f32   -- lane-dense: last dim is the HW tile
    acc = jnp.dot(w_ref[...], x_ref[0], preferred_element_type=jnp.float32)
    o_ref[0] = (acc + b_ref[...]).astype(o_ref.dtype)


def _matmul_bias_softmax_kernel(x_ref, w_ref, b_ref, o_ref):
    # conv + bias + softmax over channels.  Channels live on the sublane axis,
    # HW on the lane axis -> sublane-axis reduce, EUP exp, EUP approx recip.
    acc = jnp.dot(w_ref[...], x_ref[0], preferred_element_type=jnp.float32)
    acc = acc + b_ref[...]
    m = jnp.max(acc, axis=0, keepdims=True)
    e = jnp.exp(acc - m)
    s = jnp.sum(e, axis=0, keepdims=True)
    o_ref[0] = (e * pl.reciprocal(s, approx=True)).astype(o_ref.dtype)


# ----------------------------- pallas wrappers ------------------------------

_HW_TILE_TARGET = 4096            # lanes per grid step; fits v5e/v6e/v7x VMEM
_VMEM_LIMIT = 32 * 1024 * 1024    # safe on all generations


def _pick_hw_tile(hw, target=_HW_TILE_TARGET):
    """Largest multiple of 128 <= target that divides hw (else the full hw)."""
    if hw <= target:
        return hw
    t = (target // 128) * 128
    while t >= 128:
        if hw % t == 0:
            return t
        t -= 128
    return hw


def _matmul_bias(xf, wmat, b, *, softmax=False):
    """out[n, :, p] = wmat @ xf[n, :, p] + b   (optional channel softmax).

    xf   : (N, K, HW) f32 activations (im2col taps for 3x3 convs)
    wmat : (Cout, K)  f32 weights
    b    : (Cout,)    f32 bias
    """
    n, k, hw = xf.shape
    cout = wmat.shape[0]

    # Pad the contracting dim to a multiple of 8 (zeros contribute nothing).
    kp = (-k) % 8
    if kp:
        xf = jnp.pad(xf, ((0, 0), (0, kp), (0, 0)))
        wmat = jnp.pad(wmat, ((0, 0), (0, kp)))
        k += kp

    # Feed the MXU bf16; accumulate in f32; bias / epilogue math in f32.
    xf = xf.astype(jnp.bfloat16)
    wmat = wmat.astype(jnp.bfloat16)
    b2 = b.reshape(cout, 1).astype(jnp.float32)

    t = _pick_hw_tile(hw)
    grid = (n, hw // t)
    kernel = _matmul_bias_softmax_kernel if softmax else _matmul_bias_kernel

    out = pl.pallas_call(
        kernel,
        out_shape=jax.ShapeDtypeStruct((n, cout, hw), jnp.float32),
        grid=grid,
        in_specs=[
            pl.BlockSpec((1, k, t), lambda i, j: (i, 0, j)),
            pl.BlockSpec((cout, k), lambda i, j: (0, 0)),
            pl.BlockSpec((cout, 1), lambda i, j: (0, 0)),
        ],
        out_specs=pl.BlockSpec((1, cout, t), lambda i, j: (i, 0, j)),
        compiler_params=pltpu.CompilerParams(
            dimension_semantics=("parallel", "parallel"),
            vmem_limit_bytes=_VMEM_LIMIT,
        ),
    )(xf, wmat, b2)
    return out


def conv3x3(x, w, b, *, softmax_epilogue=False):
    """3x3 conv, stride 1, pad 1, bias.  x: (N,Cin,H,W)  w: (Cout,Cin,3,3)."""
    n, cin, h, wd = x.shape
    cout = w.shape[0]
    # im2col with the 9 taps folded into the contracting (channel) dim so the
    # kernel runs a single (Cout, 9*Cin) x (9*Cin, T) MXU matmul per tile.
    # TODO(synk): build the taps in-kernel from a halo'd DMA row-tile
    # (memory_space=pl.ANY + make_async_copy) to cut im2col HBM reads ~9x.
    xp = jnp.pad(x, ((0, 0), (0, 0), (1, 1), (1, 1)))
    taps = jnp.concatenate(
        [xp[:, :, dy:dy + h, dx:dx + wd] for dy in range(3) for dx in range(3)],
        axis=1)                                      # (N, 9*Cin, H, W)
    wmat = jnp.transpose(w, (0, 2, 3, 1)).reshape(cout, 9 * cin)
    out = _matmul_bias(taps.reshape(n, 9 * cin, h * wd), wmat, b,
                       softmax=softmax_epilogue)
    return out.reshape(n, cout, h, wd)


def conv1x1(x, w, b):
    """1x1 conv with bias.  x: (N,Cin,H,W)  w: (Cout,Cin,1,1)."""
    n, cin, h, wd = x.shape
    cout = w.shape[0]
    out = _matmul_bias(x.reshape(n, cin, h * wd), w.reshape(cout, cin), b)
    return out.reshape(n, cout, h, wd)


# ----------------------------- elementwise glue ------------------------------

def _downsample_half_bilinear(x):
    # F.interpolate(x, (H/2, W/2), mode='bilinear', align_corners=False) for an
    # exact factor-2 downsample == 2x2 average (exact for even H, W).
    n, c, h, w = x.shape
    return x.reshape(n, c, h // 2, 2, w // 2, 2).mean(axis=(3, 5))


def _upsample_2x_nearest(x):
    # nn.Upsample(size=(H, W)) from (H/2, W/2), default mode='nearest'.
    return jnp.repeat(jnp.repeat(x, 2, axis=2), 2, axis=3)


# ----------------------------- parameters -----------------------------------

_LAYERS = {
    "s1c1": (1, 8, 3),   "s1c2": (8, 24, 3),  "s1c3": (24, 8, 3),
    "s1c4": (8, 24, 3),  "s1c5": (24, 24, 3),
    "s1o1": (24, 8, 3),  "s1o2": (8, 8, 3),
    "s2c1": (1, 16, 3),  "s2c2": (16, 48, 3), "s2c3": (48, 16, 3),
    "s2c4": (16, 40, 3), "s2c5": (40, 16, 3),
    "s2u1": (48, 24, 1), "s2u2": (16, 8, 1),
}


def init_params(key):
    params = {}
    for idx, (name, (cin, cout, k)) in enumerate(sorted(_LAYERS.items())):
        kw, kb = jax.random.split(jax.random.fold_in(key, idx))
        fan_in = cin * k * k
        bound = 1.0 / sqrt(fan_in)
        w = jax.random.uniform(kw, (cout, cin, k, k), jnp.float32, -bound, bound)
        b = jax.random.uniform(kb, (cout,), jnp.float32, -bound, bound)
        params[name] = (w, b)
    return params


# ----------------------------- forward ---------------------------------------

@jax.jit
def hrnet_forward(params, inputs):
    # inputs: NCHW (N, 1, H, W), matching the PyTorch module.
    x = inputs.astype(jnp.float32)
    half = _downsample_half_bilinear(x)

    s1_1 = conv3x3(x, *params["s1c1"])
    s1_2 = conv3x3(s1_1, *params["s1c2"])

    s2_1 = conv3x3(half, *params["s2c1"])
    s2_2 = conv3x3(s2_1, *params["s2c2"])
    # stage_2_up_1: 1x1 conv then nearest upsample to full resolution
    s2_up_1 = _upsample_2x_nearest(conv1x1(s2_2, *params["s2u1"]))

    s1_3 = conv3x3(s1_2 + s2_up_1, *params["s1c3"])

    s2_3 = conv3x3(s2_2, *params["s2c3"])
    s2_4 = conv3x3(s2_3, *params["s2c4"])
    s2_5 = conv3x3(s2_4, *params["s2c5"])
    s2_up_2 = _upsample_2x_nearest(conv1x1(s2_5, *params["s2u2"]))

    s1_4 = conv3x3(s1_3 + s2_up_2, *params["s1c4"])
    s1_5 = conv3x3(s1_4, *params["s1c5"])

    # stage_1_out: conv3x3 -> softmax(channels) [fused epilogue] -> conv3x3
    s1_sm = conv3x3(s1_5, *params["s1o1"], softmax_epilogue=True)
    s1_out = conv3x3(s1_sm, *params["s1o2"])

    return s1_out, s1_5


# ----------------------------- main ------------------------------------------

if __name__ == "__main__":
    key = jax.random.PRNGKey(0)
    input_size = 16  # small spatial size for the demo (module default is 512)
    params = init_params(key)
    x = jax.random.normal(jax.random.fold_in(key, 999),
                          (2, 1, input_size, input_size), jnp.float32)

    s1_out, s1_5 = hrnet_forward(params, x)
    jax.block_until_ready((s1_out, s1_5))

    assert s1_out.shape == (2, 8, input_size, input_size), s1_out.shape
    assert s1_5.shape == (2, 24, input_size, input_size), s1_5.shape
    assert bool(jnp.all(jnp.isfinite(s1_out))) and bool(jnp.all(jnp.isfinite(s1_5)))
    print("KERNEL_OK")
</pallas_src>

<mosaic_0001>
module attributes {stable_mosaic.version = 11 : i64} {
  func.func @_matmul_bias_kernel(%arg0: i32, %arg1: i32, %arg2: memref<1x16x256xbf16, #tpu.memory_space<vmem>>, %arg3: memref<8x16xbf16, #tpu.memory_space<vmem>>, %arg4: memref<8x1xf32, #tpu.memory_space<vmem>>, %arg5: memref<1x8x256xf32, #tpu.memory_space<vmem>>) attributes {dimension_semantics = [#tpu.dimension_semantics<parallel>, #tpu.dimension_semantics<parallel>], iteration_bounds = array<i64: 2, 1>, scalar_prefetch = 0 : i64, scratch_operands = 0 : i64, tpu.core_type = #tpu.core_type<tc>, window_params = [{transform_indices = @transform_0, window_bounds = array<i64: 1, 16, 256>}, {pipeline_mode = #tpu.pipeline_mode<synchronous>, transform_indices = @transform_1, window_bounds = array<i64: 8, 16>}, {pipeline_mode = #tpu.pipeline_mode<synchronous>, transform_indices = @transform_2, window_bounds = array<i64: 8, 1>}, {transform_indices = @transform_3, window_bounds = array<i64: 1, 8, 256>}]} {
    %c0 = arith.constant 0 : index
    %c0_0 = arith.constant 0 : index
    %0 = vector.load %arg3[%c0, %c0_0] : memref<8x16xbf16, #tpu.memory_space<vmem>>, vector<8x16xbf16>
    %c0_1 = arith.constant 0 : index
    %c0_2 = arith.constant 0 : index
    %c0_3 = arith.constant 0 : index
    %1 = vector.load %arg2[%c0_1, %c0_2, %c0_3] : memref<1x16x256xbf16, #tpu.memory_space<vmem>>, vector<1x16x256xbf16>
    %2 = vector.shape_cast %1 : vector<1x16x256xbf16> to vector<16x256xbf16>
    %cst = arith.constant dense<0.000000e+00> : vector<8x256xf32>
    %3 = tpu.matmul %0, %2, %cst {dimension_numbers = #tpu.dot_dimension_numbers<[1], [0], [0], [1], [0, 0, 1, 1], [], []>} : vector<8x16xbf16>, vector<16x256xbf16>, vector<8x256xf32> -> vector<8x256xf32>
    %c0_4 = arith.constant 0 : index
    %c0_5 = arith.constant 0 : index
    %4 = vector.load %arg4[%c0_4, %c0_5] : memref<8x1xf32, #tpu.memory_space<vmem>>, vector<8x1xf32>
    %5 = vector.broadcast %4 : vector<8x1xf32> to vector<8x256xf32>
    %6 = arith.addf %3, %5 : vector<8x256xf32>
    %c0_6 = arith.constant 0 : index
    %c0_7 = arith.constant 0 : index
    %c0_8 = arith.constant 0 : index
    %7 = vector.load %arg5[%c0_6, %c0_7, %c0_8] : memref<1x8x256xf32, #tpu.memory_space<vmem>>, vector<1x8x256xf32>
    %8 = vector.shape_cast %7 : vector<1x8x256xf32> to vector<8x256xf32>
    %9 = vector.shape_cast %6 : vector<8x256xf32> to vector<1x8x256xf32>
    tpu.vector_store %arg5[%c0_6, %c0_7, %c0_8], %9 {strides = array<i32>} : memref<1x8x256xf32, #tpu.memory_space<vmem>>, vector<1x8x256xf32>,
    return
  }
  func.func @transform_0(%arg0: i32, %arg1: i32) -> (i32, i32, i32) {
    %c0_i32 = arith.constant 0 : i32
    %c0_i32_0 = arith.constant 0 : i32
    return %arg0, %c0_i32, %arg1 : i32, i32, i32
  }
  func.func @transform_1(%arg0: i32, %arg1: i32) -> (i32, i32) {
    %c0_i32 = arith.constant 0 : i32
    %c0_i32_0 = arith.constant 0 : i32
    %c0_i32_1 = arith.constant 0 : i32
    return %c0_i32, %c0_i32_0 : i32, i32
  }
  func.func @transform_2(%arg0: i32, %arg1: i32) -> (i32, i32) {
    %c0_i32 = arith.constant 0 : i32
    %c0_i32_0 = arith.constant 0 : i32
    %c0_i32_1 = arith.constant 0 : i32
    return %c0_i32, %c0_i32_0 : i32, i32
  }
  func.func @transform_3(%arg0: i32, %arg1: i32) -> (i32, i32, i32) {
    %c0_i32 = arith.constant 0 : i32
    %c0_i32_0 = arith.constant 0 : i32
    return %arg0, %c0_i32, %arg1 : i32, i32, i32
  }
}

module attributes {stable_mosaic.version = 11 : i64} {
  func.func @_matmul_bias_kernel(%arg0: i32, %arg1: i32, %arg2: memref<1x16x64xbf16, #tpu.memory_space<vmem>>, %arg3: memref<16x16xbf16, #tpu.memory_space<vmem>>, %arg4: memref<16x1xf32, #tpu.memory_space<vmem>>, %arg5: memref<1x16x64xf32, #tpu.memory_space<vmem>>) attributes {dimension_semantics = [#tpu.dimension_semantics<parallel>, #tpu.dimension_semantics<parallel>], iteration_bounds = array<i64: 2, 1>, scalar_prefetch = 0 : i64, scratch_operands = 0 : i64, tpu.core_type = #tpu.core_type<tc>, window_params = [{transform_indices = @transform_0, window_bounds = array<i64: 1, 16, 64>}, {pipeline_mode = #tpu.pipeline_mode<synchronous>, transform_indices = @transform_1, window_bounds = array<i64: 16, 16>}, {pipeline_mode = #tpu.pipeline_mode<synchronous>, transform_indices = @transform_2, window_bounds = array<i64: 16, 1>}, {transform_indices = @transform_3, window_bounds = array<i64: 1, 16, 64>}]} {
    %c0 = arith.constant 0 : index
    %c0_0 = arith.constant 0 : index
    %0 = vector.load %arg3[%c0, %c0_0] : memref<16x16xbf16, #tpu.memory_space<vmem>>, vector<16x16xbf16>
    %c0_1 = arith.constant 0 : index
    %c0_2 = arith.constant 0 : index
    %c0_3 = arith.constant 0 : index
    %1 = vector.load %arg2[%c0_1, %c0_2, %c0_3] : memref<1x16x64xbf16, #tpu.memory_space<vmem>>, vector<1x16x64xbf16>
    %2 = vector.shape_cast %1 : vector<1x16x64xbf16> to vector<16x64xbf16>
    %cst = arith.constant dense<0.000000e+00> : vector<16x64xf32>
    %3 = tpu.matmul %0, %2, %cst {dimension_numbers = #tpu.dot_dimension_numbers<[1], [0], [0], [1], [0, 0, 1, 1], [], []>} : vector<16x16xbf16>, vector<16x64xbf16>, vector<16x64xf32> -> vector<16x64xf32>
    %c0_4 = arith.constant 0 : index
    %c0_5 = arith.constant 0 : index
    %4 = vector.load %arg4[%c0_4, %c0_5] : memref<16x1xf32, #tpu.memory_space<vmem>>, vector<16x1xf32>
    %5 = vector.broadcast %4 : vector<16x1xf32> to vector<16x64xf32>
    %6 = arith.addf %3, %5 : vector<16x64xf32>
    %c0_6 = arith.constant 0 : index
    %c0_7 = arith.constant 0 : index
    %c0_8 = arith.constant 0 : index
    %7 = vector.load %arg5[%c0_6, %c0_7, %c0_8] : memref<1x16x64xf32, #tpu.memory_space<vmem>>, vector<1x16x64xf32>
    %8 = vector.shape_cast %7 : vector<1x16x64xf32> to vector<16x64xf32>
    %9 = vector.shape_cast %6 : vector<16x64xf32> to vector<1x16x64xf32>
    tpu.vector_store %arg5[%c0_6, %c0_7, %c0_8], %9 {strides = array<i32>} : memref<1x16x64xf32, #tpu.memory_space<vmem>>, vector<1x16x64xf32>,
    return
  }
  func.func @transform_0(%arg0: i32, %arg1: i32) -> (i32, i32, i32) {
    %c0_i32 = arith.constant 0 : i32
    %c0_i32_0 = arith.constant 0 : i32
    return %arg0, %c0_i32, %arg1 : i32, i32, i32
  }
  func.func @transform_1(%arg0: i32, %arg1: i32) -> (i32, i32) {
    %c0_i32 = arith.constant 0 : i32
    %c0_i32_0 = arith.constant 0 : i32
    %c0_i32_1 = arith.constant 0 : i32
    return %c0_i32, %c0_i32_0 : i32, i32
  }
  func.func @transform_2(%arg0: i32, %arg1: i32) -> (i32, i32) {
    %c0_i32 = arith.constant 0 : i32
    %c0_i32_0 = arith.constant 0 : i32
    %c0_i32_1 = arith.constant 0 : i32
    return %c0_i32, %c0_i32_0 : i32, i32
  }
  func.func @transform_3(%arg0: i32, %arg1: i32) -> (i32, i32, i32) {
    %c0_i32 = arith.constant 0 : i32
    %c0_i32_0 = arith.constant 0 : i32
    return %arg0, %c0_i32, %arg1 : i32, i32, i32
  }
}

module attributes {stable_mosaic.version = 11 : i64} {
  func.func @_matmul_bias_kernel(%arg0: i32, %arg1: i32, %arg2: memref<1x144x64xbf16, #tpu.memory_space<vmem>>, %arg3: memref<48x144xbf16, #tpu.memory_space<vmem>>, %arg4: memref<48x1xf32, #tpu.memory_space<vmem>>, %arg5: memref<1x48x64xf32, #tpu.memory_space<vmem>>) attributes {dimension_semantics = [#tpu.dimension_semantics<parallel>, #tpu.dimension_semantics<parallel>], iteration_bounds = array<i64: 2, 1>, scalar_prefetch = 0 : i64, scratch_operands = 0 : i64, tpu.core_type = #tpu.core_type<tc>, window_params = [{transform_indices = @transform_0, window_bounds = array<i64: 1, 144, 64>}, {pipeline_mode = #tpu.pipeline_mode<synchronous>, transform_indices = @transform_1, window_bounds = array<i64: 48, 144>}, {pipeline_mode = #tpu.pipeline_mode<synchronous>, transform_indices = @transform_2, window_bounds = array<i64: 48, 1>}, {transform_indices = @transform_3, window_bounds = array<i64: 1, 48, 64>}]} {
    %c0 = arith.constant 0 : index
    %c0_0 = arith.constant 0 : index
    %0 = vector.load %arg3[%c0, %c0_0] : memref<48x144xbf16, #tpu.memory_space<vmem>>, vector<48x144xbf16>
    %c0_1 = arith.constant 0 : index
    %c0_2 = arith.constant 0 : index
    %c0_3 = arith.constant 0 : index
    %1 = vector.load %arg2[%c0_1, %c0_2, %c0_3] : memref<1x144x64xbf16, #tpu.memory_space<vmem>>, vector<1x144x64xbf16>
    %2 = vector.shape_cast %1 : vector<1x144x64xbf16> to vector<144x64xbf16>
    %cst = arith.constant dense<0.000000e+00> : vector<48x64xf32>
    %3 = tpu.matmul %0, %2, %cst {dimension_numbers = #tpu.dot_dimension_numbers<[1], [0], [0], [1], [0, 0, 1, 1], [], []>} : vector<48x144xbf16>, vector<144x64xbf16>, vector<48x64xf32> -> vector<48x64xf32>
    %c0_4 = arith.constant 0 : index
    %c0_5 = arith.constant 0 : index
    %4 = vector.load %arg4[%c0_4, %c0_5] : memref<48x1xf32, #tpu.memory_space<vmem>>, vector<48x1xf32>
    %5 = vector.broadcast %4 : vector<48x1xf32> to vector<48x64xf32>
    %6 = arith.addf %3, %5 : vector<48x64xf32>
    %c0_6 = arith.constant 0 : index
    %c0_7 = arith.constant 0 : index
    %c0_8 = arith.constant 0 : index
    %7 = vector.load %arg5[%c0_6, %c0_7, %c0_8] : memref<1x48x64xf32, #tpu.memory_space<vmem>>, vector<1x48x64xf32>
    %8 = vector.shape_cast %7 : vector<1x48x64xf32> to vector<48x64xf32>
    %9 = vector.shape_cast %6 : vector<48x64xf32> to vector<1x48x64xf32>
    tpu.vector_store %arg5[%c0_6, %c0_7, %c0_8], %9 {strides = array<i32>} : memref<1x48x64xf32, #tpu.memory_space<vmem>>, vector<1x48x64xf32>,
    return
  }
  func.func @transform_0(%arg0: i32, %arg1: i32) -> (i32, i32, i32) {
    %c0_i32 = arith.constant 0 : i32
    %c0_i32_0 = arith.constant 0 : i32
    return %arg0, %c0_i32, %arg1 : i32, i32, i32
  }
  func.func @transform_1(%arg0: i32, %arg1: i32) -> (i32, i32) {
    %c0_i32 = arith.constant 0 : i32
    %c0_i32_0 = arith.constant 0 : i32
    %c0_i32_1 = arith.constant 0 : i32
    return %c0_i32, %c0_i32_0 : i32, i32
  }
  func.func @transform_2(%arg0: i32, %arg1: i32) -> (i32, i32) {
    %c0_i32 = arith.constant 0 : i32
    %c0_i32_0 = arith.constant 0 : i32
    %c0_i32_1 = arith.constant 0 : i32
    return %c0_i32, %c0_i32_0 : i32, i32
  }
  func.func @transform_3(%arg0: i32, %arg1: i32) -> (i32, i32, i32) {
    %c0_i32 = arith.constant 0 : i32
    %c0_i32_0 = arith.constant 0 : i32
    return %arg0, %c0_i32, %arg1 : i32, i32, i32
  }
}

module attributes {stable_mosaic.version = 11 : i64} {
  func.func @_matmul_bias_kernel(%arg0: i32, %arg1: i32, %arg2: memref<1x48x64xbf16, #tpu.memory_space<vmem>>, %arg3: memref<24x48xbf16, #tpu.memory_space<vmem>>, %arg4: memref<24x1xf32, #tpu.memory_space<vmem>>, %arg5: memref<1x24x64xf32, #tpu.memory_space<vmem>>) attributes {dimension_semantics = [#tpu.dimension_semantics<parallel>, #tpu.dimension_semantics<parallel>], iteration_bounds = array<i64: 2, 1>, scalar_prefetch = 0 : i64, scratch_operands = 0 : i64, tpu.core_type = #tpu.core_type<tc>, window_params = [{transform_indices = @transform_0, window_bounds = array<i64: 1, 48, 64>}, {pipeline_mode = #tpu.pipeline_mode<synchronous>, transform_indices = @transform_1, window_bounds = array<i64: 24, 48>}, {pipeline_mode = #tpu.pipeline_mode<synchronous>, transform_indices = @transform_2, window_bounds = array<i64: 24, 1>}, {transform_indices = @transform_3, window_bounds = array<i64: 1, 24, 64>}]} {
    %c0 = arith.constant 0 : index
    %c0_0 = arith.constant 0 : index
    %0 = vector.load %arg3[%c0, %c0_0] : memref<24x48xbf16, #tpu.memory_space<vmem>>, vector<24x48xbf16>
    %c0_1 = arith.constant 0 : index
    %c0_2 = arith.constant 0 : index
    %c0_3 = arith.constant 0 : index
    %1 = vector.load %arg2[%c0_1, %c0_2, %c0_3] : memref<1x48x64xbf16, #tpu.memory_space<vmem>>, vector<1x48x64xbf16>
    %2 = vector.shape_cast %1 : vector<1x48x64xbf16> to vector<48x64xbf16>
    %cst = arith.constant dense<0.000000e+00> : vector<24x64xf32>
    %3 = tpu.matmul %0, %2, %cst {dimension_numbers = #tpu.dot_dimension_numbers<[1], [0], [0], [1], [0, 0, 1, 1], [], []>} : vector<24x48xbf16>, vector<48x64xbf16>, vector<24x64xf32> -> vector<24x64xf32>
    %c0_4 = arith.constant 0 : index
    %c0_5 = arith.constant 0 : index
    %4 = vector.load %arg4[%c0_4, %c0_5] : memref<24x1xf32, #tpu.memory_space<vmem>>, vector<24x1xf32>
    %5 = vector.broadcast %4 : vector<24x1xf32> to vector<24x64xf32>
    %6 = arith.addf %3, %5 : vector<24x64xf32>
    %c0_6 = arith.constant 0 : index
    %c0_7 = arith.constant 0 : index
    %c0_8 = arith.constant 0 : index
    %7 = vector.load %arg5[%c0_6, %c0_7, %c0_8] : memref<1x24x64xf32, #tpu.memory_space<vmem>>, vector<1x24x64xf32>
    %8 = vector.shape_cast %7 : vector<1x24x64xf32> to vector<24x64xf32>
    %9 = vector.shape_cast %6 : vector<24x64xf32> to vector<1x24x64xf32>
    tpu.vector_store %arg5[%c0_6, %c0_7, %c0_8], %9 {strides = array<i32>} : memref<1x24x64xf32, #tpu.memory_space<vmem>>, vector<1x24x64xf32>,
    return
  }
  func.func @transform_0(%arg0: i32, %arg1: i32) -> (i32, i32, i32) {
    %c0_i32 = arith.constant 0 : i32
    %c0_i32_0 = arith.constant 0 : i32
    return %arg0, %c0_i32, %arg1 : i32, i32, i32
  }
  func.func @transform_1(%arg0: i32, %arg1: i32) -> (i32, i32) {
    %c0_i32 = arith.constant 0 : i32
    %c0_i32_0 = arith.constant 0 : i32
    %c0_i32_1 = arith.constant 0 : i32
    return %c0_i32, %c0_i32_0 : i32, i32
  }
  func.func @transform_2(%arg0: i32, %arg1: i32) -> (i32, i32) {
    %c0_i32 = arith.constant 0 : i32
    %c0_i32_0 = arith.constant 0 : i32
    %c0_i32_1 = arith.constant 0 : i32
    return %c0_i32, %c0_i32_0 : i32, i32
  }
  func.func @transform_3(%arg0: i32, %arg1: i32) -> (i32, i32, i32) {
    %c0_i32 = arith.constant 0 : i32
    %c0_i32_0 = arith.constant 0 : i32
    return %arg0, %c0_i32, %arg1 : i32, i32, i32
  }
}

module attributes {stable_mosaic.version = 11 : i64} {
  func.func @_matmul_bias_kernel(%arg0: i32, %arg1: i32, %arg2: memref<1x432x64xbf16, #tpu.memory_space<vmem>>, %arg3: memref<16x432xbf16, #tpu.memory_space<vmem>>, %arg4: memref<16x1xf32, #tpu.memory_space<vmem>>, %arg5: memref<1x16x64xf32, #tpu.memory_space<vmem>>) attributes {dimension_semantics = [#tpu.dimension_semantics<parallel>, #tpu.dimension_semantics<parallel>], iteration_bounds = array<i64: 2, 1>, scalar_prefetch = 0 : i64, scratch_operands = 0 : i64, tpu.core_type = #tpu.core_type<tc>, window_params = [{transform_indices = @transform_0, window_bounds = array<i64: 1, 432, 64>}, {pipeline_mode = #tpu.pipeline_mode<synchronous>, transform_indices = @transform_1, window_bounds = array<i64: 16, 432>}, {pipeline_mode = #tpu.pipeline_mode<synchronous>, transform_indices = @transform_2, window_bounds = array<i64: 16, 1>}, {transform_indices = @transform_3, window_bounds = array<i64: 1, 16, 64>}]} {
    %c0 = arith.constant 0 : index
    %c0_0 = arith.constant 0 : index
    %0 = vector.load %arg3[%c0, %c0_0] : memref<16x432xbf16, #tpu.memory_space<vmem>>, vector<16x432xbf16>
    %c0_1 = arith.constant 0 : index
    %c0_2 = arith.constant 0 : index
    %c0_3 = arith.constant 0 : index
    %1 = vector.load %arg2[%c0_1, %c0_2, %c0_3] : memref<1x432x64xbf16, #tpu.memory_space<vmem>>, vector<1x432x64xbf16>
    %2 = vector.shape_cast %1 : vector<1x432x64xbf16> to vector<432x64xbf16>
    %cst = arith.constant dense<0.000000e+00> : vector<16x64xf32>
    %3 = tpu.matmul %0, %2, %cst {dimension_numbers = #tpu.dot_dimension_numbers<[1], [0], [0], [1], [0, 0, 1, 1], [], []>} : vector<16x432xbf16>, vector<432x64xbf16>, vector<16x64xf32> -> vector<16x64xf32>
    %c0_4 = arith.constant 0 : index
    %c0_5 = arith.constant 0 : index
    %4 = vector.load %arg4[%c0_4, %c0_5] : memref<16x1xf32, #tpu.memory_space<vmem>>, vector<16x1xf32>
    %5 = vector.broadcast %4 : vector<16x1xf32> to vector<16x64xf32>
    %6 = arith.addf %3, %5 : vector<16x64xf32>
    %c0_6 = arith.constant 0 : index
    %c0_7 = arith.constant 0 : index
    %c0_8 = arith.constant 0 : index
    %7 = vector.load %arg5[%c0_6, %c0_7, %c0_8] : memref<1x16x64xf32, #tpu.memory_space<vmem>>, vector<1x16x64xf32>
    %8 = vector.shape_cast %7 : vector<1x16x64xf32> to vector<16x64xf32>
    %9 = vector.shape_cast %6 : vector<16x64xf32> to vector<1x16x64xf32>
    tpu.vector_store %arg5[%c0_6, %c0_7, %c0_8], %9 {strides = array<i32>} : memref<1x16x64xf32, #tpu.memory_space<vmem>>, vector<1x16x64xf32>,
    return
  }
  func.func @transform_0(%arg0: i32, %arg1: i32) -> (i32, i32, i32) {
    %c0_i32 = arith.constant 0 : i32
    %c0_i32_0 = arith.constant 0 : i32
    return %arg0, %c0_i32, %arg1 : i32, i32, i32
  }
  func.func @transform_1(%arg0: i32, %arg1: i32) -> (i32, i32) {
    %c0_i32 = arith.constant 0 : i32
    %c0_i32_0 = arith.constant 0 : i32
    %c0_i32_1 = arith.constant 0 : i32
    return %c0_i32, %c0_i32_0 : i32, i32
  }
  func.func @transform_2(%arg0: i32, %arg1: i32) -> (i32, i32) {
    %c0_i32 = arith.constant 0 : i32
    %c0_i32_0 = arith.constant 0 : i32
    %c0_i32_1 = arith.constant 0 : i32
    return %c0_i32, %c0_i32_0 : i32, i32
  }
  func.func @transform_3(%arg0: i32, %arg1: i32) -> (i32, i32, i32) {
    %c0_i32 = arith.constant 0 : i32
    %c0_i32_0 = arith.constant 0 : i32
    return %arg0, %c0_i32, %arg1 : i32, i32, i32
  }
}

module attributes {stable_mosaic.version = 11 : i64} {
  func.func @_matmul_bias_kernel(%arg0: i32, %arg1: i32, %arg2: memref<1x144x64xbf16, #tpu.memory_space<vmem>>, %arg3: memref<40x144xbf16, #tpu.memory_space<vmem>>, %arg4: memref<40x1xf32, #tpu.memory_space<vmem>>, %arg5: memref<1x40x64xf32, #tpu.memory_space<vmem>>) attributes {dimension_semantics = [#tpu.dimension_semantics<parallel>, #tpu.dimension_semantics<parallel>], iteration_bounds = array<i64: 2, 1>, scalar_prefetch = 0 : i64, scratch_operands = 0 : i64, tpu.core_type = #tpu.core_type<tc>, window_params = [{transform_indices = @transform_0, window_bounds = array<i64: 1, 144, 64>}, {pipeline_mode = #tpu.pipeline_mode<synchronous>, transform_indices = @transform_1, window_bounds = array<i64: 40, 144>}, {pipeline_mode = #tpu.pipeline_mode<synchronous>, transform_indices = @transform_2, window_bounds = array<i64: 40, 1>}, {transform_indices = @transform_3, window_bounds = array<i64: 1, 40, 64>}]} {
    %c0 = arith.constant 0 : index
    %c0_0 = arith.constant 0 : index
    %0 = vector.load %arg3[%c0, %c0_0] : memref<40x144xbf16, #tpu.memory_space<vmem>>, vector<40x144xbf16>
    %c0_1 = arith.constant 0 : index
    %c0_2 = arith.constant 0 : index
    %c0_3 = arith.constant 0 : index
    %1 = vector.load %arg2[%c0_1, %c0_2, %c0_3] : memref<1x144x64xbf16, #tpu.memory_space<vmem>>, vector<1x144x64xbf16>
    %2 = vector.shape_cast %1 : vector<1x144x64xbf16> to vector<144x64xbf16>
    %cst = arith.constant dense<0.000000e+00> : vector<40x64xf32>
    %3 = tpu.matmul %0, %2, %cst {dimension_numbers = #tpu.dot_dimension_numbers<[1], [0], [0], [1], [0, 0, 1, 1], [], []>} : vector<40x144xbf16>, vector<144x64xbf16>, vector<40x64xf32> -> vector<40x64xf32>
    %c0_4 = arith.constant 0 : index
    %c0_5 = arith.constant 0 : index
    %4 = vector.load %arg4[%c0_4, %c0_5] : memref<40x1xf32, #tpu.memory_space<vmem>>, vector<40x1xf32>
    %5 = vector.broadcast %4 : vector<40x1xf32> to vector<40x64xf32>
    %6 = arith.addf %3, %5 : vector<40x64xf32>
    %c0_6 = arith.constant 0 : index
    %c0_7 = arith.constant 0 : index
    %c0_8 = arith.constant 0 : index
    %7 = vector.load %arg5[%c0_6, %c0_7, %c0_8] : memref<1x40x64xf32, #tpu.memory_space<vmem>>, vector<1x40x64xf32>
    %8 = vector.shape_cast %7 : vector<1x40x64xf32> to vector<40x64xf32>
    %9 = vector.shape_cast %6 : vector<40x64xf32> to vector<1x40x64xf32>
    tpu.vector_store %arg5[%c0_6, %c0_7, %c0_8], %9 {strides = array<i32>} : memref<1x40x64xf32, #tpu.memory_space<vmem>>, vector<1x40x64xf32>,
    return
  }
  func.func @transform_0(%arg0: i32, %arg1: i32) -> (i32, i32, i32) {
    %c0_i32 = arith.constant 0 : i32
    %c0_i32_0 = arith.constant 0 : i32
    return %arg0, %c0_i32, %arg1 : i32, i32, i32
  }
  func.func @transform_1(%arg0: i32, %arg1: i32) -> (i32, i32) {
    %c0_i32 = arith.constant 0 : i32
    %c0_i32_0 = arith.constant 0 : i32
    %c0_i32_1 = arith.constant 0 : i32
    return %c0_i32, %c0_i32_0 : i32, i32
  }
  func.func @transform_2(%arg0: i32, %arg1: i32) -> (i32, i32) {
    %c0_i32 = arith.constant 0 : i32
    %c0_i32_0 = arith.constant 0 : i32
    %c0_i32_1 = arith.constant 0 : i32
    return %c0_i32, %c0_i32_0 : i32, i32
  }
  func.func @transform_3(%arg0: i32, %arg1: i32) -> (i32, i32, i32) {
    %c0_i32 = arith.constant 0 : i32
    %c0_i32_0 = arith.constant 0 : i32
    return %arg0, %c0_i32, %arg1 : i32, i32, i32
  }
}

module attributes {stable_mosaic.version = 11 : i64} {
  func.func @_matmul_bias_kernel(%arg0: i32, %arg1: i32, %arg2: memref<1x360x64xbf16, #tpu.memory_space<vmem>>, %arg3: memref<16x360xbf16, #tpu.memory_space<vmem>>, %arg4: memref<16x1xf32, #tpu.memory_space<vmem>>, %arg5: memref<1x16x64xf32, #tpu.memory_space<vmem>>) attributes {dimension_semantics = [#tpu.dimension_semantics<parallel>, #tpu.dimension_semantics<parallel>], iteration_bounds = array<i64: 2, 1>, scalar_prefetch = 0 : i64, scratch_operands = 0 : i64, tpu.core_type = #tpu.core_type<tc>, window_params = [{transform_indices = @transform_0, window_bounds = array<i64: 1, 360, 64>}, {pipeline_mode = #tpu.pipeline_mode<synchronous>, transform_indices = @transform_1, window_bounds = array<i64: 16, 360>}, {pipeline_mode = #tpu.pipeline_mode<synchronous>, transform_indices = @transform_2, window_bounds = array<i64: 16, 1>}, {transform_indices = @transform_3, window_bounds = array<i64: 1, 16, 64>}]} {
    %c0 = arith.constant 0 : index
    %c0_0 = arith.constant 0 : index
    %0 = vector.load %arg3[%c0, %c0_0] : memref<16x360xbf16, #tpu.memory_space<vmem>>, vector<16x360xbf16>
    %c0_1 = arith.constant 0 : index
    %c0_2 = arith.constant 0 : index
    %c0_3 = arith.constant 0 : index
    %1 = vector.load %arg2[%c0_1, %c0_2, %c0_3] : memref<1x360x64xbf16, #tpu.memory_space<vmem>>, vector<1x360x64xbf16>
    %2 = vector.shape_cast %1 : vector<1x360x64xbf16> to vector<360x64xbf16>
    %cst = arith.constant dense<0.000000e+00> : vector<16x64xf32>
    %3 = tpu.matmul %0, %2, %cst {dimension_numbers = #tpu.dot_dimension_numbers<[1], [0], [0], [1], [0, 0, 1, 1], [], []>} : vector<16x360xbf16>, vector<360x64xbf16>, vector<16x64xf32> -> vector<16x64xf32>
    %c0_4 = arith.constant 0 : index
    %c0_5 = arith.constant 0 : index
    %4 = vector.load %arg4[%c0_4, %c0_5] : memref<16x1xf32, #tpu.memory_space<vmem>>, vector<16x1xf32>
    %5 = vector.broadcast %4 : vector<16x1xf32> to vector<16x64xf32>
    %6 = arith.addf %3, %5 : vector<16x64xf32>
    %c0_6 = arith.constant 0 : index
    %c0_7 = arith.constant 0 : index
    %c0_8 = arith.constant 0 : index
    %7 = vector.load %arg5[%c0_6, %c0_7, %c0_8] : memref<1x16x64xf32, #tpu.memory_space<vmem>>, vector<1x16x64xf32>
    %8 = vector.shape_cast %7 : vector<1x16x64xf32> to vector<16x64xf32>
    %9 = vector.shape_cast %6 : vector<16x64xf32> to vector<1x16x64xf32>
    tpu.vector_store %arg5[%c0_6, %c0_7, %c0_8], %9 {strides = array<i32>} : memref<1x16x64xf32, #tpu.memory_space<vmem>>, vector<1x16x64xf32>,
    return
  }
  func.func @transform_0(%arg0: i32, %arg1: i32) -> (i32, i32, i32) {
    %c0_i32 = arith.constant 0 : i32
    %c0_i32_0 = arith.constant 0 : i32
    return %arg0, %c0_i32, %arg1 : i32, i32, i32
  }
  func.func @transform_1(%arg0: i32, %arg1: i32) -> (i32, i32) {
    %c0_i32 = arith.constant 0 : i32
    %c0_i32_0 = arith.constant 0 : i32
    %c0_i32_1 = arith.constant 0 : i32
    return %c0_i32, %c0_i32_0 : i32, i32
  }
  func.func @transform_2(%arg0: i32, %arg1: i32) -> (i32, i32) {
    %c0_i32 = arith.constant 0 : i32
    %c0_i32_0 = arith.constant 0 : i32
    %c0_i32_1 = arith.constant 0 : i32
    return %c0_i32, %c0_i32_0 : i32, i32
  }
  func.func @transform_3(%arg0: i32, %arg1: i32) -> (i32, i32, i32) {
    %c0_i32 = arith.constant 0 : i32
    %c0_i32_0 = arith.constant 0 : i32
    return %arg0, %c0_i32, %arg1 : i32, i32, i32
  }
}

module attributes {stable_mosaic.version = 11 : i64} {
  func.func @_matmul_bias_kernel(%arg0: i32, %arg1: i32, %arg2: memref<1x16x64xbf16, #tpu.memory_space<vmem>>, %arg3: memref<8x16xbf16, #tpu.memory_space<vmem>>, %arg4: memref<8x1xf32, #tpu.memory_space<vmem>>, %arg5: memref<1x8x64xf32, #tpu.memory_space<vmem>>) attributes {dimension_semantics = [#tpu.dimension_semantics<parallel>, #tpu.dimension_semantics<parallel>], iteration_bounds = array<i64: 2, 1>, scalar_prefetch = 0 : i64, scratch_operands = 0 : i64, tpu.core_type = #tpu.core_type<tc>, window_params = [{transform_indices = @transform_0, window_bounds = array<i64: 1, 16, 64>}, {pipeline_mode = #tpu.pipeline_mode<synchronous>, transform_indices = @transform_1, window_bounds = array<i64: 8, 16>}, {pipeline_mode = #tpu.pipeline_mode<synchronous>, transform_indices = @transform_2, window_bounds = array<i64: 8, 1>}, {transform_indices = @transform_3, window_bounds = array<i64: 1, 8, 64>}]} {
    %c0 = arith.constant 0 : index
    %c0_0 = arith.constant 0 : index
    %0 = vector.load %arg3[%c0, %c0_0] : memref<8x16xbf16, #tpu.memory_space<vmem>>, vector<8x16xbf16>
    %c0_1 = arith.constant 0 : index
    %c0_2 = arith.constant 0 : index
    %c0_3 = arith.constant 0 : index
    %1 = vector.load %arg2[%c0_1, %c0_2, %c0_3] : memref<1x16x64xbf16, #tpu.memory_space<vmem>>, vector<1x16x64xbf16>
    %2 = vector.shape_cast %1 : vector<1x16x64xbf16> to vector<16x64xbf16>
    %cst = arith.constant dense<0.000000e+00> : vector<8x64xf32>
    %3 = tpu.matmul %0, %2, %cst {dimension_numbers = #tpu.dot_dimension_numbers<[1], [0], [0], [1], [0, 0, 1, 1], [], []>} : vector<8x16xbf16>, vector<16x64xbf16>, vector<8x64xf32> -> vector<8x64xf32>
    %c0_4 = arith.constant 0 : index
    %c0_5 = arith.constant 0 : index
    %4 = vector.load %arg4[%c0_4, %c0_5] : memref<8x1xf32, #tpu.memory_space<vmem>>, vector<8x1xf32>
    %5 = vector.broadcast %4 : vector<8x1xf32> to vector<8x64xf32>
    %6 = arith.addf %3, %5 : vector<8x64xf32>
    %c0_6 = arith.constant 0 : index
    %c0_7 = arith.constant 0 : index
    %c0_8 = arith.constant 0 : index
    %7 = vector.load %arg5[%c0_6, %c0_7, %c0_8] : memref<1x8x64xf32, #tpu.memory_space<vmem>>, vector<1x8x64xf32>
    %8 = vector.shape_cast %7 : vector<1x8x64xf32> to vector<8x64xf32>
    %9 = vector.shape_cast %6 : vector<8x64xf32> to vector<1x8x64xf32>
    tpu.vector_store %arg5[%c0_6, %c0_7, %c0_8], %9 {strides = array<i32>} : memref<1x8x64xf32, #tpu.memory_space<vmem>>, vector<1x8x64xf32>,
    return
  }
  func.func @transform_0(%arg0: i32, %arg1: i32) -> (i32, i32, i32) {
    %c0_i32 = arith.constant 0 : i32
    %c0_i32_0 = arith.constant 0 : i32
    return %arg0, %c0_i32, %arg1 : i32, i32, i32
  }
  func.func @transform_1(%arg0: i32, %arg1: i32) -> (i32, i32) {
    %c0_i32 = arith.constant 0 : i32
    %c0_i32_0 = arith.constant 0 : i32
    %c0_i32_1 = arith.constant 0 : i32
    return %c0_i32, %c0_i32_0 : i32, i32
  }
  func.func @transform_2(%arg0: i32, %arg1: i32) -> (i32, i32) {
    %c0_i32 = arith.constant 0 : i32
    %c0_i32_0 = arith.constant 0 : i32
    %c0_i32_1 = arith.constant 0 : i32
    return %c0_i32, %c0_i32_0 : i32, i32
  }
  func.func @transform_3(%arg0: i32, %arg1: i32) -> (i32, i32, i32) {
    %c0_i32 = arith.constant 0 : i32
    %c0_i32_0 = arith.constant 0 : i32
    return %arg0, %c0_i32, %arg1 : i32, i32, i32
  }
}

module attributes {stable_mosaic.version = 11 : i64} {
  func.func @_matmul_bias_kernel(%arg0: i32, %arg1: i32, %arg2: memref<1x72x256xbf16, #tpu.memory_space<vmem>>, %arg3: memref<24x72xbf16, #tpu.memory_space<vmem>>, %arg4: memref<24x1xf32, #tpu.memory_space<vmem>>, %arg5: memref<1x24x256xf32, #tpu.memory_space<vmem>>) attributes {dimension_semantics = [#tpu.dimension_semantics<parallel>, #tpu.dimension_semantics<parallel>], iteration_bounds = array<i64: 2, 1>, scalar_prefetch = 0 : i64, scratch_operands = 0 : i64, tpu.core_type = #tpu.core_type<tc>, window_params = [{transform_indices = @transform_0, window_bounds = array<i64: 1, 72, 256>}, {pipeline_mode = #tpu.pipeline_mode<synchronous>, transform_indices = @transform_1, window_bounds = array<i64: 24, 72>}, {pipeline_mode = #tpu.pipeline_mode<synchronous>, transform_indices = @transform_2, window_bounds = array<i64: 24, 1>}, {transform_indices = @transform_3, window_bounds = array<i64: 1, 24, 256>}]} {
    %c0 = arith.constant 0 : index
    %c0_0 = arith.constant 0 : index
    %0 = vector.load %arg3[%c0, %c0_0] : memref<24x72xbf16, #tpu.memory_space<vmem>>, vector<24x72xbf16>
    %c0_1 = arith.constant 0 : index
    %c0_2 = arith.constant 0 : index
    %c0_3 = arith.constant 0 : index
    %1 = vector.load %arg2[%c0_1, %c0_2, %c0_3] : memref<1x72x256xbf16, #tpu.memory_space<vmem>>, vector<1x72x256xbf16>
    %2 = vector.shape_cast %1 : vector<1x72x256xbf16> to vector<72x256xbf16>
    %cst = arith.constant dense<0.000000e+00> : vector<24x256xf32>
    %3 = tpu.matmul %0, %2, %cst {dimension_numbers = #tpu.dot_dimension_numbers<[1], [0], [0], [1], [0, 0, 1, 1], [], []>} : vector<24x72xbf16>, vector<72x256xbf16>, vector<24x256xf32> -> vector<24x256xf32>
    %c0_4 = arith.constant 0 : index
    %c0_5 = arith.constant 0 : index
    %4 = vector.load %arg4[%c0_4, %c0_5] : memref<24x1xf32, #tpu.memory_space<vmem>>, vector<24x1xf32>
    %5 = vector.broadcast %4 : vector<24x1xf32> to vector<24x256xf32>
    %6 = arith.addf %3, %5 : vector<24x256xf32>
    %c0_6 = arith.constant 0 : index
    %c0_7 = arith.constant 0 : index
    %c0_8 = arith.constant 0 : index
    %7 = vector.load %arg5[%c0_6, %c0_7, %c0_8] : memref<1x24x256xf32, #tpu.memory_space<vmem>>, vector<1x24x256xf32>
    %8 = vector.shape_cast %7 : vector<1x24x256xf32> to vector<24x256xf32>
    %9 = vector.shape_cast %6 : vector<24x256xf32> to vector<1x24x256xf32>
    tpu.vector_store %arg5[%c0_6, %c0_7, %c0_8], %9 {strides = array<i32>} : memref<1x24x256xf32, #tpu.memory_space<vmem>>, vector<1x24x256xf32>,
    return
  }
  func.func @transform_0(%arg0: i32, %arg1: i32) -> (i32, i32, i32) {
    %c0_i32 = arith.constant 0 : i32
    %c0_i32_0 = arith.constant 0 : i32
    return %arg0, %c0_i32, %arg1 : i32, i32, i32
  }
  func.func @transform_1(%arg0: i32, %arg1: i32) -> (i32, i32) {
    %c0_i32 = arith.constant 0 : i32
    %c0_i32_0 = arith.constant 0 : i32
    %c0_i32_1 = arith.constant 0 : i32
    return %c0_i32, %c0_i32_0 : i32, i32
  }
  func.func @transform_2(%arg0: i32, %arg1: i32) -> (i32, i32) {
    %c0_i32 = arith.constant 0 : i32
    %c0_i32_0 = arith.constant 0 : i32
    %c0_i32_1 = arith.constant 0 : i32
    return %c0_i32, %c0_i32_0 : i32, i32
  }
  func.func @transform_3(%arg0: i32, %arg1: i32) -> (i32, i32, i32) {
    %c0_i32 = arith.constant 0 : i32
    %c0_i32_0 = arith.constant 0 : i32
    return %arg0, %c0_i32, %arg1 : i32, i32, i32
  }
}

module attributes {stable_mosaic.version = 11 : i64} {
  func.func @_matmul_bias_kernel(%arg0: i32, %arg1: i32, %arg2: memref<1x216x256xbf16, #tpu.memory_space<vmem>>, %arg3: memref<8x216xbf16, #tpu.memory_space<vmem>>, %arg4: memref<8x1xf32, #tpu.memory_space<vmem>>, %arg5: memref<1x8x256xf32, #tpu.memory_space<vmem>>) attributes {dimension_semantics = [#tpu.dimension_semantics<parallel>, #tpu.dimension_semantics<parallel>], iteration_bounds = array<i64: 2, 1>, scalar_prefetch = 0 : i64, scratch_operands = 0 : i64, tpu.core_type = #tpu.core_type<tc>, window_params = [{transform_indices = @transform_0, window_bounds = array<i64: 1, 216, 256>}, {pipeline_mode = #tpu.pipeline_mode<synchronous>, transform_indices = @transform_1, window_bounds = array<i64: 8, 216>}, {pipeline_mode = #tpu.pipeline_mode<synchronous>, transform_indices = @transform_2, window_bounds = array<i64: 8, 1>}, {transform_indices = @transform_3, window_bounds = array<i64: 1, 8, 256>}]} {
    %c0 = arith.constant 0 : index
    %c0_0 = arith.constant 0 : index
    %0 = vector.load %arg3[%c0, %c0_0] : memref<8x216xbf16, #tpu.memory_space<vmem>>, vector<8x216xbf16>
    %c0_1 = arith.constant 0 : index
    %c0_2 = arith.constant 0 : index
    %c0_3 = arith.constant 0 : index
    %1 = vector.load %arg2[%c0_1, %c0_2, %c0_3] : memref<1x216x256xbf16, #tpu.memory_space<vmem>>, vector<1x216x256xbf16>
    %2 = vector.shape_cast %1 : vector<1x216x256xbf16> to vector<216x256xbf16>
    %cst = arith.constant dense<0.000000e+00> : vector<8x256xf32>
    %3 = tpu.matmul %0, %2, %cst {dimension_numbers = #tpu.dot_dimension_numbers<[1], [0], [0], [1], [0, 0, 1, 1], [], []>} : vector<8x216xbf16>, vector<216x256xbf16>, vector<8x256xf32> -> vector<8x256xf32>
    %c0_4 = arith.constant 0 : index
    %c0_5 = arith.constant 0 : index
    %4 = vector.load %arg4[%c0_4, %c0_5] : memref<8x1xf32, #tpu.memory_space<vmem>>, vector<8x1xf32>
    %5 = vector.broadcast %4 : vector<8x1xf32> to vector<8x256xf32>
    %6 = arith.addf %3, %5 : vector<8x256xf32>
    %c0_6 = arith.constant 0 : index
    %c0_7 = arith.constant 0 : index
    %c0_8 = arith.constant 0 : index
    %7 = vector.load %arg5[%c0_6, %c0_7, %c0_8] : memref<1x8x256xf32, #tpu.memory_space<vmem>>, vector<1x8x256xf32>
    %8 = vector.shape_cast %7 : vector<1x8x256xf32> to vector<8x256xf32>
    %9 = vector.shape_cast %6 : vector<8x256xf32> to vector<1x8x256xf32>
    tpu.vector_store %arg5[%c0_6, %c0_7, %c0_8], %9 {strides = array<i32>} : memref<1x8x256xf32, #tpu.memory_space<vmem>>, vector<1x8x256xf32>,
    return
  }
  func.func @transform_0(%arg0: i32, %arg1: i32) -> (i32, i32, i32) {
    %c0_i32 = arith.constant 0 : i32
    %c0_i32_0 = arith.constant 0 : i32
    return %arg0, %c0_i32, %arg1 : i32, i32, i32
  }
  func.func @transform_1(%arg0: i32, %arg1: i32) -> (i32, i32) {
    %c0_i32 = arith.constant 0 : i32
    %c0_i32_0 = arith.constant 0 : i32
    %c0_i32_1 = arith.constant 0 : i32
    return %c0_i32, %c0_i32_0 : i32, i32
  }
  func.func @transform_2(%arg0: i32, %arg1: i32) -> (i32, i32) {
    %c0_i32 = arith.constant 0 : i32
    %c0_i32_0 = arith.constant 0 : i32
    %c0_i32_1 = arith.constant 0 : i32
    return %c0_i32, %c0_i32_0 : i32, i32
  }
  func.func @transform_3(%arg0: i32, %arg1: i32) -> (i32, i32, i32) {
    %c0_i32 = arith.constant 0 : i32
    %c0_i32_0 = arith.constant 0 : i32
    return %arg0, %c0_i32, %arg1 : i32, i32, i32
  }
}

module attributes {stable_mosaic.version = 11 : i64} {
  func.func @_matmul_bias_kernel(%arg0: i32, %arg1: i32, %arg2: memref<1x216x256xbf16, #tpu.memory_space<vmem>>, %arg3: memref<24x216xbf16, #tpu.memory_space<vmem>>, %arg4: memref<24x1xf32, #tpu.memory_space<vmem>>, %arg5: memref<1x24x256xf32, #tpu.memory_space<vmem>>) attributes {dimension_semantics = [#tpu.dimension_semantics<parallel>, #tpu.dimension_semantics<parallel>], iteration_bounds = array<i64: 2, 1>, scalar_prefetch = 0 : i64, scratch_operands = 0 : i64, tpu.core_type = #tpu.core_type<tc>, window_params = [{transform_indices = @transform_0, window_bounds = array<i64: 1, 216, 256>}, {pipeline_mode = #tpu.pipeline_mode<synchronous>, transform_indices = @transform_1, window_bounds = array<i64: 24, 216>}, {pipeline_mode = #tpu.pipeline_mode<synchronous>, transform_indices = @transform_2, window_bounds = array<i64: 24, 1>}, {transform_indices = @transform_3, window_bounds = array<i64: 1, 24, 256>}]} {
    %c0 = arith.constant 0 : index
    %c0_0 = arith.constant 0 : index
    %0 = vector.load %arg3[%c0, %c0_0] : memref<24x216xbf16, #tpu.memory_space<vmem>>, vector<24x216xbf16>
    %c0_1 = arith.constant 0 : index
    %c0_2 = arith.constant 0 : index
    %c0_3 = arith.constant 0 : index
    %1 = vector.load %arg2[%c0_1, %c0_2, %c0_3] : memref<1x216x256xbf16, #tpu.memory_space<vmem>>, vector<1x216x256xbf16>
    %2 = vector.shape_cast %1 : vector<1x216x256xbf16> to vector<216x256xbf16>
    %cst = arith.constant dense<0.000000e+00> : vector<24x256xf32>
    %3 = tpu.matmul %0, %2, %cst {dimension_numbers = #tpu.dot_dimension_numbers<[1], [0], [0], [1], [0, 0, 1, 1], [], []>} : vector<24x216xbf16>, vector<216x256xbf16>, vector<24x256xf32> -> vector<24x256xf32>
    %c0_4 = arith.constant 0 : index
    %c0_5 = arith.constant 0 : index
    %4 = vector.load %arg4[%c0_4, %c0_5] : memref<24x1xf32, #tpu.memory_space<vmem>>, vector<24x1xf32>
    %5 = vector.broadcast %4 : vector<24x1xf32> to vector<24x256xf32>
    %6 = arith.addf %3, %5 : vector<24x256xf32>
    %c0_6 = arith.constant 0 : index
    %c0_7 = arith.constant 0 : index
    %c0_8 = arith.constant 0 : index
    %7 = vector.load %arg5[%c0_6, %c0_7, %c0_8] : memref<1x24x256xf32, #tpu.memory_space<vmem>>, vector<1x24x256xf32>
    %8 = vector.shape_cast %7 : vector<1x24x256xf32> to vector<24x256xf32>
    %9 = vector.shape_cast %6 : vector<24x256xf32> to vector<1x24x256xf32>
    tpu.vector_store %arg5[%c0_6, %c0_7, %c0_8], %9 {strides = array<i32>} : memref<1x24x256xf32, #tpu.memory_space<vmem>>, vector<1x24x256xf32>,
    return
  }
  func.func @transform_0(%arg0: i32, %arg1: i32) -> (i32, i32, i32) {
    %c0_i32 = arith.constant 0 : i32
    %c0_i32_0 = arith.constant 0 : i32
    return %arg0, %c0_i32, %arg1 : i32, i32, i32
  }
  func.func @transform_1(%arg0: i32, %arg1: i32) -> (i32, i32) {
    %c0_i32 = arith.constant 0 : i32
    %c0_i32_0 = arith.constant 0 : i32
    %c0_i32_1 = arith.constant 0 : i32
    return %c0_i32, %c0_i32_0 : i32, i32
  }
  func.func @transform_2(%arg0: i32, %arg1: i32) -> (i32, i32) {
    %c0_i32 = arith.constant 0 : i32
    %c0_i32_0 = arith.constant 0 : i32
    %c0_i32_1 = arith.constant 0 : i32
    return %c0_i32, %c0_i32_0 : i32, i32
  }
  func.func @transform_3(%arg0: i32, %arg1: i32) -> (i32, i32, i32) {
    %c0_i32 = arith.constant 0 : i32
    %c0_i32_0 = arith.constant 0 : i32
    return %arg0, %c0_i32, %arg1 : i32, i32, i32
  }
}

module attributes {stable_mosaic.version = 11 : i64} {
  func.func @_matmul_bias_softmax_kernel(%arg0: i32, %arg1: i32, %arg2: memref<1x216x256xbf16, #tpu.memory_space<vmem>>, %arg3: memref<8x216xbf16, #tpu.memory_space<vmem>>, %arg4: memref<8x1xf32, #tpu.memory_space<vmem>>, %arg5: memref<1x8x256xf32, #tpu.memory_space<vmem>>) attributes {dimension_semantics = [#tpu.dimension_semantics<parallel>, #tpu.dimension_semantics<parallel>], iteration_bounds = array<i64: 2, 1>, scalar_prefetch = 0 : i64, scratch_operands = 0 : i64, tpu.core_type = #tpu.core_type<tc>, window_params = [{transform_indices = @transform_0, window_bounds = array<i64: 1, 216, 256>}, {pipeline_mode = #tpu.pipeline_mode<synchronous>, transform_indices = @transform_1, window_bounds = array<i64: 8, 216>}, {pipeline_mode = #tpu.pipeline_mode<synchronous>, transform_indices = @transform_2, window_bounds = array<i64: 8, 1>}, {transform_indices = @transform_3, window_bounds = array<i64: 1, 8, 256>}]} {
    %c0 = arith.constant 0 : index
    %c0_0 = arith.constant 0 : index
    %0 = vector.load %arg3[%c0, %c0_0] : memref<8x216xbf16, #tpu.memory_space<vmem>>, vector<8x216xbf16>
    %c0_1 = arith.constant 0 : index
    %c0_2 = arith.constant 0 : index
    %c0_3 = arith.constant 0 : index
    %1 = vector.load %arg2[%c0_1, %c0_2, %c0_3] : memref<1x216x256xbf16, #tpu.memory_space<vmem>>, vector<1x216x256xbf16>
    %2 = vector.shape_cast %1 : vector<1x216x256xbf16> to vector<216x256xbf16>
    %cst = arith.constant dense<0.000000e+00> : vector<8x256xf32>
    %3 = tpu.matmul %0, %2, %cst {dimension_numbers = #tpu.dot_dimension_numbers<[1], [0], [0], [1], [0, 0, 1, 1], [], []>} : vector<8x216xbf16>, vector<216x256xbf16>, vector<8x256xf32> -> vector<8x256xf32>
    %c0_4 = arith.constant 0 : index
    %c0_5 = arith.constant 0 : index
    %4 = vector.load %arg4[%c0_4, %c0_5] : memref<8x1xf32, #tpu.memory_space<vmem>>, vector<8x1xf32>
    %5 = vector.broadcast %4 : vector<8x1xf32> to vector<8x256xf32>
    %6 = arith.addf %3, %5 : vector<8x256xf32>
    %cst_6 = arith.constant dense<0xFF800000> : vector<256xf32>
    %7 = vector.multi_reduction <maximumf>, %6, %cst_6 [0] : vector<8x256xf32> to vector<256xf32>
    %8 = vector.shape_cast %7 : vector<256xf32> to vector<1x256xf32>
    %9 = vector.broadcast %8 : vector<1x256xf32> to vector<8x256xf32>
    %10 = arith.subf %6, %9 : vector<8x256xf32>
    %11 = math.exp %10 : vector<8x256xf32>
    %cst_7 = arith.constant dense<0.000000e+00> : vector<256xf32>
    %12 = vector.multi_reduction <add>, %11, %cst_7 [0] : vector<8x256xf32> to vector<256xf32>
    %13 = vector.shape_cast %12 : vector<256xf32> to vector<1x256xf32>
    %14 = tpu.reciprocal %13 {approx = true} : vector<1x256xf32> -> vector<1x256xf32>
    %15 = vector.broadcast %14 : vector<1x256xf32> to vector<8x256xf32>
    %16 = arith.mulf %11, %15 : vector<8x256xf32>
    %c0_8 = arith.constant 0 : index
    %c0_9 = arith.constant 0 : index
    %c0_10 = arith.constant 0 : index
    %17 = vector.load %arg5[%c0_8, %c0_9, %c0_10] : memref<1x8x256xf32, #tpu.memory_space<vmem>>, vector<1x8x256xf32>
    %18 = vector.shape_cast %17 : vector<1x8x256xf32> to vector<8x256xf32>
    %19 = vector.shape_cast %16 : vector<8x256xf32> to vector<1x8x256xf32>
    tpu.vector_store %arg5[%c0_8, %c0_9, %c0_10], %19 {strides = array<i32>} : memref<1x8x256xf32, #tpu.memory_space<vmem>>, vector<1x8x256xf32>,
    return
  }
  func.func @transform_0(%arg0: i32, %arg1: i32) -> (i32, i32, i32) {
    %c0_i32 = arith.constant 0 : i32
    %c0_i32_0 = arith.constant 0 : i32
    return %arg0, %c0_i32, %arg1 : i32, i32, i32
  }
  func.func @transform_1(%arg0: i32, %arg1: i32) -> (i32, i32) {
    %c0_i32 = arith.constant 0 : i32
    %c0_i32_0 = arith.constant 0 : i32
    %c0_i32_1 = arith.constant 0 : i32
    return %c0_i32, %c0_i32_0 : i32, i32
  }
  func.func @transform_2(%arg0: i32, %arg1: i32) -> (i32, i32) {
    %c0_i32 = arith.constant 0 : i32
    %c0_i32_0 = arith.constant 0 : i32
    %c0_i32_1 = arith.constant 0 : i32
    return %c0_i32, %c0_i32_0 : i32, i32
  }
  func.func @transform_3(%arg0: i32, %arg1: i32) -> (i32, i32, i32) {
    %c0_i32 = arith.constant 0 : i32
    %c0_i32_0 = arith.constant 0 : i32
    return %arg0, %c0_i32, %arg1 : i32, i32, i32
  }
}

module attributes {stable_mosaic.version = 11 : i64} {
  func.func @_matmul_bias_kernel(%arg0: i32, %arg1: i32, %arg2: memref<1x72x256xbf16, #tpu.memory_space<vmem>>, %arg3: memref<8x72xbf16, #tpu.memory_space<vmem>>, %arg4: memref<8x1xf32, #tpu.memory_space<vmem>>, %arg5: memref<1x8x256xf32, #tpu.memory_space<vmem>>) attributes {dimension_semantics = [#tpu.dimension_semantics<parallel>, #tpu.dimension_semantics<parallel>], iteration_bounds = array<i64: 2, 1>, scalar_prefetch = 0 : i64, scratch_operands = 0 : i64, tpu.core_type = #tpu.core_type<tc>, window_params = [{transform_indices = @transform_0, window_bounds = array<i64: 1, 72, 256>}, {pipeline_mode = #tpu.pipeline_mode<synchronous>, transform_indices = @transform_1, window_bounds = array<i64: 8, 72>}, {pipeline_mode = #tpu.pipeline_mode<synchronous>, transform_indices = @transform_2, window_bounds = array<i64: 8, 1>}, {transform_indices = @transform_3, window_bounds = array<i64: 1, 8, 256>}]} {
    %c0 = arith.constant 0 : index
    %c0_0 = arith.constant 0 : index
    %0 = vector.load %arg3[%c0, %c0_0] : memref<8x72xbf16, #tpu.memory_space<vmem>>, vector<8x72xbf16>
    %c0_1 = arith.constant 0 : index
    %c0_2 = arith.constant 0 : index
    %c0_3 = arith.constant 0 : index
    %1 = vector.load %arg2[%c0_1, %c0_2, %c0_3] : memref<1x72x256xbf16, #tpu.memory_space<vmem>>, vector<1x72x256xbf16>
    %2 = vector.shape_cast %1 : vector<1x72x256xbf16> to vector<72x256xbf16>
    %cst = arith.constant dense<0.000000e+00> : vector<8x256xf32>
    %3 = tpu.matmul %0, %2, %cst {dimension_numbers = #tpu.dot_dimension_numbers<[1], [0], [0], [1], [0, 0, 1, 1], [], []>} : vector<8x72xbf16>, vector<72x256xbf16>, vector<8x256xf32> -> vector<8x256xf32>
    %c0_4 = arith.constant 0 : index
    %c0_5 = arith.constant 0 : index
    %4 = vector.load %arg4[%c0_4, %c0_5] : memref<8x1xf32, #tpu.memory_space<vmem>>, vector<8x1xf32>
    %5 = vector.broadcast %4 : vector<8x1xf32> to vector<8x256xf32>
    %6 = arith.addf %3, %5 : vector<8x256xf32>
    %c0_6 = arith.constant 0 : index
    %c0_7 = arith.constant 0 : index
    %c0_8 = arith.constant 0 : index
    %7 = vector.load %arg5[%c0_6, %c0_7, %c0_8] : memref<1x8x256xf32, #tpu.memory_space<vmem>>, vector<1x8x256xf32>
    %8 = vector.shape_cast %7 : vector<1x8x256xf32> to vector<8x256xf32>
    %9 = vector.shape_cast %6 : vector<8x256xf32> to vector<1x8x256xf32>
    tpu.vector_store %arg5[%c0_6, %c0_7, %c0_8], %9 {strides = array<i32>} : memref<1x8x256xf32, #tpu.memory_space<vmem>>, vector<1x8x256xf32>,
    return
  }
  func.func @transform_0(%arg0: i32, %arg1: i32) -> (i32, i32, i32) {
    %c0_i32 = arith.constant 0 : i32
    %c0_i32_0 = arith.constant 0 : i32
    return %arg0, %c0_i32, %arg1 : i32, i32, i32
  }
  func.func @transform_1(%arg0: i32, %arg1: i32) -> (i32, i32) {
    %c0_i32 = arith.constant 0 : i32
    %c0_i32_0 = arith.constant 0 : i32
    %c0_i32_1 = arith.constant 0 : i32
    return %c0_i32, %c0_i32_0 : i32, i32
  }
  func.func @transform_2(%arg0: i32, %arg1: i32) -> (i32, i32) {
    %c0_i32 = arith.constant 0 : i32
    %c0_i32_0 = arith.constant 0 : i32
    %c0_i32_1 = arith.constant 0 : i32
    return %c0_i32, %c0_i32_0 : i32, i32
  }
  func.func @transform_3(%arg0: i32, %arg1: i32) -> (i32, i32, i32) {
    %c0_i32 = arith.constant 0 : i32
    %c0_i32_0 = arith.constant 0 : i32
    return %arg0, %c0_i32, %arg1 : i32, i32, i32
  }
}

</mosaic_0001>

<llo_original>
// kernel: hrnet_forward.14
$region0: #{hrnet_forward.14}
  #allocation0 [shape = 'u32[]', space=smem, size = 0x4, offset = 0x4, fixed_abs, tag = 'smem constant byte address 0x4 - core index']
  #allocation1 [shape = 'u32[144,128]{1,0:T(1,128)}', space=vmem, size = 0x12000, scoped, tag = 'internal scratch']
  %s0 = inlined_call_operand.vmem [shape: bf16[2,16,256], index: 0, kind: input, shape index: {}]
  %s1 = inlined_call_operand.vmem [shape: bf16[8,16], index: 1, kind: input, shape index: {}]
  %s2 = inlined_call_operand.vmem [shape: f32[8,1], index: 2, kind: input, shape index: {}]
  %s3 = inlined_call_operand.vmem [shape: f32[2,8,256], index: 3, kind: output, shape index: {}]
  %s4 = sld [smem:[#allocation0]]
  $region45: #{hrnet_forward.14} parent=0
    _
  %s6 = ssub.s32 1, %s4
  %s7 = scalar_select 0, %s6, %s4
  loop: start=0, step=1, limit=4
  $region2: #{hrnet_forward.14} parent=0 // loop_pre_header
    _
  $region3: #{hrnet_forward.14} parent=0 // loop_header
    %s9 = sphi 0, %s13
    %p10 = scmp.ge.s32.totalorder %s9, 4
    %s16 = sphi 0, %s28
    %s17 = sphi 0, %s24
    %s18 = sphi 0, %s16
    %s19 = sphi 0, %s17
    %s20 = sphi 0, %s18
    %s21 = sphi 0, %s19
    %s33 = sphi 0, %s35
    %s36 = sphi 0, %s33
    %s37 = sphi 0, %s36
    %s53 = sphi 0, %s37
    %s57 = sphi 0, %s57
    %s59 = sphi 0, %s57
    %s60 = sphi 0, %s59
    %s74 = sphi 0, %s60
    %s78 = sphi 0, %s78
    %s80 = sphi 0, %s78
    %s81 = sphi 0, %s80
    %s95 = sphi 0, %s81
    %s103 = sphi 0, %s105
    %s106 = sphi 0, %s103
    %s107 = sphi 0, %s106
    %s123 = sphi 0, %s107
  $region4: #{hrnet_forward.14} parent=0 // loop_header_branch
    %12 = sbr.rel (%p10) target = $region8
  $region5: #{hrnet_forward.14} parent=0 // loop_body
    %s14 = ssub.s32 %s9, 1
    %s15 = ssub.s32 %s9, 2
    %s22 = sadd.s32 1, %s17
    %p23 = scmp.ge.s32.totalorder %s22, 1
    %s24 = scalar_select %p23, 0, %s22
    %s25 = sadd.s32 1, %s16
    %s26 = scalar_select %p23, %s25, %s16
    %p27 = scmp.ge.s32.totalorder %s26, 2
    %s28 = scalar_select %p27, 0, %s26
    %s29 = ssub.s32 %s16, %s28
    %s30 = ssub.s32 %s17, %s24
    %s31 = sor.u32 %s29, %s30
    %p32 = scmp.eq.s32.totalorder %s31, 0
    %s34 = sadd.s32 %s33, 1
    %s35 = scalar_select %p32, %s33, %s34
    %p38 = pneg %p32
    %p39 = scmp.eq.s32.totalorder %s9, 1
    %p40 = por %p38, %p39
    %p41 = scmp.ne.s32.totalorder %s33, %s36
    %p42 = scmp.eq.s32.totalorder %s9, 0
    %p43 = por %p41, %p42
    %p44 = scmp.ne.s32.totalorder %s33, %s36
    %p45 = scmp.eq.s32.totalorder %s14, 1
    %p46 = por %p44, %p45
    %p47 = scmp.ne.s32.totalorder %s36, %s37
    %p48 = scmp.eq.s32.totalorder %s14, 0
    %p49 = por %p47, %p48
    %p50 = scmp.ne.s32.totalorder %s36, %s37
    %p51 = scmp.eq.s32.totalorder %s15, 1
    %p52 = por %p50, %p51
    %p54 = scmp.ne.s32.totalorder %s37, %s53
    %p55 = scmp.eq.s32.totalorder %s15, 0
    %p56 = por %p54, %p55
    %s58 = sadd.s32 %s57, 1
    %p61 = scmp.eq.s32.totalorder %s9, 1
    %p62 = scmp.ne.s32.totalorder %s57, %s59
    %p63 = scmp.eq.s32.totalorder %s9, 0
    %p64 = por %p62, %p63
    %p65 = scmp.ne.s32.totalorder %s57, %s59
    %p66 = scmp.eq.s32.totalorder %s14, 1
    %p67 = por %p65, %p66
    %p68 = scmp.ne.s32.totalorder %s59, %s60
    %p69 = scmp.eq.s32.totalorder %s14, 0
    %p70 = por %p68, %p69
    %p71 = scmp.ne.s32.totalorder %s59, %s60
    %p72 = scmp.eq.s32.totalorder %s15, 1
    %p73 = por %p71, %p72
    %p75 = scmp.ne.s32.totalorder %s60, %s74
    %p76 = scmp.eq.s32.totalorder %s15, 0
    %p77 = por %p75, %p76
    %s79 = sadd.s32 %s78, 1
    %p82 = scmp.eq.s32.totalorder %s9, 1
    %p83 = scmp.ne.s32.totalorder %s78, %s80
    %p84 = scmp.eq.s32.totalorder %s9, 0
    %p85 = por %p83, %p84
    %p86 = scmp.ne.s32.totalorder %s78, %s80
    %p87 = scmp.eq.s32.totalorder %s14, 1
    %p88 = por %p86, %p87
    %p89 = scmp.ne.s32.totalorder %s80, %s81
    %p90 = scmp.eq.s32.totalorder %s14, 0
    %p91 = por %p89, %p90
    %p92 = scmp.ne.s32.totalorder %s80, %s81
    %p93 = scmp.eq.s32.totalorder %s15, 1
    %p94 = por %p92, %p93
    %p96 = scmp.ne.s32.totalorder %s81, %s95
    %p97 = scmp.eq.s32.totalorder %s15, 0
    %p98 = por %p96, %p97
    %s99 = ssub.s32 %s16, %s28
    %s100 = ssub.s32 %s17, %s24
    %s101 = sor.u32 %s99, %s100
    %p102 = scmp.eq.s32.totalorder %s101, 0
    %s104 = sadd.s32 %s103, 1
    %s105 = scalar_select %p102, %s103, %s104
    %p108 = pneg %p102
    %p109 = scmp.eq.s32.totalorder %s9, 1
    %p110 = por %p108, %p109
    %p111 = scmp.ne.s32.totalorder %s103, %s106
    %p112 = scmp.eq.s32.totalorder %s9, 0
    %p113 = por %p111, %p112
    %p114 = scmp.ne.s32.totalorder %s103, %s106
    %p115 = scmp.eq.s32.totalorder %s14, 1
    %p116 = por %p114, %p115
    %p117 = scmp.ne.s32.totalorder %s106, %s107
    %p118 = scmp.eq.s32.totalorder %s14, 0
    %p119 = por %p117, %p118
    %p120 = scmp.ne.s32.totalorder %s106, %s107
    %p121 = scmp.eq.s32.totalorder %s15, 1
    %p122 = por %p120, %p121
    %p124 = scmp.ne.s32.totalorder %s107, %s123
    %p125 = scmp.eq.s32.totalorder %s15, 0
    %p126 = por %p124, %p125
    %p127 = scmp.le.s32.totalorder 1, %s9
    %p128 = scmp.lt.s32.totalorder %s9, 3
    %p129 = pnand %p127, %p128
    %p130 = pneg %p129
    // Predicated region
    $region9: #{hrnet_forward.14} parent=5 // pred_check
      _
    $region10: #{hrnet_forward.14} parent=5 // pred_check_branch
      %132 = sbr.rel (%p129) target = $region12
    $region11: #{hrnet_forward.14} parent=5 // pred_region
      %s133 = ssub.s32 %s9, 1
      // Predicated region
      $region13: #{hrnet_forward.14} parent=11 // pred_check
        %p134 = pneg %p70
      $region14: #{hrnet_forward.14} parent=11 // pred_check_branch
        %136 = sbr.rel (%p134) target = $region16
      $region15: #{hrnet_forward.14} parent=11 // pred_region
        _
      $region16: #{hrnet_forward.14} parent=11 // pred_fallthru
        _
      // Predicated region
      $region17: #{hrnet_forward.14} parent=11 // pred_check
        %p137 = pneg %p91
      $region18: #{hrnet_forward.14} parent=11 // pred_check_branch
        %139 = sbr.rel (%p137) target = $region20
      $region19: #{hrnet_forward.14} parent=11 // pred_region
        _
      $region20: #{hrnet_forward.14} parent=11 // pred_fallthru
        _
    $region12: #{hrnet_forward.14} parent=5 // pred_fallthru
      _
    %p140 = scmp.lt.s32.totalorder %s9, 2
    // Predicated region
    $region21: #{hrnet_forward.14} parent=5 // pred_check
      %p141 = pneg %p140
    $region22: #{hrnet_forward.14} parent=5 // pred_check_branch
      %143 = sbr.rel (%p141) target = $region24
    $region23: #{hrnet_forward.14} parent=5 // pred_region
      // Predicated region
      $region25: #{hrnet_forward.14} parent=23 // pred_check
        %p144 = pneg %p43
      $region26: #{hrnet_forward.14} parent=23 // pred_check_branch
        %146 = sbr.rel (%p144) target = $region28
      $region27: #{hrnet_forward.14} parent=23 // pred_region
        %s147 = smul.u32 2, %s17
        %p148 = scmp.lt.s32.totalorder %s16, 1
        %s149 = scalar_select %p148, %s16, 1
        %p150 = scmp.lt.s32.totalorder %s147, 1
        %s151 = scalar_select %p150, %s147, 1
        %s152 = smul.addr %s149, 4
        %s153 = sadd.s32 %s151, %s152
        %s154 = smul.addr %s153, 4
        %s155 = scalar_lea.vmem %s0, %s154
        %s156 = smul.u32 2, %s17
      $region28: #{hrnet_forward.14} parent=23 // pred_fallthru
        _
    $region24: #{hrnet_forward.14} parent=5 // pred_fallthru
      _
    %p157 = scmp.le.s32.totalorder 1, %s9
    %p158 = scmp.lt.s32.totalorder %s9, 3
    %p159 = pnand %p157, %p158
    %p160 = pneg %p159
    // Predicated region
    $region29: #{hrnet_forward.14} parent=5 // pred_check
      _
    $region30: #{hrnet_forward.14} parent=5 // pred_check_branch
      %162 = sbr.rel (%p159) target = $region32
    $region31: #{hrnet_forward.14} parent=5 // pred_region
      %s163 = ssub.s32 %s9, 1
      %s164 = smul.u32 2, %s19
      %p165 = scmp.lt.s32.totalorder %s18, 1
      %s166 = scalar_select %p165, %s18, 1
      %p167 = scmp.lt.s32.totalorder %s164, 1
      %s168 = scalar_select %p167, %s164, 1
      %s169 = smul.addr %s166, 4
      %s170 = sadd.s32 %s168, %s169
      %s171 = smul.addr %s170, 4
      %s172 = scalar_lea.vmem %s0, %s171
      %p173 = pneg %p49
      %p174 = pneg %p46
      %p175 = pneg %p70
      %p176 = pneg %p67
      %p177 = pneg %p91
      %p178 = pneg %p88
      %p179 = pneg %p119
      %p180 = pneg %p116
      %s181 = smul.u32 2, %s19
      %p182 = scmp.lt.s32.totalorder %s18, 1
      %s183 = scalar_select %p182, %s18, 1
      %p184 = scmp.lt.s32.totalorder %s181, 1
      %s185 = scalar_select %p184, %s181, 1
      %s186 = smul.addr %s183, 2
      %s187 = sadd.s32 %s185, %s186
      %s188 = smul.addr %s187, 8
      %s189 = scalar_lea.vmem %s3, %s188
      %s190 = smul.u32 2, %s19
      %p191 = scmp.lt.s32.totalorder %s18, 1
      %s192 = scalar_select %p191, %s18, 1
      %p193 = scmp.lt.s32.totalorder %s190, 1
      %s194 = scalar_select %p193, %s190, 1
      %s195 = smul.addr %s192, 4
      %s196 = sadd.s32 %s194, %s195
      %s197 = smul.addr %s196, 4
      %s198 = scalar_lea.vmem %s0, %s197
      %s199 = smul.u32 2, %s19
      %s200 = smul.u32 2, %s19
      %p201 = scmp.lt.s32.totalorder %s18, 1
      %s202 = scalar_select %p201, %s18, 1
      %p203 = scmp.lt.s32.totalorder %s200, 1
      %s204 = scalar_select %p203, %s200, 1
      %s205 = smul.addr %s202, 2
      %s206 = sadd.s32 %s204, %s205
      %s207 = smul.addr %s206, 8
      %s208 = scalar_lea.vmem %s3, %s207
      %s209 = smul.u32 2, %s19
      %v211 = vld [vmem:[%s1] sm:$0xf]
      %v212 = vld [vmem:[%s198] sm:$0xff]
      %v213 = vld [vmem:[%s198 + $0x8] sm:$0xff]
      %v214 = vld [vmem:[%s2] sm:$0xff]
      %216 = vset.pattern.permute.xlu0 0
      %217 = vperm.xlu0 %216, %v214
      %v218 = vpop.permute.xlu0 %217
      %v222 = vunpack.c.l.b16 %v212
      %v223 = vunpack.c.h.b16 %v212
      %v224 = vunpack.c.l.b16 %v213
      %v225 = vunpack.c.h.b16 %v213
      %v226 = vpack.c.b16 %v224, %v222
      %v227 = vpack.c.b16 %v225, %v223
      %vm230 = vcmask 130048
      %v232 = vsel %vm230, %v211, 0
      %234 = vmatprep.subr.bf16.mxu0 %v227
      %235 = vmatpush1.bf16.msra.mxu0 %v226
      %236 = vmatprep.subr.bf16.mxu0 0
      %237 = vmatpush1.bf16.msra.mxu0 0
      %238 = vmatprep.subr.bf16.mxu0 0
      %239 = vmatpush1.bf16.msra.mxu0 0
      %240 = vmatprep.subr.bf16.mxu0 0
      %241 = vmatpush1.bf16.msra.mxu0 0
      %242 = vmatprep.subr.bf16.mxu0 0
      %243 = vmatpush1.bf16.msra.mxu0 0
      %244 = vmatprep.subr.bf16.mxu0 0
      %245 = vmatpush1.bf16.msra.mxu0 0
      %246 = vmatprep.subr.bf16.mxu0 0
      %247 = vmatpush1.bf16.msra.mxu0 0
      %248 = vmatprep.subr.bf16.mxu0 0
      %249 = vmatpush1.bf16.msra.mxu0 0
      %250 = vmatprep.subr.bf16.mxu0 0
      %251 = vmatpush1.bf16.msra.mxu0 0
      %252 = vmatprep.subr.bf16.mxu0 0
      %253 = vmatpush1.bf16.msra.mxu0 0
      %254 = vmatprep.subr.bf16.mxu0 0
      %255 = vmatpush1.bf16.msra.mxu0 0
      %256 = vmatprep.subr.bf16.mxu0 0
      %257 = vmatpush1.bf16.msra.mxu0 0
      %258 = vmatprep.subr.bf16.mxu0 0
      %259 = vmatpush1.bf16.msra.mxu0 0
      %260 = vmatprep.subr.bf16.mxu0 0
      %261 = vmatpush1.bf16.msra.mxu0 0
      %262 = vmatprep.subr.bf16.mxu0 0
      %263 = vmatpush1.bf16.msra.mxu0 0
      %264 = vmatprep.subr.bf16.mxu0 0
      %265 = vmatpush1.bf16.msra.mxu0 0
      %266 = vmatprep.mubr.bf16.mxu0 0
      %267 = vmatmul.mubr.bf16.gmra.mrb[0].mxu0 %v232
      %v268 = vpop.f32.mrb[0].mxu0
      %v269 = vadd.f32 %v218, %v268
      %v270 = vpop.f32.mrb[0].mxu0
      %v271 = vadd.f32 %v218, %v270
      %v272 = vpop.f32.mrb[0].mxu0
      %v273 = vpop.f32.mrb[0].mxu0
      %274 = vdwg.mxu0
      %275 = vst [vmem:[%s208] sm:$0xff] %v269
      %276 = vst [vmem:[%s208 + $0x8] sm:$0xff] %v271
      %s277 = smul.u32 2, %s19
      %p278 = scmp.lt.s32.totalorder %s18, 1
      %s279 = scalar_select %p278, %s18, 1
      %p280 = scmp.lt.s32.totalorder %s277, 1
      %s281 = scalar_select %p280, %s277, 1
      %s282 = smul.addr %s279, 2
      %s283 = sadd.s32 %s281, %s282
      %s284 = smul.addr %s283, 8
      %s285 = scalar_lea.vmem %s3, %s284
      // Predicated region
      $region33: #{hrnet_forward.14} parent=31 // pred_check
        %p286 = pneg %p116
      $region34: #{hrnet_forward.14} parent=31 // pred_check_branch
        %288 = sbr.rel (%p286) target = $region36
      $region35: #{hrnet_forward.14} parent=31 // pred_region
        %s289 = smul.u32 2, %s19
      $region36: #{hrnet_forward.14} parent=31 // pred_fallthru
        _
    $region32: #{hrnet_forward.14} parent=5 // pred_fallthru
      _
    %p290 = scmp.le.s32.totalorder 2, %s9
    // Predicated region
    $region37: #{hrnet_forward.14} parent=5 // pred_check
      %p291 = pneg %p290
    $region38: #{hrnet_forward.14} parent=5 // pred_check_branch
      %293 = sbr.rel (%p291) target = $region40
    $region39: #{hrnet_forward.14} parent=5 // pred_region
      %s294 = ssub.s32 %s9, 2
      // Predicated region
      $region41: #{hrnet_forward.14} parent=39 // pred_check
        %p295 = pneg %p122
      $region42: #{hrnet_forward.14} parent=39 // pred_check_branch
        %297 = sbr.rel (%p295) target = $region44
      $region43: #{hrnet_forward.14} parent=39 // pred_region
        %s298 = smul.u32 2, %s21
        %p299 = scmp.lt.s32.totalorder %s20, 1
        %s300 = scalar_select %p299, %s20, 1
        %p301 = scmp.lt.s32.totalorder %s298, 1
        %s302 = scalar_select %p301, %s298, 1
        %s303 = smul.addr %s300, 2
        %s304 = sadd.s32 %s302, %s303
        %s305 = smul.addr %s304, 8
        %s306 = scalar_lea.vmem %s3, %s305
      $region44: #{hrnet_forward.14} parent=39 // pred_fallthru
        _
    $region40: #{hrnet_forward.14} parent=5 // pred_fallthru
      _
  $region6: #{hrnet_forward.14} parent=0 // loop_footer
    %s13 = sadd.s32 1, %s9
  $region7: #{hrnet_forward.14} parent=0 // loop_footer_branch
    %8 = sbr.rel target = $region3
  $region8: #{hrnet_forward.14} parent=0 // loop_exit
    _

// kernel: hrnet_forward.16
$region0: #{hrnet_forward.16}
  #allocation0 [shape = 'u32[]', space=smem, size = 0x4, offset = 0x4, fixed_abs, tag = 'smem constant byte address 0x4 - core index']
  #allocation1 [shape = 'u32[144,128]{1,0:T(1,128)}', space=vmem, size = 0x12000, scoped, tag = 'internal scratch']
  %s0 = inlined_call_operand.vmem [shape: bf16[2,16,64], index: 0, kind: input, shape index: {}]
  %s1 = inlined_call_operand.vmem [shape: bf16[16,16], index: 1, kind: input, shape index: {}]
  %s2 = inlined_call_operand.vmem [shape: f32[16,1], index: 2, kind: input, shape index: {}]
  %s3 = inlined_call_operand.vmem [shape: f32[2,16,64], index: 3, kind: output, shape index: {}]
  %s4 = sld [smem:[#allocation0]]
  $region45: #{hrnet_forward.16} parent=0
    _
  %s6 = ssub.s32 1, %s4
  %s7 = scalar_select 0, %s6, %s4
  loop: start=0, step=1, limit=4
  $region2: #{hrnet_forward.16} parent=0 // loop_pre_header
    _
  $region3: #{hrnet_forward.16} parent=0 // loop_header
    %s9 = sphi 0, %s13
    %p10 = scmp.ge.s32.totalorder %s9, 4
    %s16 = sphi 0, %s28
    %s17 = sphi 0, %s24
    %s18 = sphi 0, %s16
    %s19 = sphi 0, %s17
    %s20 = sphi 0, %s18
    %s21 = sphi 0, %s19
    %s33 = sphi 0, %s35
    %s36 = sphi 0, %s33
    %s37 = sphi 0, %s36
    %s53 = sphi 0, %s37
    %s57 = sphi 0, %s57
    %s59 = sphi 0, %s57
    %s60 = sphi 0, %s59
    %s74 = sphi 0, %s60
    %s78 = sphi 0, %s78
    %s80 = sphi 0, %s78
    %s81 = sphi 0, %s80
    %s95 = sphi 0, %s81
    %s103 = sphi 0, %s105
    %s106 = sphi 0, %s103
    %s107 = sphi 0, %s106
    %s123 = sphi 0, %s107
  $region4: #{hrnet_forward.16} parent=0 // loop_header_branch
    %12 = sbr.rel (%p10) target = $region8
  $region5: #{hrnet_forward.16} parent=0 // loop_body
    %s14 = ssub.s32 %s9, 1
    %s15 = ssub.s32 %s9, 2
    %s22 = sadd.s32 1, %s17
    %p23 = scmp.ge.s32.totalorder %s22, 1
    %s24 = scalar_select %p23, 0, %s22
    %s25 = sadd.s32 1, %s16
    %s26 = scalar_select %p23, %s25, %s16
    %p27 = scmp.ge.s32.totalorder %s26, 2
    %s28 = scalar_select %p27, 0, %s26
    %s29 = ssub.s32 %s16, %s28
    %s30 = ssub.s32 %s17, %s24
    %s31 = sor.u32 %s29, %s30
    %p32 = scmp.eq.s32.totalorder %s31, 0
    %s34 = sadd.s32 %s33, 1
    %s35 = scalar_select %p32, %s33, %s34
    %p38 = pneg %p32
    %p39 = scmp.eq.s32.totalorder %s9, 1
    %p40 = por %p38, %p39
    %p41 = scmp.ne.s32.totalorder %s33, %s36
    %p42 = scmp.eq.s32.totalorder %s9, 0
    %p43 = por %p41, %p42
    %p44 = scmp.ne.s32.totalorder %s33, %s36
    %p45 = scmp.eq.s32.totalorder %s14, 1
    %p46 = por %p44, %p45
    %p47 = scmp.ne.s32.totalorder %s36, %s37
    %p48 = scmp.eq.s32.totalorder %s14, 0
    %p49 = por %p47, %p48
    %p50 = scmp.ne.s32.totalorder %s36, %s37
    %p51 = scmp.eq.s32.totalorder %s15, 1
    %p52 = por %p50, %p51
    %p54 = scmp.ne.s32.totalorder %s37, %s53
    %p55 = scmp.eq.s32.totalorder %s15, 0
    %p56 = por %p54, %p55
    %s58 = sadd.s32 %s57, 1
    %p61 = scmp.eq.s32.totalorder %s9, 1
    %p62 = scmp.ne.s32.totalorder %s57, %s59
    %p63 = scmp.eq.s32.totalorder %s9, 0
    %p64 = por %p62, %p63
    %p65 = scmp.ne.s32.totalorder %s57, %s59
    %p66 = scmp.eq.s32.totalorder %s14, 1
    %p67 = por %p65, %p66
    %p68 = scmp.ne.s32.totalorder %s59, %s60
    %p69 = scmp.eq.s32.totalorder %s14, 0
    %p70 = por %p68, %p69
    %p71 = scmp.ne.s32.totalorder %s59, %s60
    %p72 = scmp.eq.s32.totalorder %s15, 1
    %p73 = por %p71, %p72
    %p75 = scmp.ne.s32.totalorder %s60, %s74
    %p76 = scmp.eq.s32.totalorder %s15, 0
    %p77 = por %p75, %p76
    %s79 = sadd.s32 %s78, 1
    %p82 = scmp.eq.s32.totalorder %s9, 1
    %p83 = scmp.ne.s32.totalorder %s78, %s80
    %p84 = scmp.eq.s32.totalorder %s9, 0
    %p85 = por %p83, %p84
    %p86 = scmp.ne.s32.totalorder %s78, %s80
    %p87 = scmp.eq.s32.totalorder %s14, 1
    %p88 = por %p86, %p87
    %p89 = scmp.ne.s32.totalorder %s80, %s81
    %p90 = scmp.eq.s32.totalorder %s14, 0
    %p91 = por %p89, %p90
    %p92 = scmp.ne.s32.totalorder %s80, %s81
    %p93 = scmp.eq.s32.totalorder %s15, 1
    %p94 = por %p92, %p93
    %p96 = scmp.ne.s32.totalorder %s81, %s95
    %p97 = scmp.eq.s32.totalorder %s15, 0
    %p98 = por %p96, %p97
    %s99 = ssub.s32 %s16, %s28
    %s100 = ssub.s32 %s17, %s24
    %s101 = sor.u32 %s99, %s100
    %p102 = scmp.eq.s32.totalorder %s101, 0
    %s104 = sadd.s32 %s103, 1
    %s105 = scalar_select %p102, %s103, %s104
    %p108 = pneg %p102
    %p109 = scmp.eq.s32.totalorder %s9, 1
    %p110 = por %p108, %p109
    %p111 = scmp.ne.s32.totalorder %s103, %s106
    %p112 = scmp.eq.s32.totalorder %s9, 0
    %p113 = por %p111, %p112
    %p114 = scmp.ne.s32.totalorder %s103, %s106
    %p115 = scmp.eq.s32.totalorder %s14, 1
    %p116 = por %p114, %p115
    %p117 = scmp.ne.s32.totalorder %s106, %s107
    %p118 = scmp.eq.s32.totalorder %s14, 0
    %p119 = por %p117, %p118
    %p120 = scmp.ne.s32.totalorder %s106, %s107
    %p121 = scmp.eq.s32.totalorder %s15, 1
    %p122 = por %p120, %p121
    %p124 = scmp.ne.s32.totalorder %s107, %s123
    %p125 = scmp.eq.s32.totalorder %s15, 0
    %p126 = por %p124, %p125
    %p127 = scmp.le.s32.totalorder 1, %s9
    %p128 = scmp.lt.s32.totalorder %s9, 3
    %p129 = pnand %p127, %p128
    %p130 = pneg %p129
    // Predicated region
    $region9: #{hrnet_forward.16} parent=5 // pred_check
      _
    $region10: #{hrnet_forward.16} parent=5 // pred_check_branch
      %132 = sbr.rel (%p129) target = $region12
    $region11: #{hrnet_forward.16} parent=5 // pred_region
      %s133 = ssub.s32 %s9, 1
      // Predicated region
      $region13: #{hrnet_forward.16} parent=11 // pred_check
        %p134 = pneg %p70
      $region14: #{hrnet_forward.16} parent=11 // pred_check_branch
        %136 = sbr.rel (%p134) target = $region16
      $region15: #{hrnet_forward.16} parent=11 // pred_region
        _
      $region16: #{hrnet_forward.16} parent=11 // pred_fallthru
        _
      // Predicated region
      $region17: #{hrnet_forward.16} parent=11 // pred_check
        %p137 = pneg %p91
      $region18: #{hrnet_forward.16} parent=11 // pred_check_branch
        %139 = sbr.rel (%p137) target = $region20
      $region19: #{hrnet_forward.16} parent=11 // pred_region
        _
      $region20: #{hrnet_forward.16} parent=11 // pred_fallthru
        _
    $region12: #{hrnet_forward.16} parent=5 // pred_fallthru
      _
    %p140 = scmp.lt.s32.totalorder %s9, 2
    // Predicated region
    $region21: #{hrnet_forward.16} parent=5 // pred_check
      %p141 = pneg %p140
    $region22: #{hrnet_forward.16} parent=5 // pred_check_branch
      %143 = sbr.rel (%p141) target = $region24
    $region23: #{hrnet_forward.16} parent=5 // pred_region
      // Predicated region
      $region25: #{hrnet_forward.16} parent=23 // pred_check
        %p144 = pneg %p43
      $region26: #{hrnet_forward.16} parent=23 // pred_check_branch
        %146 = sbr.rel (%p144) target = $region28
      $region27: #{hrnet_forward.16} parent=23 // pred_region
        %p147 = scmp.lt.s32.totalorder %s16, 1
        %s148 = scalar_select %p147, %s16, 1
        %p149 = scmp.lt.s32.totalorder %s17, 0
        %s150 = scalar_select %p149, %s17, 0
        %s151 = smul.addr %s148, 2
        %s152 = sadd.s32 %s150, %s151
        %s153 = smul.addr %s152, 4
        %s154 = scalar_lea.vmem %s0, %s153
      $region28: #{hrnet_forward.16} parent=23 // pred_fallthru
        _
    $region24: #{hrnet_forward.16} parent=5 // pred_fallthru
      _
    %p155 = scmp.le.s32.totalorder 1, %s9
    %p156 = scmp.lt.s32.totalorder %s9, 3
    %p157 = pnand %p155, %p156
    %p158 = pneg %p157
    // Predicated region
    $region29: #{hrnet_forward.16} parent=5 // pred_check
      _
    $region30: #{hrnet_forward.16} parent=5 // pred_check_branch
      %160 = sbr.rel (%p157) target = $region32
    $region31: #{hrnet_forward.16} parent=5 // pred_region
      %s161 = ssub.s32 %s9, 1
      %p162 = scmp.lt.s32.totalorder %s18, 1
      %s163 = scalar_select %p162, %s18, 1
      %p164 = scmp.lt.s32.totalorder %s19, 0
      %s165 = scalar_select %p164, %s19, 0
      %s166 = smul.addr %s163, 2
      %s167 = sadd.s32 %s165, %s166
      %s168 = smul.addr %s167, 4
      %s169 = scalar_lea.vmem %s0, %s168
      %p170 = pneg %p49
      %p171 = pneg %p46
      %p172 = pneg %p70
      %p173 = pneg %p67
      %p174 = pneg %p91
      %p175 = pneg %p88
      %p176 = pneg %p119
      %p177 = pneg %p116
      %p178 = scmp.lt.s32.totalorder %s18, 1
      %s179 = scalar_select %p178, %s18, 1
      %p180 = scmp.lt.s32.totalorder %s19, 0
      %s181 = scalar_select %p180, %s19, 0
      %s182 = smul.addr %s179, 2
      %s183 = sadd.s32 %s181, %s182
      %s184 = smul.addr %s183, 8
      %s185 = scalar_lea.vmem %s3, %s184
      %p186 = scmp.lt.s32.totalorder %s18, 1
      %s187 = scalar_select %p186, %s18, 1
      %p188 = scmp.lt.s32.totalorder %s19, 0
      %s189 = scalar_select %p188, %s19, 0
      %s190 = smul.addr %s187, 2
      %s191 = sadd.s32 %s189, %s190
      %s192 = smul.addr %s191, 4
      %s193 = scalar_lea.vmem %s0, %s192
      %p194 = scmp.lt.s32.totalorder %s18, 1
      %s195 = scalar_select %p194, %s18, 1
      %p196 = scmp.lt.s32.totalorder %s19, 0
      %s197 = scalar_select %p196, %s19, 0
      %s198 = smul.addr %s195, 2
      %s199 = sadd.s32 %s197, %s198
      %s200 = smul.addr %s199, 8
      %s201 = scalar_lea.vmem %s3, %s200
      %v203 = vld [vmem:[%s1] sm:$0xf]
      %v204 = vld [vmem:[%s1 + $0x4] sm:$0xf]
      %v205 = vld [vmem:[%s193] sm:$0xf]
      %v206 = vld [vmem:[%s193 + $0x4] sm:$0xf]
      %v207 = vld [vmem:[%s2] sm:$0xff]
      %v208 = vld [vmem:[%s2 + $0x8] sm:$0xff]
      %210 = vset.pattern.permute.xlu0 0
      %211 = vperm.xlu0 %210, %v207
      %v212 = vpop.permute.xlu0 %211
      %215 = vset.pattern.permute.xlu0 0
      %216 = vperm.xlu0 %215, %v208
      %v217 = vpop.permute.xlu0 %216
      %v221 = vunpack.c.l.b16 %v203
      %v222 = vunpack.c.l.b16 %v204
      %v223 = vpack.c.b16 %v222, %v221
      %v226 = vunpack.c.l.b16 %v205
      %v227 = vunpack.c.l.b16 %v206
      %v228 = vpack.c.b16 %v227, %v226
      %vm230 = vcmask 130048
      %v232 = vsel %vm230, %v223, 0
      %234 = vmatprep.subr.bf16.mxu0 0
      %235 = vmatpush1.bf16.msra.mxu0 %v228
      %236 = vmatprep.subr.bf16.mxu0 0
      %237 = vmatpush1.bf16.msra.mxu0 0
      %238 = vmatprep.subr.bf16.mxu0 0
      %239 = vmatpush1.bf16.msra.mxu0 0
      %240 = vmatprep.subr.bf16.mxu0 0
      %241 = vmatpush1.bf16.msra.mxu0 0
      %242 = vmatprep.subr.bf16.mxu0 0
      %243 = vmatpush1.bf16.msra.mxu0 0
      %244 = vmatprep.subr.bf16.mxu0 0
      %245 = vmatpush1.bf16.msra.mxu0 0
      %246 = vmatprep.subr.bf16.mxu0 0
      %247 = vmatpush1.bf16.msra.mxu0 0
      %248 = vmatprep.subr.bf16.mxu0 0
      %249 = vmatpush1.bf16.msra.mxu0 0
      %250 = vmatprep.subr.bf16.mxu0 0
      %251 = vmatpush1.bf16.msra.mxu0 0
      %252 = vmatprep.subr.bf16.mxu0 0
      %253 = vmatpush1.bf16.msra.mxu0 0
      %254 = vmatprep.subr.bf16.mxu0 0
      %255 = vmatpush1.bf16.msra.mxu0 0
      %256 = vmatprep.subr.bf16.mxu0 0
      %257 = vmatpush1.bf16.msra.mxu0 0
      %258 = vmatprep.subr.bf16.mxu0 0
      %259 = vmatpush1.bf16.msra.mxu0 0
      %260 = vmatprep.subr.bf16.mxu0 0
      %261 = vmatpush1.bf16.msra.mxu0 0
      %262 = vmatprep.subr.bf16.mxu0 0
      %263 = vmatpush1.bf16.msra.mxu0 0
      %264 = vmatprep.subr.bf16.mxu0 0
      %265 = vmatpush1.bf16.msra.mxu0 0
      %266 = vmatprep.mubr.bf16.mxu0 0
      %267 = vmatmul.mubr.bf16.gmra.mrb[0].mxu0 %v232
      %v268 = vpop.f32.mrb[0].mxu0
      %v269 = vadd.f32 %v212, %v268
      %v270 = vpop.f32.mrb[0].mxu0
      %v271 = vpop.f32.mrb[0].mxu0
      %v272 = vadd.f32 %v217, %v271
      %v273 = vpop.f32.mrb[0].mxu0
      %274 = vdwg.mxu0
      %vm275 = vcmask 523264
      %276 = vst.msk [vmem:[%s201] sm:$0xff] %vm275, %v269
      %277 = vst.msk [vmem:[%s201 + $0x8] sm:$0xff] %vm275, %v272
      %p278 = scmp.lt.s32.totalorder %s18, 1
      %s279 = scalar_select %p278, %s18, 1
      %p280 = scmp.lt.s32.totalorder %s19, 0
      %s281 = scalar_select %p280, %s19, 0
      %s282 = smul.addr %s279, 2
      %s283 = sadd.s32 %s281, %s282
      %s284 = smul.addr %s283, 8
      %s285 = scalar_lea.vmem %s3, %s284
      // Predicated region
      $region33: #{hrnet_forward.16} parent=31 // pred_check
        %p286 = pneg %p116
      $region34: #{hrnet_forward.16} parent=31 // pred_check_branch
        %288 = sbr.rel (%p286) target = $region36
      $region35: #{hrnet_forward.16} parent=31 // pred_region
        _
      $region36: #{hrnet_forward.16} parent=31 // pred_fallthru
        _
    $region32: #{hrnet_forward.16} parent=5 // pred_fallthru
      _
    %p289 = scmp.le.s32.totalorder 2, %s9
    // Predicated region
    $region37: #{hrnet_forward.16} parent=5 // pred_check
      %p290 = pneg %p289
    $region38: #{hrnet_forward.16} parent=5 // pred_check_branch
      %292 = sbr.rel (%p290) target = $region40
    $region39: #{hrnet_forward.16} parent=5 // pred_region
      %s293 = ssub.s32 %s9, 2
      // Predicated region
      $region41: #{hrnet_forward.16} parent=39 // pred_check
        %p294 = pneg %p122
      $region42: #{hrnet_forward.16} parent=39 // pred_check_branch
        %296 = sbr.rel (%p294) target = $region44
      $region43: #{hrnet_forward.16} parent=39 // pred_region
        %p297 = scmp.lt.s32.totalorder %s20, 1
        %s298 = scalar_select %p297, %s20, 1
        %p299 = scmp.lt.s32.totalorder %s21, 0
        %s300 = scalar_select %p299, %s21, 0
        %s301 = smul.addr %s298, 2
        %s302 = sadd.s32 %s300, %s301
        %s303 = smul.addr %s302, 8
        %s304 = scalar_lea.vmem %s3, %s303
      $region44: #{hrnet_forward.16} parent=39 // pred_fallthru
        _
    $region40: #{hrnet_forward.16} parent=5 // pred_fallthru
      _
  $region6: #{hrnet_forward.16} parent=0 // loop_footer
    %s13 = sadd.s32 1, %s9
  $region7: #{hrnet_forward.16} parent=0 // loop_footer_branch
    %8 = sbr.rel target = $region3
  $region8: #{hrnet_forward.16} parent=0 // loop_exit
    _

// kernel: hrnet_forward.17
$region0: #{hrnet_forward.17}
  #allocation0 [shape = 'u32[]', space=smem, size = 0x4, offset = 0x4, fixed_abs, tag = 'smem constant byte address 0x4 - core index']
  #allocation1 [shape = 'u32[144,128]{1,0:T(1,128)}', space=vmem, size = 0x12000, scoped, tag = 'internal scratch']
  %s0 = inlined_call_operand.vmem [shape: bf16[2,144,64], index: 0, kind: input, shape index: {}]
  %s1 = inlined_call_operand.vmem [shape: bf16[48,144], index: 1, kind: input, shape index: {}]
  %s2 = inlined_call_operand.vmem [shape: f32[48,1], index: 2, kind: input, shape index: {}]
  %s3 = inlined_call_operand.vmem [shape: f32[2,48,64], index: 3, kind: output, shape index: {}]
  %s4 = sld [smem:[#allocation0]]
  $region45: #{hrnet_forward.17} parent=0
    _
  %s6 = ssub.s32 1, %s4
  %s7 = scalar_select 0, %s6, %s4
  loop: start=0, step=1, limit=4
  $region2: #{hrnet_forward.17} parent=0 // loop_pre_header
    _
  $region3: #{hrnet_forward.17} parent=0 // loop_header
    %s9 = sphi 0, %s13
    %p10 = scmp.ge.s32.totalorder %s9, 4
    %s16 = sphi 0, %s28
    %s17 = sphi 0, %s24
    %s18 = sphi 0, %s16
    %s19 = sphi 0, %s17
    %s20 = sphi 0, %s18
    %s21 = sphi 0, %s19
    %s33 = sphi 0, %s35
    %s36 = sphi 0, %s33
    %s37 = sphi 0, %s36
    %s53 = sphi 0, %s37
    %s57 = sphi 0, %s57
    %s59 = sphi 0, %s57
    %s60 = sphi 0, %s59
    %s74 = sphi 0, %s60
    %s78 = sphi 0, %s78
    %s80 = sphi 0, %s78
    %s81 = sphi 0, %s80
    %s95 = sphi 0, %s81
    %s103 = sphi 0, %s105
    %s106 = sphi 0, %s103
    %s107 = sphi 0, %s106
    %s123 = sphi 0, %s107
  $region4: #{hrnet_forward.17} parent=0 // loop_header_branch
    %12 = sbr.rel (%p10) target = $region8
  $region5: #{hrnet_forward.17} parent=0 // loop_body
    %s14 = ssub.s32 %s9, 1
    %s15 = ssub.s32 %s9, 2
    %s22 = sadd.s32 1, %s17
    %p23 = scmp.ge.s32.totalorder %s22, 1
    %s24 = scalar_select %p23, 0, %s22
    %s25 = sadd.s32 1, %s16
    %s26 = scalar_select %p23, %s25, %s16
    %p27 = scmp.ge.s32.totalorder %s26, 2
    %s28 = scalar_select %p27, 0, %s26
    %s29 = ssub.s32 %s16, %s28
    %s30 = ssub.s32 %s17, %s24
    %s31 = sor.u32 %s29, %s30
    %p32 = scmp.eq.s32.totalorder %s31, 0
    %s34 = sadd.s32 %s33, 1
    %s35 = scalar_select %p32, %s33, %s34
    %p38 = pneg %p32
    %p39 = scmp.eq.s32.totalorder %s9, 1
    %p40 = por %p38, %p39
    %p41 = scmp.ne.s32.totalorder %s33, %s36
    %p42 = scmp.eq.s32.totalorder %s9, 0
    %p43 = por %p41, %p42
    %p44 = scmp.ne.s32.totalorder %s33, %s36
    %p45 = scmp.eq.s32.totalorder %s14, 1
    %p46 = por %p44, %p45
    %p47 = scmp.ne.s32.totalorder %s36, %s37
    %p48 = scmp.eq.s32.totalorder %s14, 0
    %p49 = por %p47, %p48
    %p50 = scmp.ne.s32.totalorder %s36, %s37
    %p51 = scmp.eq.s32.totalorder %s15, 1
    %p52 = por %p50, %p51
    %p54 = scmp.ne.s32.totalorder %s37, %s53
    %p55 = scmp.eq.s32.totalorder %s15, 0
    %p56 = por %p54, %p55
    %s58 = sadd.s32 %s57, 1
    %p61 = scmp.eq.s32.totalorder %s9, 1
    %p62 = scmp.ne.s32.totalorder %s57, %s59
    %p63 = scmp.eq.s32.totalorder %s9, 0
    %p64 = por %p62, %p63
    %p65 = scmp.ne.s32.totalorder %s57, %s59
    %p66 = scmp.eq.s32.totalorder %s14, 1
    %p67 = por %p65, %p66
    %p68 = scmp.ne.s32.totalorder %s59, %s60
    %p69 = scmp.eq.s32.totalorder %s14, 0
    %p70 = por %p68, %p69
    %p71 = scmp.ne.s32.totalorder %s59, %s60
    %p72 = scmp.eq.s32.totalorder %s15, 1
    %p73 = por %p71, %p72
    %p75 = scmp.ne.s32.totalorder %s60, %s74
    %p76 = scmp.eq.s32.totalorder %s15, 0
    %p77 = por %p75, %p76
    %s79 = sadd.s32 %s78, 1
    %p82 = scmp.eq.s32.totalorder %s9, 1
    %p83 = scmp.ne.s32.totalorder %s78, %s80
    %p84 = scmp.eq.s32.totalorder %s9, 0
    %p85 = por %p83, %p84
    %p86 = scmp.ne.s32.totalorder %s78, %s80
    %p87 = scmp.eq.s32.totalorder %s14, 1
    %p88 = por %p86, %p87
    %p89 = scmp.ne.s32.totalorder %s80, %s81
    %p90 = scmp.eq.s32.totalorder %s14, 0
    %p91 = por %p89, %p90
    %p92 = scmp.ne.s32.totalorder %s80, %s81
    %p93 = scmp.eq.s32.totalorder %s15, 1
    %p94 = por %p92, %p93
    %p96 = scmp.ne.s32.totalorder %s81, %s95
    %p97 = scmp.eq.s32.totalorder %s15, 0
    %p98 = por %p96, %p97
    %s99 = ssub.s32 %s16, %s28
    %s100 = ssub.s32 %s17, %s24
    %s101 = sor.u32 %s99, %s100
    %p102 = scmp.eq.s32.totalorder %s101, 0
    %s104 = sadd.s32 %s103, 1
    %s105 = scalar_select %p102, %s103, %s104
    %p108 = pneg %p102
    %p109 = scmp.eq.s32.totalorder %s9, 1
    %p110 = por %p108, %p109
    %p111 = scmp.ne.s32.totalorder %s103, %s106
    %p112 = scmp.eq.s32.totalorder %s9, 0
    %p113 = por %p111, %p112
    %p114 = scmp.ne.s32.totalorder %s103, %s106
    %p115 = scmp.eq.s32.totalorder %s14, 1
    %p116 = por %p114, %p115
    %p117 = scmp.ne.s32.totalorder %s106, %s107
    %p118 = scmp.eq.s32.totalorder %s14, 0
    %p119 = por %p117, %p118
    %p120 = scmp.ne.s32.totalorder %s106, %s107
    %p121 = scmp.eq.s32.totalorder %s15, 1
    %p122 = por %p120, %p121
    %p124 = scmp.ne.s32.totalorder %s107, %s123
    %p125 = scmp.eq.s32.totalorder %s15, 0
    %p126 = por %p124, %p125
    %p127 = scmp.le.s32.totalorder 1, %s9
    %p128 = scmp.lt.s32.totalorder %s9, 3
    %p129 = pnand %p127, %p128
    %p130 = pneg %p129
    // Predicated region
    $region9: #{hrnet_forward.17} parent=5 // pred_check
      _
    $region10: #{hrnet_forward.17} parent=5 // pred_check_branch
      %132 = sbr.rel (%p129) target = $region12
    $region11: #{hrnet_forward.17} parent=5 // pred_region
      %s133 = ssub.s32 %s9, 1
      // Predicated region
      $region13: #{hrnet_forward.17} parent=11 // pred_check
        %p134 = pneg %p70
      $region14: #{hrnet_forward.17} parent=11 // pred_check_branch
        %136 = sbr.rel (%p134) target = $region16
      $region15: #{hrnet_forward.17} parent=11 // pred_region
        _
      $region16: #{hrnet_forward.17} parent=11 // pred_fallthru
        _
      // Predicated region
      $region17: #{hrnet_forward.17} parent=11 // pred_check
        %p137 = pneg %p91
      $region18: #{hrnet_forward.17} parent=11 // pred_check_branch
        %139 = sbr.rel (%p137) target = $region20
      $region19: #{hrnet_forward.17} parent=11 // pred_region
        _
      $region20: #{hrnet_forward.17} parent=11 // pred_fallthru
        _
    $region12: #{hrnet_forward.17} parent=5 // pred_fallthru
      _
    %p140 = scmp.lt.s32.totalorder %s9, 2
    // Predicated region
    $region21: #{hrnet_forward.17} parent=5 // pred_check
      %p141 = pneg %p140
    $region22: #{hrnet_forward.17} parent=5 // pred_check_branch
      %143 = sbr.rel (%p141) target = $region24
    $region23: #{hrnet_forward.17} parent=5 // pred_region
      // Predicated region
      $region25: #{hrnet_forward.17} parent=23 // pred_check
        %p144 = pneg %p43
      $region26: #{hrnet_forward.17} parent=23 // pred_check_branch
        %146 = sbr.rel (%p144) target = $region28
      $region27: #{hrnet_forward.17} parent=23 // pred_region
        %p147 = scmp.lt.s32.totalorder %s16, 1
        %s148 = scalar_select %p147, %s16, 1
        %p149 = scmp.lt.s32.totalorder %s17, 0
        %s150 = scalar_select %p149, %s17, 0
        %s151 = smul.addr %s148, 18
        %s152 = sadd.s32 %s150, %s151
        %s153 = smul.addr %s152, 4
        %s154 = scalar_lea.vmem %s0, %s153
      $region28: #{hrnet_forward.17} parent=23 // pred_fallthru
        _
    $region24: #{hrnet_forward.17} parent=5 // pred_fallthru
      _
    %p155 = scmp.le.s32.totalorder 1, %s9
    %p156 = scmp.lt.s32.totalorder %s9, 3
    %p157 = pnand %p155, %p156
    %p158 = pneg %p157
    // Predicated region
    $region29: #{hrnet_forward.17} parent=5 // pred_check
      _
    $region30: #{hrnet_forward.17} parent=5 // pred_check_branch
      %160 = sbr.rel (%p157) target = $region32
    $region31: #{hrnet_forward.17} parent=5 // pred_region
      %s161 = ssub.s32 %s9, 1
      %p162 = scmp.lt.s32.totalorder %s18, 1
      %s163 = scalar_select %p162, %s18, 1
      %p164 = scmp.lt.s32.totalorder %s19, 0
      %s165 = scalar_select %p164, %s19, 0
      %s166 = smul.addr %s163, 18
      %s167 = sadd.s32 %s165, %s166
      %s168 = smul.addr %s167, 4
      %s169 = scalar_lea.vmem %s0, %s168
      %p170 = pneg %p49
      %p171 = pneg %p46
      %p172 = pneg %p70
      %p173 = pneg %p67
      %p174 = pneg %p91
      %p175 = pneg %p88
      %p176 = pneg %p119
      %p177 = pneg %p116
      %p178 = scmp.lt.s32.totalorder %s18, 1
      %s179 = scalar_select %p178, %s18, 1
      %p180 = scmp.lt.s32.totalorder %s19, 0
      %s181 = scalar_select %p180, %s19, 0
      %s182 = smul.addr %s179, 6
      %s183 = sadd.s32 %s181, %s182
      %s184 = smul.addr %s183, 8
      %s185 = scalar_lea.vmem %s3, %s184
      %p186 = scmp.lt.s32.totalorder %s18, 1
      %s187 = scalar_select %p186, %s18, 1
      %p188 = scmp.lt.s32.totalorder %s19, 0
      %s189 = scalar_select %p188, %s19, 0
      %s190 = smul.addr %s187, 18
      %s191 = sadd.s32 %s189, %s190
      %s192 = smul.addr %s191, 4
      %s193 = scalar_lea.vmem %s0, %s192
      %p194 = scmp.lt.s32.totalorder %s18, 1
      %s195 = scalar_select %p194, %s18, 1
      %p196 = scmp.lt.s32.totalorder %s19, 0
      %s197 = scalar_select %p196, %s19, 0
      %s198 = smul.addr %s195, 6
      %s199 = sadd.s32 %s197, %s198
      %s200 = smul.addr %s199, 8
      %s201 = scalar_lea.vmem %s3, %s200
      %v203 = vld [vmem:[%s1] sm:$0xff]
      %v204 = vld [vmem:[%s1 + $0x8] sm:$0xff]
      %v205 = vld [vmem:[%s1 + $0x10] sm:$0xff]
      %v206 = vld [vmem:[%s1 + $0x18] sm:$0xff]
      %v207 = vld [vmem:[%s1 + $0x20] sm:$0xff]
      %v208 = vld [vmem:[%s1 + $0x28] sm:$0xff]
      %v209 = vld [vmem:[%s193] sm:$0xf]
      %v210 = vld [vmem:[%s193 + $0x4] sm:$0xf]
      %v211 = vld [vmem:[%s193 + $0x8] sm:$0xf]
      %v212 = vld [vmem:[%s193 + $0xc] sm:$0xf]
      %v213 = vld [vmem:[%s193 + $0x10] sm:$0xf]
      %v214 = vld [vmem:[%s193 + $0x14] sm:$0xf]
      %v215 = vld [vmem:[%s193 + $0x18] sm:$0xf]
      %v216 = vld [vmem:[%s193 + $0x1c] sm:$0xf]
      %v217 = vld [vmem:[%s193 + $0x20] sm:$0xf]
      %v218 = vld [vmem:[%s193 + $0x24] sm:$0xf]
      %v219 = vld [vmem:[%s193 + $0x28] sm:$0xf]
      %v220 = vld [vmem:[%s193 + $0x2c] sm:$0xf]
      %v221 = vld [vmem:[%s193 + $0x30] sm:$0xf]
      %v222 = vld [vmem:[%s193 + $0x34] sm:$0xf]
      %v223 = vld [vmem:[%s193 + $0x38] sm:$0xf]
      %v224 = vld [vmem:[%s193 + $0x3c] sm:$0xf]
      %v225 = vld [vmem:[%s193 + $0x40] sm:$0xf]
      %v226 = vld [vmem:[%s193 + $0x44] sm:$0xf]
      %v227 = vld [vmem:[%s2] sm:$0xff]
      %v228 = vld [vmem:[%s2 + $0x8] sm:$0xff]
      %v229 = vld [vmem:[%s2 + $0x10] sm:$0xff]
      %v230 = vld [vmem:[%s2 + $0x18] sm:$0xff]
      %v231 = vld [vmem:[%s2 + $0x20] sm:$0xff]
      %v232 = vld [vmem:[%s2 + $0x28] sm:$0xff]
      %234 = vset.pattern.permute.xlu0 0
      %235 = vperm.xlu0 %234, %v227
      %v236 = vpop.permute.xlu0 %235
      %239 = vset.pattern.permute.xlu0 0
      %240 = vperm.xlu0 %239, %v228
      %v241 = vpop.permute.xlu0 %240
      %244 = vset.pattern.permute.xlu0 0
      %245 = vperm.xlu0 %244, %v229
      %v246 = vpop.permute.xlu0 %245
      %249 = vset.pattern.permute.xlu0 0
      %250 = vperm.xlu0 %249, %v230
      %v251 = vpop.permute.xlu0 %250
      %254 = vset.pattern.permute.xlu0 0
      %255 = vperm.xlu0 %254, %v231
      %v256 = vpop.permute.xlu0 %255
      %259 = vset.pattern.permute.xlu0 0
      %260 = vperm.xlu0 %259, %v232
      %v261 = vpop.permute.xlu0 %260
      %v269 = vunpack.c.l.b16 %v203
      %v270 = vunpack.c.h.b16 %v203
      %v271 = vunpack.c.l.b16 %v204
      %v272 = vunpack.c.h.b16 %v204
      %v273 = vunpack.c.l.b16 %v205
      %v274 = vunpack.c.h.b16 %v205
      %v275 = vunpack.c.l.b16 %v206
      %v276 = vunpack.c.h.b16 %v206
      %v277 = vunpack.c.l.b16 %v207
      %v278 = vunpack.c.h.b16 %v207
      %v279 = vunpack.c.l.b16 %v208
      %v280 = vunpack.c.h.b16 %v208
      %v281 = vpack.c.b16 %v271, %v269
      %v282 = vpack.c.b16 %v272, %v270
      %v283 = vpack.c.b16 %v275, %v273
      %v284 = vpack.c.b16 %v276, %v274
      %v285 = vpack.c.b16 %v279, %v277
      %v286 = vpack.c.b16 %v280, %v278
      %v308 = vunpack.c.l.b16 %v209
      %v309 = vunpack.c.l.b16 %v210
      %v310 = vunpack.c.l.b16 %v211
      %v311 = vunpack.c.l.b16 %v212
      %v312 = vunpack.c.l.b16 %v213
      %v313 = vunpack.c.l.b16 %v214
      %v314 = vunpack.c.l.b16 %v215
      %v315 = vunpack.c.l.b16 %v216
      %v316 = vunpack.c.l.b16 %v217
      %v317 = vunpack.c.l.b16 %v218
      %v318 = vunpack.c.l.b16 %v219
      %v319 = vunpack.c.l.b16 %v220
      %v320 = vunpack.c.l.b16 %v221
      %v321 = vunpack.c.l.b16 %v222
      %v322 = vunpack.c.l.b16 %v223
      %v323 = vunpack.c.l.b16 %v224
      %v324 = vunpack.c.l.b16 %v225
      %v325 = vunpack.c.l.b16 %v226
      %v326 = vpack.c.b16 %v309, %v308
      %v327 = vpack.c.b16 %v311, %v310
      %v328 = vpack.c.b16 %v313, %v312
      %v329 = vpack.c.b16 %v315, %v314
      %v330 = vpack.c.b16 %v317, %v316
      %v331 = vpack.c.b16 %v319, %v318
      %v332 = vpack.c.b16 %v321, %v320
      %v333 = vpack.c.b16 %v323, %v322
      %v334 = vpack.c.b16 %v325, %v324
      %vm344 = vcmask 130048
      %v346 = vsel %vm344, %v282, 0
      %v349 = vsel %vm344, %v284, 0
      %v352 = vsel %vm344, %v286, 0
      %354 = vmatprep.subr.bf16.mxu0 0
      %355 = vmatpush1.bf16.msra.mxu0 %v326
      %356 = vmatprep.subr.bf16.mxu0 0
      %357 = vmatpush1.bf16.msra.mxu0 %v327
      %358 = vmatprep.subr.bf16.mxu0 0
      %359 = vmatpush1.bf16.msra.mxu0 %v328
      %360 = vmatprep.subr.bf16.mxu0 0
      %361 = vmatpush1.bf16.msra.mxu0 %v329
      %362 = vmatprep.subr.bf16.mxu0 0
      %363 = vmatpush1.bf16.msra.mxu0 %v330
      %364 = vmatprep.subr.bf16.mxu0 0
      %365 = vmatpush1.bf16.msra.mxu0 %v331
      %366 = vmatprep.subr.bf16.mxu0 0
      %367 = vmatpush1.bf16.msra.mxu0 %v332
      %368 = vmatprep.subr.bf16.mxu0 0
      %369 = vmatpush1.bf16.msra.mxu0 %v333
      %370 = vmatprep.subr.bf16.mxu0 0
      %371 = vmatpush1.bf16.msra.mxu0 %v334
      %372 = vmatprep.subr.bf16.mxu0 0
      %373 = vmatpush1.bf16.msra.mxu0 0
      %374 = vmatprep.subr.bf16.mxu0 0
      %375 = vmatpush1.bf16.msra.mxu0 0
      %376 = vmatprep.subr.bf16.mxu0 0
      %377 = vmatpush1.bf16.msra.mxu0 0
      %378 = vmatprep.subr.bf16.mxu0 0
      %379 = vmatpush1.bf16.msra.mxu0 0
      %380 = vmatprep.subr.bf16.mxu0 0
      %381 = vmatpush1.bf16.msra.mxu0 0
      %382 = vmatprep.subr.bf16.mxu0 0
      %383 = vmatpush1.bf16.msra.mxu0 0
      %384 = vmatprep.subr.bf16.mxu0 0
      %385 = vmatpush1.bf16.msra.mxu0 0
      %386 = vmatprep.mubr.bf16.mxu0 %v346
      %387 = vmatmul.mubr.bf16.gmra.mrb[0].mxu0 %v281
      %v388 = vpop.f32.mrb[0].mxu0
      %v389 = vadd.f32 %v236, %v388
      %v390 = vpop.f32.mrb[0].mxu0
      %v391 = vpop.f32.mrb[0].mxu0
      %v392 = vadd.f32 %v241, %v391
      %v393 = vpop.f32.mrb[0].mxu0
      %394 = vmatprep.mubr.bf16.mxu0 %v349
      %395 = vmatmul.mubr.bf16.gmra.mrb[0].mxu0 %v283
      %v396 = vpop.f32.mrb[0].mxu0
      %v397 = vadd.f32 %v246, %v396
      %v398 = vpop.f32.mrb[0].mxu0
      %v399 = vpop.f32.mrb[0].mxu0
      %v400 = vadd.f32 %v251, %v399
      %v401 = vpop.f32.mrb[0].mxu0
      %402 = vmatprep.mubr.bf16.mxu0 %v352
      %403 = vmatmul.mubr.bf16.gmra.mrb[0].mxu0 %v285
      %v404 = vpop.f32.mrb[0].mxu0
      %v405 = vadd.f32 %v256, %v404
      %v406 = vpop.f32.mrb[0].mxu0
      %v407 = vpop.f32.mrb[0].mxu0
      %v408 = vadd.f32 %v261, %v407
      %v409 = vpop.f32.mrb[0].mxu0
      %410 = vdwg.mxu0
      %vm411 = vcmask 523264
      %412 = vst.msk [vmem:[%s201] sm:$0xff] %vm411, %v389
      %413 = vst.msk [vmem:[%s201 + $0x8] sm:$0xff] %vm411, %v392
      %414 = vst.msk [vmem:[%s201 + $0x10] sm:$0xff] %vm411, %v397
      %415 = vst.msk [vmem:[%s201 + $0x18] sm:$0xff] %vm411, %v400
      %416 = vst.msk [vmem:[%s201 + $0x20] sm:$0xff] %vm411, %v405
      %417 = vst.msk [vmem:[%s201 + $0x28] sm:$0xff] %vm411, %v408
      %p418 = scmp.lt.s32.totalorder %s18, 1
      %s419 = scalar_select %p418, %s18, 1
      %p420 = scmp.lt.s32.totalorder %s19, 0
      %s421 = scalar_select %p420, %s19, 0
      %s422 = smul.addr %s419, 6
      %s423 = sadd.s32 %s421, %s422
      %s424 = smul.addr %s423, 8
      %s425 = scalar_lea.vmem %s3, %s424
      // Predicated region
      $region33: #{hrnet_forward.17} parent=31 // pred_check
        %p426 = pneg %p116
      $region34: #{hrnet_forward.17} parent=31 // pred_check_branch
        %428 = sbr.rel (%p426) target = $region36
      $region35: #{hrnet_forward.17} parent=31 // pred_region
        _
      $region36: #{hrnet_forward.17} parent=31 // pred_fallthru
        _
    $region32: #{hrnet_forward.17} parent=5 // pred_fallthru
      _
    %p429 = scmp.le.s32.totalorder 2, %s9
    // Predicated region
    $region37: #{hrnet_forward.17} parent=5 // pred_check
      %p430 = pneg %p429
    $region38: #{hrnet_forward.17} parent=5 // pred_check_branch
      %432 = sbr.rel (%p430) target = $region40
    $region39: #{hrnet_forward.17} parent=5 // pred_region
      %s433 = ssub.s32 %s9, 2
      // Predicated region
      $region41: #{hrnet_forward.17} parent=39 // pred_check
        %p434 = pneg %p122
      $region42: #{hrnet_forward.17} parent=39 // pred_check_branch
        %436 = sbr.rel (%p434) target = $region44
      $region43: #{hrnet_forward.17} parent=39 // pred_region
        %p437 = scmp.lt.s32.totalorder %s20, 1
        %s438 = scalar_select %p437, %s20, 1
        %p439 = scmp.lt.s32.totalorder %s21, 0
        %s440 = scalar_select %p439, %s21, 0
        %s441 = smul.addr %s438, 6
        %s442 = sadd.s32 %s440, %s441
        %s443 = smul.addr %s442, 8
        %s444 = scalar_lea.vmem %s3, %s443
      $region44: #{hrnet_forward.17} parent=39 // pred_fallthru
        _
    $region40: #{hrnet_forward.17} parent=5 // pred_fallthru
      _
  $region6: #{hrnet_forward.17} parent=0 // loop_footer
    %s13 = sadd.s32 1, %s9
  $region7: #{hrnet_forward.17} parent=0 // loop_footer_branch
    %8 = sbr.rel target = $region3
  $region8: #{hrnet_forward.17} parent=0 // loop_exit
    _

// kernel: hrnet_forward.18
$region0: #{hrnet_forward.18}
  #allocation0 [shape = 'u32[]', space=smem, size = 0x4, offset = 0x4, fixed_abs, tag = 'smem constant byte address 0x4 - core index']
  #allocation1 [shape = 'u32[144,128]{1,0:T(1,128)}', space=vmem, size = 0x12000, scoped, tag = 'internal scratch']
  %s0 = inlined_call_operand.vmem [shape: bf16[2,48,64], index: 0, kind: input, shape index: {}]
  %s1 = inlined_call_operand.vmem [shape: bf16[24,48], index: 1, kind: input, shape index: {}]
  %s2 = inlined_call_operand.vmem [shape: f32[24,1], index: 2, kind: input, shape index: {}]
  %s3 = inlined_call_operand.vmem [shape: f32[2,24,64], index: 3, kind: output, shape index: {}]
  %s4 = sld [smem:[#allocation0]]
  $region45: #{hrnet_forward.18} parent=0
    _
  %s6 = ssub.s32 1, %s4
  %s7 = scalar_select 0, %s6, %s4
  loop: start=0, step=1, limit=4
  $region2: #{hrnet_forward.18} parent=0 // loop_pre_header
    _
  $region3: #{hrnet_forward.18} parent=0 // loop_header
    %s9 = sphi 0, %s13
    %p10 = scmp.ge.s32.totalorder %s9, 4
    %s16 = sphi 0, %s28
    %s17 = sphi 0, %s24
    %s18 = sphi 0, %s16
    %s19 = sphi 0, %s17
    %s20 = sphi 0, %s18
    %s21 = sphi 0, %s19
    %s33 = sphi 0, %s35
    %s36 = sphi 0, %s33
    %s37 = sphi 0, %s36
    %s53 = sphi 0, %s37
    %s57 = sphi 0, %s57
    %s59 = sphi 0, %s57
    %s60 = sphi 0, %s59
    %s74 = sphi 0, %s60
    %s78 = sphi 0, %s78
    %s80 = sphi 0, %s78
    %s81 = sphi 0, %s80
    %s95 = sphi 0, %s81
    %s103 = sphi 0, %s105
    %s106 = sphi 0, %s103
    %s107 = sphi 0, %s106
    %s123 = sphi 0, %s107
  $region4: #{hrnet_forward.18} parent=0 // loop_header_branch
    %12 = sbr.rel (%p10) target = $region8
  $region5: #{hrnet_forward.18} parent=0 // loop_body
    %s14 = ssub.s32 %s9, 1
    %s15 = ssub.s32 %s9, 2
    %s22 = sadd.s32 1, %s17
    %p23 = scmp.ge.s32.totalorder %s22, 1
    %s24 = scalar_select %p23, 0, %s22
    %s25 = sadd.s32 1, %s16
    %s26 = scalar_select %p23, %s25, %s16
    %p27 = scmp.ge.s32.totalorder %s26, 2
    %s28 = scalar_select %p27, 0, %s26
    %s29 = ssub.s32 %s16, %s28
    %s30 = ssub.s32 %s17, %s24
    %s31 = sor.u32 %s29, %s30
    %p32 = scmp.eq.s32.totalorder %s31, 0
    %s34 = sadd.s32 %s33, 1
    %s35 = scalar_select %p32, %s33, %s34
    %p38 = pneg %p32
    %p39 = scmp.eq.s32.totalorder %s9, 1
    %p40 = por %p38, %p39
    %p41 = scmp.ne.s32.totalorder %s33, %s36
    %p42 = scmp.eq.s32.totalorder %s9, 0
    %p43 = por %p41, %p42
    %p44 = scmp.ne.s32.totalorder %s33, %s36
    %p45 = scmp.eq.s32.totalorder %s14, 1
    %p46 = por %p44, %p45
    %p47 = scmp.ne.s32.totalorder %s36, %s37
    %p48 = scmp.eq.s32.totalorder %s14, 0
    %p49 = por %p47, %p48
    %p50 = scmp.ne.s32.totalorder %s36, %s37
    %p51 = scmp.eq.s32.totalorder %s15, 1
    %p52 = por %p50, %p51
    %p54 = scmp.ne.s32.totalorder %s37, %s53
    %p55 = scmp.eq.s32.totalorder %s15, 0
    %p56 = por %p54, %p55
    %s58 = sadd.s32 %s57, 1
    %p61 = scmp.eq.s32.totalorder %s9, 1
    %p62 = scmp.ne.s32.totalorder %s57, %s59
    %p63 = scmp.eq.s32.totalorder %s9, 0
    %p64 = por %p62, %p63
    %p65 = scmp.ne.s32.totalorder %s57, %s59
    %p66 = scmp.eq.s32.totalorder %s14, 1
    %p67 = por %p65, %p66
    %p68 = scmp.ne.s32.totalorder %s59, %s60
    %p69 = scmp.eq.s32.totalorder %s14, 0
    %p70 = por %p68, %p69
    %p71 = scmp.ne.s32.totalorder %s59, %s60
    %p72 = scmp.eq.s32.totalorder %s15, 1
    %p73 = por %p71, %p72
    %p75 = scmp.ne.s32.totalorder %s60, %s74
    %p76 = scmp.eq.s32.totalorder %s15, 0
    %p77 = por %p75, %p76
    %s79 = sadd.s32 %s78, 1
    %p82 = scmp.eq.s32.totalorder %s9, 1
    %p83 = scmp.ne.s32.totalorder %s78, %s80
    %p84 = scmp.eq.s32.totalorder %s9, 0
    %p85 = por %p83, %p84
    %p86 = scmp.ne.s32.totalorder %s78, %s80
    %p87 = scmp.eq.s32.totalorder %s14, 1
    %p88 = por %p86, %p87
    %p89 = scmp.ne.s32.totalorder %s80, %s81
    %p90 = scmp.eq.s32.totalorder %s14, 0
    %p91 = por %p89, %p90
    %p92 = scmp.ne.s32.totalorder %s80, %s81
    %p93 = scmp.eq.s32.totalorder %s15, 1
    %p94 = por %p92, %p93
    %p96 = scmp.ne.s32.totalorder %s81, %s95
    %p97 = scmp.eq.s32.totalorder %s15, 0
    %p98 = por %p96, %p97
    %s99 = ssub.s32 %s16, %s28
    %s100 = ssub.s32 %s17, %s24
    %s101 = sor.u32 %s99, %s100
    %p102 = scmp.eq.s32.totalorder %s101, 0
    %s104 = sadd.s32 %s103, 1
    %s105 = scalar_select %p102, %s103, %s104
    %p108 = pneg %p102
    %p109 = scmp.eq.s32.totalorder %s9, 1
    %p110 = por %p108, %p109
    %p111 = scmp.ne.s32.totalorder %s103, %s106
    %p112 = scmp.eq.s32.totalorder %s9, 0
    %p113 = por %p111, %p112
    %p114 = scmp.ne.s32.totalorder %s103, %s106
    %p115 = scmp.eq.s32.totalorder %s14, 1
    %p116 = por %p114, %p115
    %p117 = scmp.ne.s32.totalorder %s106, %s107
    %p118 = scmp.eq.s32.totalorder %s14, 0
    %p119 = por %p117, %p118
    %p120 = scmp.ne.s32.totalorder %s106, %s107
    %p121 = scmp.eq.s32.totalorder %s15, 1
    %p122 = por %p120, %p121
    %p124 = scmp.ne.s32.totalorder %s107, %s123
    %p125 = scmp.eq.s32.totalorder %s15, 0
    %p126 = por %p124, %p125
    %p127 = scmp.le.s32.totalorder 1, %s9
    %p128 = scmp.lt.s32.totalorder %s9, 3
    %p129 = pnand %p127, %p128
    %p130 = pneg %p129
    // Predicated region
    $region9: #{hrnet_forward.18} parent=5 // pred_check
      _
    $region10: #{hrnet_forward.18} parent=5 // pred_check_branch
      %132 = sbr.rel (%p129) target = $region12
    $region11: #{hrnet_forward.18} parent=5 // pred_region
      %s133 = ssub.s32 %s9, 1
      // Predicated region
      $region13: #{hrnet_forward.18} parent=11 // pred_check
        %p134 = pneg %p70
      $region14: #{hrnet_forward.18} parent=11 // pred_check_branch
        %136 = sbr.rel (%p134) target = $region16
      $region15: #{hrnet_forward.18} parent=11 // pred_region
        _
      $region16: #{hrnet_forward.18} parent=11 // pred_fallthru
        _
      // Predicated region
      $region17: #{hrnet_forward.18} parent=11 // pred_check
        %p137 = pneg %p91
      $region18: #{hrnet_forward.18} parent=11 // pred_check_branch
        %139 = sbr.rel (%p137) target = $region20
      $region19: #{hrnet_forward.18} parent=11 // pred_region
        _
      $region20: #{hrnet_forward.18} parent=11 // pred_fallthru
        _
    $region12: #{hrnet_forward.18} parent=5 // pred_fallthru
      _
    %p140 = scmp.lt.s32.totalorder %s9, 2
    // Predicated region
    $region21: #{hrnet_forward.18} parent=5 // pred_check
      %p141 = pneg %p140
    $region22: #{hrnet_forward.18} parent=5 // pred_check_branch
      %143 = sbr.rel (%p141) target = $region24
    $region23: #{hrnet_forward.18} parent=5 // pred_region
      // Predicated region
      $region25: #{hrnet_forward.18} parent=23 // pred_check
        %p144 = pneg %p43
      $region26: #{hrnet_forward.18} parent=23 // pred_check_branch
        %146 = sbr.rel (%p144) target = $region28
      $region27: #{hrnet_forward.18} parent=23 // pred_region
        %p147 = scmp.lt.s32.totalorder %s16, 1
        %s148 = scalar_select %p147, %s16, 1
        %p149 = scmp.lt.s32.totalorder %s17, 0
        %s150 = scalar_select %p149, %s17, 0
        %s151 = smul.addr %s148, 6
        %s152 = sadd.s32 %s150, %s151
        %s153 = smul.addr %s152, 4
        %s154 = scalar_lea.vmem %s0, %s153
      $region28: #{hrnet_forward.18} parent=23 // pred_fallthru
        _
    $region24: #{hrnet_forward.18} parent=5 // pred_fallthru
      _
    %p155 = scmp.le.s32.totalorder 1, %s9
    %p156 = scmp.lt.s32.totalorder %s9, 3
    %p157 = pnand %p155, %p156
    %p158 = pneg %p157
    // Predicated region
    $region29: #{hrnet_forward.18} parent=5 // pred_check
      _
    $region30: #{hrnet_forward.18} parent=5 // pred_check_branch
      %160 = sbr.rel (%p157) target = $region32
    $region31: #{hrnet_forward.18} parent=5 // pred_region
      %s161 = ssub.s32 %s9, 1
      %p162 = scmp.lt.s32.totalorder %s18, 1
      %s163 = scalar_select %p162, %s18, 1
      %p164 = scmp.lt.s32.totalorder %s19, 0
      %s165 = scalar_select %p164, %s19, 0
      %s166 = smul.addr %s163, 6
      %s167 = sadd.s32 %s165, %s166
      %s168 = smul.addr %s167, 4
      %s169 = scalar_lea.vmem %s0, %s168
      %p170 = pneg %p49
      %p171 = pneg %p46
      %p172 = pneg %p70
      %p173 = pneg %p67
      %p174 = pneg %p91
      %p175 = pneg %p88
      %p176 = pneg %p119
      %p177 = pneg %p116
      %p178 = scmp.lt.s32.totalorder %s18, 1
      %s179 = scalar_select %p178, %s18, 1
      %p180 = scmp.lt.s32.totalorder %s19, 0
      %s181 = scalar_select %p180, %s19, 0
      %s182 = smul.addr %s179, 3
      %s183 = sadd.s32 %s181, %s182
      %s184 = smul.addr %s183, 8
      %s185 = scalar_lea.vmem %s3, %s184
      %p186 = scmp.lt.s32.totalorder %s18, 1
      %s187 = scalar_select %p186, %s18, 1
      %p188 = scmp.lt.s32.totalorder %s19, 0
      %s189 = scalar_select %p188, %s19, 0
      %s190 = smul.addr %s187, 6
      %s191 = sadd.s32 %s189, %s190
      %s192 = smul.addr %s191, 4
      %s193 = scalar_lea.vmem %s0, %s192
      %p194 = scmp.lt.s32.totalorder %s18, 1
      %s195 = scalar_select %p194, %s18, 1
      %p196 = scmp.lt.s32.totalorder %s19, 0
      %s197 = scalar_select %p196, %s19, 0
      %s198 = smul.addr %s195, 3
      %s199 = sadd.s32 %s197, %s198
      %s200 = smul.addr %s199, 8
      %s201 = scalar_lea.vmem %s3, %s200
      %v203 = vld [vmem:[%s1] sm:$0xf]
      %v204 = vld [vmem:[%s1 + $0x4] sm:$0xf]
      %v205 = vld [vmem:[%s1 + $0x8] sm:$0xf]
      %v206 = vld [vmem:[%s193] sm:$0xf]
      %v207 = vld [vmem:[%s193 + $0x4] sm:$0xf]
      %v208 = vld [vmem:[%s193 + $0x8] sm:$0xf]
      %v209 = vld [vmem:[%s193 + $0xc] sm:$0xf]
      %v210 = vld [vmem:[%s193 + $0x10] sm:$0xf]
      %v211 = vld [vmem:[%s193 + $0x14] sm:$0xf]
      %v212 = vld [vmem:[%s2] sm:$0xff]
      %v213 = vld [vmem:[%s2 + $0x8] sm:$0xff]
      %v214 = vld [vmem:[%s2 + $0x10] sm:$0xff]
      %216 = vset.pattern.permute.xlu0 0
      %217 = vperm.xlu0 %216, %v212
      %v218 = vpop.permute.xlu0 %217
      %221 = vset.pattern.permute.xlu0 0
      %222 = vperm.xlu0 %221, %v213
      %v223 = vpop.permute.xlu0 %222
      %226 = vset.pattern.permute.xlu0 0
      %227 = vperm.xlu0 %226, %v214
      %v228 = vpop.permute.xlu0 %227
      %v233 = vunpack.c.l.b16 %v203
      %v234 = vunpack.c.l.b16 %v204
      %v235 = vunpack.c.l.b16 %v205
      %v236 = vpack.c.b16 %v234, %v233
      %v237 = vpack.c.b16 %v235, %v235
      %v244 = vunpack.c.l.b16 %v206
      %v245 = vunpack.c.l.b16 %v207
      %v246 = vunpack.c.l.b16 %v208
      %v247 = vunpack.c.l.b16 %v209
      %v248 = vunpack.c.l.b16 %v210
      %v249 = vunpack.c.l.b16 %v211
      %v250 = vpack.c.b16 %v245, %v244
      %v251 = vpack.c.b16 %v247, %v246
      %v252 = vpack.c.b16 %v249, %v248
      %vm256 = vcmask 392192
      %v258 = vsel %vm256, %v236, 0
      %v261 = vsel %vm256, %v237, 0
      %263 = vmatprep.subr.bf16.mxu0 0
      %264 = vmatpush1.bf16.msra.mxu0 %v250
      %265 = vmatprep.subr.bf16.mxu0 0
      %266 = vmatpush1.bf16.msra.mxu0 %v251
      %267 = vmatprep.subr.bf16.mxu0 0
      %268 = vmatpush1.bf16.msra.mxu0 %v252
      %269 = vmatprep.subr.bf16.mxu0 0
      %270 = vmatpush1.bf16.msra.mxu0 0
      %271 = vmatprep.subr.bf16.mxu0 0
      %272 = vmatpush1.bf16.msra.mxu0 0
      %273 = vmatprep.subr.bf16.mxu0 0
      %274 = vmatpush1.bf16.msra.mxu0 0
      %275 = vmatprep.subr.bf16.mxu0 0
      %276 = vmatpush1.bf16.msra.mxu0 0
      %277 = vmatprep.subr.bf16.mxu0 0
      %278 = vmatpush1.bf16.msra.mxu0 0
      %279 = vmatprep.subr.bf16.mxu0 0
      %280 = vmatpush1.bf16.msra.mxu0 0
      %281 = vmatprep.subr.bf16.mxu0 0
      %282 = vmatpush1.bf16.msra.mxu0 0
      %283 = vmatprep.subr.bf16.mxu0 0
      %284 = vmatpush1.bf16.msra.mxu0 0
      %285 = vmatprep.subr.bf16.mxu0 0
      %286 = vmatpush1.bf16.msra.mxu0 0
      %287 = vmatprep.subr.bf16.mxu0 0
      %288 = vmatpush1.bf16.msra.mxu0 0
      %289 = vmatprep.subr.bf16.mxu0 0
      %290 = vmatpush1.bf16.msra.mxu0 0
      %291 = vmatprep.subr.bf16.mxu0 0
      %292 = vmatpush1.bf16.msra.mxu0 0
      %293 = vmatprep.subr.bf16.mxu0 0
      %294 = vmatpush1.bf16.msra.mxu0 0
      %295 = vmatprep.mubr.bf16.mxu0 0
      %296 = vmatmul.mubr.bf16.gmra.mrb[0].mxu0 %v258
      %v297 = vpop.f32.mrb[0].mxu0
      %v298 = vadd.f32 %v218, %v297
      %v299 = vpop.f32.mrb[0].mxu0
      %v300 = vpop.f32.mrb[0].mxu0
      %v301 = vadd.f32 %v223, %v300
      %v302 = vpop.f32.mrb[0].mxu0
      %303 = vmatprep.mubr.bf16.mxu0 0
      %304 = vmatmul.mubr.bf16.gmra.mrb[0].mxu0 %v261
      %v305 = vpop.f32.mrb[0].mxu0
      %v306 = vadd.f32 %v228, %v305
      %v307 = vpop.f32.mrb[0].mxu0
      %v308 = vpop.f32.mrb[0].mxu0
      %v309 = vpop.f32.mrb[0].mxu0
      %310 = vdwg.mxu0
      %vm311 = vcmask 523264
      %312 = vst.msk [vmem:[%s201] sm:$0xff] %vm311, %v298
      %313 = vst.msk [vmem:[%s201 + $0x8] sm:$0xff] %vm311, %v301
      %314 = vst.msk [vmem:[%s201 + $0x10] sm:$0xff] %vm311, %v306
      %p315 = scmp.lt.s32.totalorder %s18, 1
      %s316 = scalar_select %p315, %s18, 1
      %p317 = scmp.lt.s32.totalorder %s19, 0
      %s318 = scalar_select %p317, %s19, 0
      %s319 = smul.addr %s316, 3
      %s320 = sadd.s32 %s318, %s319
      %s321 = smul.addr %s320, 8
      %s322 = scalar_lea.vmem %s3, %s321
      // Predicated region
      $region33: #{hrnet_forward.18} parent=31 // pred_check
        %p323 = pneg %p116
      $region34: #{hrnet_forward.18} parent=31 // pred_check_branch
        %325 = sbr.rel (%p323) target = $region36
      $region35: #{hrnet_forward.18} parent=31 // pred_region
        _
      $region36: #{hrnet_forward.18} parent=31 // pred_fallthru
        _
    $region32: #{hrnet_forward.18} parent=5 // pred_fallthru
      _
    %p326 = scmp.le.s32.totalorder 2, %s9
    // Predicated region
    $region37: #{hrnet_forward.18} parent=5 // pred_check
      %p327 = pneg %p326
    $region38: #{hrnet_forward.18} parent=5 // pred_check_branch
      %329 = sbr.rel (%p327) target = $region40
    $region39: #{hrnet_forward.18} parent=5 // pred_region
      %s330 = ssub.s32 %s9, 2
      // Predicated region
      $region41: #{hrnet_forward.18} parent=39 // pred_check
        %p331 = pneg %p122
      $region42: #{hrnet_forward.18} parent=39 // pred_check_branch
        %333 = sbr.rel (%p331) target = $region44
      $region43: #{hrnet_forward.18} parent=39 // pred_region
        %p334 = scmp.lt.s32.totalorder %s20, 1
        %s335 = scalar_select %p334, %s20, 1
        %p336 = scmp.lt.s32.totalorder %s21, 0
        %s337 = scalar_select %p336, %s21, 0
        %s338 = smul.addr %s335, 3
        %s339 = sadd.s32 %s337, %s338
        %s340 = smul.addr %s339, 8
        %s341 = scalar_lea.vmem %s3, %s340
      $region44: #{hrnet_forward.18} parent=39 // pred_fallthru
        _
    $region40: #{hrnet_forward.18} parent=5 // pred_fallthru
      _
  $region6: #{hrnet_forward.18} parent=0 // loop_footer
    %s13 = sadd.s32 1, %s9
  $region7: #{hrnet_forward.18} parent=0 // loop_footer_branch
    %8 = sbr.rel target = $region3
  $region8: #{hrnet_forward.18} parent=0 // loop_exit
    _

// kernel: hrnet_forward.20
$region0: #{hrnet_forward.20}
  #allocation0 [shape = 'u32[]', space=smem, size = 0x4, offset = 0x4, fixed_abs, tag = 'smem constant byte address 0x4 - core index']
  #allocation1 [shape = 'u32[144,128]{1,0:T(1,128)}', space=vmem, size = 0x12000, scoped, tag = 'internal scratch']
  %s0 = inlined_call_operand.vmem [shape: bf16[2,432,64], index: 0, kind: input, shape index: {}]
  %s1 = inlined_call_operand.vmem [shape: bf16[16,432], index: 1, kind: input, shape index: {}]
  %s2 = inlined_call_operand.vmem [shape: f32[16,1], index: 2, kind: input, shape index: {}]
  %s3 = inlined_call_operand.vmem [shape: f32[2,16,64], index: 3, kind: output, shape index: {}]
  %s4 = sld [smem:[#allocation0]]
  $region45: #{hrnet_forward.20} parent=0
    _
  %s6 = ssub.s32 1, %s4
  %s7 = scalar_select 0, %s6, %s4
  loop: start=0, step=1, limit=4
  $region2: #{hrnet_forward.20} parent=0 // loop_pre_header
    _
  $region3: #{hrnet_forward.20} parent=0 // loop_header
    %s9 = sphi 0, %s13
    %p10 = scmp.ge.s32.totalorder %s9, 4
    %s16 = sphi 0, %s28
    %s17 = sphi 0, %s24
    %s18 = sphi 0, %s16
    %s19 = sphi 0, %s17
    %s20 = sphi 0, %s18
    %s21 = sphi 0, %s19
    %s33 = sphi 0, %s35
    %s36 = sphi 0, %s33
    %s37 = sphi 0, %s36
    %s53 = sphi 0, %s37
    %s57 = sphi 0, %s57
    %s59 = sphi 0, %s57
    %s60 = sphi 0, %s59
    %s74 = sphi 0, %s60
    %s78 = sphi 0, %s78
    %s80 = sphi 0, %s78
    %s81 = sphi 0, %s80
    %s95 = sphi 0, %s81
    %s103 = sphi 0, %s105
    %s106 = sphi 0, %s103
    %s107 = sphi 0, %s106
    %s123 = sphi 0, %s107
  $region4: #{hrnet_forward.20} parent=0 // loop_header_branch
    %12 = sbr.rel (%p10) target = $region8
  $region5: #{hrnet_forward.20} parent=0 // loop_body
    %s14 = ssub.s32 %s9, 1
    %s15 = ssub.s32 %s9, 2
    %s22 = sadd.s32 1, %s17
    %p23 = scmp.ge.s32.totalorder %s22, 1
    %s24 = scalar_select %p23, 0, %s22
    %s25 = sadd.s32 1, %s16
    %s26 = scalar_select %p23, %s25, %s16
    %p27 = scmp.ge.s32.totalorder %s26, 2
    %s28 = scalar_select %p27, 0, %s26
    %s29 = ssub.s32 %s16, %s28
    %s30 = ssub.s32 %s17, %s24
    %s31 = sor.u32 %s29, %s30
    %p32 = scmp.eq.s32.totalorder %s31, 0
    %s34 = sadd.s32 %s33, 1
    %s35 = scalar_select %p32, %s33, %s34
    %p38 = pneg %p32
    %p39 = scmp.eq.s32.totalorder %s9, 1
    %p40 = por %p38, %p39
    %p41 = scmp.ne.s32.totalorder %s33, %s36
    %p42 = scmp.eq.s32.totalorder %s9, 0
    %p43 = por %p41, %p42
    %p44 = scmp.ne.s32.totalorder %s33, %s36
    %p45 = scmp.eq.s32.totalorder %s14, 1
    %p46 = por %p44, %p45
    %p47 = scmp.ne.s32.totalorder %s36, %s37
    %p48 = scmp.eq.s32.totalorder %s14, 0
    %p49 = por %p47, %p48
    %p50 = scmp.ne.s32.totalorder %s36, %s37
    %p51 = scmp.eq.s32.totalorder %s15, 1
    %p52 = por %p50, %p51
    %p54 = scmp.ne.s32.totalorder %s37, %s53
    %p55 = scmp.eq.s32.totalorder %s15, 0
    %p56 = por %p54, %p55
    %s58 = sadd.s32 %s57, 1
    %p61 = scmp.eq.s32.totalorder %s9, 1
    %p62 = scmp.ne.s32.totalorder %s57, %s59
    %p63 = scmp.eq.s32.totalorder %s9, 0
    %p64 = por %p62, %p63
    %p65 = scmp.ne.s32.totalorder %s57, %s59
    %p66 = scmp.eq.s32.totalorder %s14, 1
    %p67 = por %p65, %p66
    %p68 = scmp.ne.s32.totalorder %s59, %s60
    %p69 = scmp.eq.s32.totalorder %s14, 0
    %p70 = por %p68, %p69
    %p71 = scmp.ne.s32.totalorder %s59, %s60
    %p72 = scmp.eq.s32.totalorder %s15, 1
    %p73 = por %p71, %p72
    %p75 = scmp.ne.s32.totalorder %s60, %s74
    %p76 = scmp.eq.s32.totalorder %s15, 0
    %p77 = por %p75, %p76
    %s79 = sadd.s32 %s78, 1
    %p82 = scmp.eq.s32.totalorder %s9, 1
    %p83 = scmp.ne.s32.totalorder %s78, %s80
    %p84 = scmp.eq.s32.totalorder %s9, 0
    %p85 = por %p83, %p84
    %p86 = scmp.ne.s32.totalorder %s78, %s80
    %p87 = scmp.eq.s32.totalorder %s14, 1
    %p88 = por %p86, %p87
    %p89 = scmp.ne.s32.totalorder %s80, %s81
    %p90 = scmp.eq.s32.totalorder %s14, 0
    %p91 = por %p89, %p90
    %p92 = scmp.ne.s32.totalorder %s80, %s81
    %p93 = scmp.eq.s32.totalorder %s15, 1
    %p94 = por %p92, %p93
    %p96 = scmp.ne.s32.totalorder %s81, %s95
    %p97 = scmp.eq.s32.totalorder %s15, 0
    %p98 = por %p96, %p97
    %s99 = ssub.s32 %s16, %s28
    %s100 = ssub.s32 %s17, %s24
    %s101 = sor.u32 %s99, %s100
    %p102 = scmp.eq.s32.totalorder %s101, 0
    %s104 = sadd.s32 %s103, 1
    %s105 = scalar_select %p102, %s103, %s104
    %p108 = pneg %p102
    %p109 = scmp.eq.s32.totalorder %s9, 1
    %p110 = por %p108, %p109
    %p111 = scmp.ne.s32.totalorder %s103, %s106
    %p112 = scmp.eq.s32.totalorder %s9, 0
    %p113 = por %p111, %p112
    %p114 = scmp.ne.s32.totalorder %s103, %s106
    %p115 = scmp.eq.s32.totalorder %s14, 1
    %p116 = por %p114, %p115
    %p117 = scmp.ne.s32.totalorder %s106, %s107
    %p118 = scmp.eq.s32.totalorder %s14, 0
    %p119 = por %p117, %p118
    %p120 = scmp.ne.s32.totalorder %s106, %s107
    %p121 = scmp.eq.s32.totalorder %s15, 1
    %p122 = por %p120, %p121
    %p124 = scmp.ne.s32.totalorder %s107, %s123
    %p125 = scmp.eq.s32.totalorder %s15, 0
    %p126 = por %p124, %p125
    %p127 = scmp.le.s32.totalorder 1, %s9
    %p128 = scmp.lt.s32.totalorder %s9, 3
    %p129 = pnand %p127, %p128
    %p130 = pneg %p129
    // Predicated region
    $region9: #{hrnet_forward.20} parent=5 // pred_check
      _
    $region10: #{hrnet_forward.20} parent=5 // pred_check_branch
      %132 = sbr.rel (%p129) target = $region12
    $region11: #{hrnet_forward.20} parent=5 // pred_region
      %s133 = ssub.s32 %s9, 1
      // Predicated region
      $region13: #{hrnet_forward.20} parent=11 // pred_check
        %p134 = pneg %p70
      $region14: #{hrnet_forward.20} parent=11 // pred_check_branch
        %136 = sbr.rel (%p134) target = $region16
      $region15: #{hrnet_forward.20} parent=11 // pred_region
        _
      $region16: #{hrnet_forward.20} parent=11 // pred_fallthru
        _
      // Predicated region
      $region17: #{hrnet_forward.20} parent=11 // pred_check
        %p137 = pneg %p91
      $region18: #{hrnet_forward.20} parent=11 // pred_check_branch
        %139 = sbr.rel (%p137) target = $region20
      $region19: #{hrnet_forward.20} parent=11 // pred_region
        _
      $region20: #{hrnet_forward.20} parent=11 // pred_fallthru
        _
    $region12: #{hrnet_forward.20} parent=5 // pred_fallthru
      _
    %p140 = scmp.lt.s32.totalorder %s9, 2
    // Predicated region
    $region21: #{hrnet_forward.20} parent=5 // pred_check
      %p141 = pneg %p140
    $region22: #{hrnet_forward.20} parent=5 // pred_check_branch
      %143 = sbr.rel (%p141) target = $region24
    $region23: #{hrnet_forward.20} parent=5 // pred_region
      // Predicated region
      $region25: #{hrnet_forward.20} parent=23 // pred_check
        %p144 = pneg %p43
      $region26: #{hrnet_forward.20} parent=23 // pred_check_branch
        %146 = sbr.rel (%p144) target = $region28
      $region27: #{hrnet_forward.20} parent=23 // pred_region
        %p147 = scmp.lt.s32.totalorder %s16, 1
        %s148 = scalar_select %p147, %s16, 1
        %p149 = scmp.lt.s32.totalorder %s17, 0
        %s150 = scalar_select %p149, %s17, 0
        %s151 = smul.addr %s148, 54
        %s152 = sadd.s32 %s150, %s151
        %s153 = smul.addr %s152, 4
        %s154 = scalar_lea.vmem %s0, %s153
      $region28: #{hrnet_forward.20} parent=23 // pred_fallthru
        _
    $region24: #{hrnet_forward.20} parent=5 // pred_fallthru
      _
    %p155 = scmp.le.s32.totalorder 1, %s9
    %p156 = scmp.lt.s32.totalorder %s9, 3
    %p157 = pnand %p155, %p156
    %p158 = pneg %p157
    // Predicated region
    $region29: #{hrnet_forward.20} parent=5 // pred_check
      _
    $region30: #{hrnet_forward.20} parent=5 // pred_check_branch
      %160 = sbr.rel (%p157) target = $region32
    $region31: #{hrnet_forward.20} parent=5 // pred_region
      %s161 = ssub.s32 %s9, 1
      %p162 = scmp.lt.s32.totalorder %s18, 1
      %s163 = scalar_select %p162, %s18, 1
      %p164 = scmp.lt.s32.totalorder %s19, 0
      %s165 = scalar_select %p164, %s19, 0
      %s166 = smul.addr %s163, 54
      %s167 = sadd.s32 %s165, %s166
      %s168 = smul.addr %s167, 4
      %s169 = scalar_lea.vmem %s0, %s168
      %p170 = pneg %p49
      %p171 = pneg %p46
      %p172 = pneg %p70
      %p173 = pneg %p67
      %p174 = pneg %p91
      %p175 = pneg %p88
      %p176 = pneg %p119
      %p177 = pneg %p116
      %p178 = scmp.lt.s32.totalorder %s18, 1
      %s179 = scalar_select %p178, %s18, 1
      %p180 = scmp.lt.s32.totalorder %s19, 0
      %s181 = scalar_select %p180, %s19, 0
      %s182 = smul.addr %s179, 2
      %s183 = sadd.s32 %s181, %s182
      %s184 = smul.addr %s183, 8
      %s185 = scalar_lea.vmem %s3, %s184
      %p186 = scmp.lt.s32.totalorder %s18, 1
      %s187 = scalar_select %p186, %s18, 1
      %p188 = scmp.lt.s32.totalorder %s19, 0
      %s189 = scalar_select %p188, %s19, 0
      %s190 = smul.addr %s187, 54
      %s191 = sadd.s32 %s189, %s190
      %s192 = smul.addr %s191, 4
      %s193 = scalar_lea.vmem %s0, %s192
      %p194 = scmp.lt.s32.totalorder %s18, 1
      %s195 = scalar_select %p194, %s18, 1
      %p196 = scmp.lt.s32.totalorder %s19, 0
      %s197 = scalar_select %p196, %s19, 0
      %s198 = smul.addr %s195, 2
      %s199 = sadd.s32 %s197, %s198
      %s200 = smul.addr %s199, 8
      %s201 = scalar_lea.vmem %s3, %s200
      %v203 = vld [vmem:[%s1] sm:$0xff]
      %v204 = vld [vmem:[%s1 + $0x8] sm:$0xff]
      %v205 = vld [vmem:[%s1 + $0x10] sm:$0xff]
      %v206 = vld [vmem:[%s1 + $0x18] sm:$0xff]
      %v207 = vld [vmem:[%s193] sm:$0xf]
      %v208 = vld [vmem:[%s193 + $0x4] sm:$0xf]
      %v209 = vld [vmem:[%s193 + $0x8] sm:$0xf]
      %v210 = vld [vmem:[%s193 + $0xc] sm:$0xf]
      %v211 = vld [vmem:[%s193 + $0x10] sm:$0xf]
      %v212 = vld [vmem:[%s193 + $0x14] sm:$0xf]
      %v213 = vld [vmem:[%s193 + $0x18] sm:$0xf]
      %v214 = vld [vmem:[%s193 + $0x1c] sm:$0xf]
      %v215 = vld [vmem:[%s193 + $0x20] sm:$0xf]
      %v216 = vld [vmem:[%s193 + $0x24] sm:$0xf]
      %v217 = vld [vmem:[%s193 + $0x28] sm:$0xf]
      %v218 = vld [vmem:[%s193 + $0x2c] sm:$0xf]
      %v219 = vld [vmem:[%s193 + $0x30] sm:$0xf]
      %v220 = vld [vmem:[%s193 + $0x34] sm:$0xf]
      %v221 = vld [vmem:[%s193 + $0x38] sm:$0xf]
      %v222 = vld [vmem:[%s193 + $0x3c] sm:$0xf]
      %v223 = vld [vmem:[%s193 + $0x40] sm:$0xf]
      %v224 = vld [vmem:[%s193 + $0x44] sm:$0xf]
      %v225 = vld [vmem:[%s193 + $0x48] sm:$0xf]
      %v226 = vld [vmem:[%s193 + $0x4c] sm:$0xf]
      %v227 = vld [vmem:[%s193 + $0x50] sm:$0xf]
      %v228 = vld [vmem:[%s193 + $0x54] sm:$0xf]
      %v229 = vld [vmem:[%s193 + $0x58] sm:$0xf]
      %v230 = vld [vmem:[%s193 + $0x5c] sm:$0xf]
      %v231 = vld [vmem:[%s193 + $0x60] sm:$0xf]
      %v232 = vld [vmem:[%s193 + $0x64] sm:$0xf]
      %v233 = vld [vmem:[%s193 + $0x68] sm:$0xf]
      %v234 = vld [vmem:[%s193 + $0x6c] sm:$0xf]
      %v235 = vld [vmem:[%s193 + $0x70] sm:$0xf]
      %v236 = vld [vmem:[%s193 + $0x74] sm:$0xf]
      %v237 = vld [vmem:[%s193 + $0x78] sm:$0xf]
      %v238 = vld [vmem:[%s193 + $0x7c] sm:$0xf]
      %v239 = vld [vmem:[%s193 + $0x80] sm:$0xf]
      %v240 = vld [vmem:[%s193 + $0x84] sm:$0xf]
      %v241 = vld [vmem:[%s193 + $0x88] sm:$0xf]
      %v242 = vld [vmem:[%s193 + $0x8c] sm:$0xf]
      %v243 = vld [vmem:[%s193 + $0x90] sm:$0xf]
      %v244 = vld [vmem:[%s193 + $0x94] sm:$0xf]
      %v245 = vld [vmem:[%s193 + $0x98] sm:$0xf]
      %v246 = vld [vmem:[%s193 + $0x9c] sm:$0xf]
      %v247 = vld [vmem:[%s193 + $0xa0] sm:$0xf]
      %v248 = vld [vmem:[%s193 + $0xa4] sm:$0xf]
      %v249 = vld [vmem:[%s193 + $0xa8] sm:$0xf]
      %v250 = vld [vmem:[%s193 + $0xac] sm:$0xf]
      %v251 = vld [vmem:[%s193 + $0xb0] sm:$0xf]
      %v252 = vld [vmem:[%s193 + $0xb4] sm:$0xf]
      %v253 = vld [vmem:[%s193 + $0xb8] sm:$0xf]
      %v254 = vld [vmem:[%s193 + $0xbc] sm:$0xf]
      %v255 = vld [vmem:[%s193 + $0xc0] sm:$0xf]
      %v256 = vld [vmem:[%s193 + $0xc4] sm:$0xf]
      %v257 = vld [vmem:[%s193 + $0xc8] sm:$0xf]
      %v258 = vld [vmem:[%s193 + $0xcc] sm:$0xf]
      %v259 = vld [vmem:[%s193 + $0xd0] sm:$0xf]
      %v260 = vld [vmem:[%s193 + $0xd4] sm:$0xf]
      %v261 = vld [vmem:[%s2] sm:$0xff]
      %v262 = vld [vmem:[%s2 + $0x8] sm:$0xff]
      %264 = vset.pattern.permute.xlu0 0
      %265 = vperm.xlu0 %264, %v261
      %v266 = vpop.permute.xlu0 %265
      %269 = vset.pattern.permute.xlu0 0
      %270 = vperm.xlu0 %269, %v262
      %v271 = vpop.permute.xlu0 %270
      %v277 = vunpack.c.l.b16 %v203
      %v278 = vunpack.c.h.b16 %v203
      %v279 = vunpack.c.l.b16 %v204
      %v280 = vunpack.c.h.b16 %v204
      %v281 = vunpack.c.l.b16 %v205
      %v282 = vunpack.c.h.b16 %v205
      %v283 = vunpack.c.l.b16 %v206
      %v284 = vunpack.c.h.b16 %v206
      %v285 = vpack.c.b16 %v281, %v277
      %v286 = vpack.c.b16 %v282, %v278
      %v287 = vpack.c.b16 %v283, %v279
      %v288 = vpack.c.b16 %v284, %v280
      %v346 = vunpack.c.l.b16 %v207
      %v347 = vunpack.c.l.b16 %v208
      %v348 = vunpack.c.l.b16 %v209
      %v349 = vunpack.c.l.b16 %v210
      %v350 = vunpack.c.l.b16 %v211
      %v351 = vunpack.c.l.b16 %v212
      %v352 = vunpack.c.l.b16 %v213
      %v353 = vunpack.c.l.b16 %v214
      %v354 = vunpack.c.l.b16 %v215
      %v355 = vunpack.c.l.b16 %v216
      %v356 = vunpack.c.l.b16 %v217
      %v357 = vunpack.c.l.b16 %v218
      %v358 = vunpack.c.l.b16 %v219
      %v359 = vunpack.c.l.b16 %v220
      %v360 = vunpack.c.l.b16 %v221
      %v361 = vunpack.c.l.b16 %v222
      %v362 = vunpack.c.l.b16 %v223
      %v363 = vunpack.c.l.b16 %v224
      %v364 = vunpack.c.l.b16 %v225
      %v365 = vunpack.c.l.b16 %v226
      %v366 = vunpack.c.l.b16 %v227
      %v367 = vunpack.c.l.b16 %v228
      %v368 = vunpack.c.l.b16 %v229
      %v369 = vunpack.c.l.b16 %v230
      %v370 = vunpack.c.l.b16 %v231
      %v371 = vunpack.c.l.b16 %v232
      %v372 = vunpack.c.l.b16 %v233
      %v373 = vunpack.c.l.b16 %v234
      %v374 = vunpack.c.l.b16 %v235
      %v375 = vunpack.c.l.b16 %v236
      %v376 = vunpack.c.l.b16 %v237
      %v377 = vunpack.c.l.b16 %v238
      %v378 = vunpack.c.l.b16 %v239
      %v379 = vunpack.c.l.b16 %v240
      %v380 = vunpack.c.l.b16 %v241
      %v381 = vunpack.c.l.b16 %v242
      %v382 = vunpack.c.l.b16 %v243
      %v383 = vunpack.c.l.b16 %v244
      %v384 = vunpack.c.l.b16 %v245
      %v385 = vunpack.c.l.b16 %v246
      %v386 = vunpack.c.l.b16 %v247
      %v387 = vunpack.c.l.b16 %v248
      %v388 = vunpack.c.l.b16 %v249
      %v389 = vunpack.c.l.b16 %v250
      %v390 = vunpack.c.l.b16 %v251
      %v391 = vunpack.c.l.b16 %v252
      %v392 = vunpack.c.l.b16 %v253
      %v393 = vunpack.c.l.b16 %v254
      %v394 = vunpack.c.l.b16 %v255
      %v395 = vunpack.c.l.b16 %v256
      %v396 = vunpack.c.l.b16 %v257
      %v397 = vunpack.c.l.b16 %v258
      %v398 = vunpack.c.l.b16 %v259
      %v399 = vunpack.c.l.b16 %v260
      %v400 = vpack.c.b16 %v347, %v346
      %v401 = vpack.c.b16 %v349, %v348
      %v402 = vpack.c.b16 %v351, %v350
      %v403 = vpack.c.b16 %v353, %v352
      %v404 = vpack.c.b16 %v355, %v354
      %v405 = vpack.c.b16 %v357, %v356
      %v406 = vpack.c.b16 %v359, %v358
      %v407 = vpack.c.b16 %v361, %v360
      %v408 = vpack.c.b16 %v363, %v362
      %v409 = vpack.c.b16 %v365, %v364
      %v410 = vpack.c.b16 %v367, %v366
      %v411 = vpack.c.b16 %v369, %v368
      %v412 = vpack.c.b16 %v371, %v370
      %v413 = vpack.c.b16 %v373, %v372
      %v414 = vpack.c.b16 %v375, %v374
      %v415 = vpack.c.b16 %v377, %v376
      %v416 = vpack.c.b16 %v379, %v378
      %v417 = vpack.c.b16 %v381, %v380
      %v418 = vpack.c.b16 %v383, %v382
      %v419 = vpack.c.b16 %v385, %v384
      %v420 = vpack.c.b16 %v387, %v386
      %v421 = vpack.c.b16 %v389, %v388
      %v422 = vpack.c.b16 %v391, %v390
      %v423 = vpack.c.b16 %v393, %v392
      %v424 = vpack.c.b16 %v395, %v394
      %v425 = vpack.c.b16 %v397, %v396
      %v426 = vpack.c.b16 %v399, %v398
      %vm454 = vcmask 392192
      %v456 = vsel %vm454, %v288, 0
      %458 = vmatprep.subr.bf16.mxu0 0
      %459 = vmatpush1.bf16.msra.mxu0 %v400
      %460 = vmatprep.subr.bf16.mxu0 0
      %461 = vmatpush1.bf16.msra.mxu0 %v401
      %462 = vmatprep.subr.bf16.mxu0 0
      %463 = vmatpush1.bf16.msra.mxu0 %v402
      %464 = vmatprep.subr.bf16.mxu0 0
      %465 = vmatpush1.bf16.msra.mxu0 %v403
      %466 = vmatprep.subr.bf16.mxu0 0
      %467 = vmatpush1.bf16.msra.mxu0 %v404
      %468 = vmatprep.subr.bf16.mxu0 0
      %469 = vmatpush1.bf16.msra.mxu0 %v405
      %470 = vmatprep.subr.bf16.mxu0 0
      %471 = vmatpush1.bf16.msra.mxu0 %v406
      %472 = vmatprep.subr.bf16.mxu0 0
      %473 = vmatpush1.bf16.msra.mxu0 %v407
      %474 = vmatprep.subr.bf16.mxu0 0
      %475 = vmatpush1.bf16.msra.mxu0 %v408
      %476 = vmatprep.subr.bf16.mxu0 0
      %477 = vmatpush1.bf16.msra.mxu0 %v409
      %478 = vmatprep.subr.bf16.mxu0 0
      %479 = vmatpush1.bf16.msra.mxu0 %v410
      %480 = vmatprep.subr.bf16.mxu0 0
      %481 = vmatpush1.bf16.msra.mxu0 %v411
      %482 = vmatprep.subr.bf16.mxu0 0
      %483 = vmatpush1.bf16.msra.mxu0 %v412
      %484 = vmatprep.subr.bf16.mxu0 0
      %485 = vmatpush1.bf16.msra.mxu0 %v413
      %486 = vmatprep.subr.bf16.mxu0 0
      %487 = vmatpush1.bf16.msra.mxu0 %v414
      %488 = vmatprep.subr.bf16.mxu0 0
      %489 = vmatpush1.bf16.msra.mxu0 %v415
      %490 = vmatprep.mubr.bf16.mxu0 %v286
      %491 = vmatmul.mubr.bf16.gmra.mrb[0].mxu0 %v285
      %v492 = vpop.f32.mrb[0].mxu0
      %v493 = vadd.f32 %v266, %v492
      %v494 = vpop.f32.mrb[0].mxu0
      %v495 = vpop.f32.mrb[0].mxu0
      %v496 = vadd.f32 %v271, %v495
      %v497 = vpop.f32.mrb[0].mxu0
      %498 = vdwg.mxu0
      %499 = vmatprep.subr.bf16.mxu0 0
      %500 = vmatpush1.bf16.msra.mxu0 %v416
      %501 = vmatprep.subr.bf16.mxu0 0
      %502 = vmatpush1.bf16.msra.mxu0 %v417
      %503 = vmatprep.subr.bf16.mxu0 0
      %504 = vmatpush1.bf16.msra.mxu0 %v418
      %505 = vmatprep.subr.bf16.mxu0 0
      %506 = vmatpush1.bf16.msra.mxu0 %v419
      %507 = vmatprep.subr.bf16.mxu0 0
      %508 = vmatpush1.bf16.msra.mxu0 %v420
      %509 = vmatprep.subr.bf16.mxu0 0
      %510 = vmatpush1.bf16.msra.mxu0 %v421
      %511 = vmatprep.subr.bf16.mxu0 0
      %512 = vmatpush1.bf16.msra.mxu0 %v422
      %513 = vmatprep.subr.bf16.mxu0 0
      %514 = vmatpush1.bf16.msra.mxu0 %v423
      %515 = vmatprep.subr.bf16.mxu0 0
      %516 = vmatpush1.bf16.msra.mxu0 %v424
      %517 = vmatprep.subr.bf16.mxu0 0
      %518 = vmatpush1.bf16.msra.mxu0 %v425
      %519 = vmatprep.subr.bf16.mxu0 0
      %520 = vmatpush1.bf16.msra.mxu0 %v426
      %521 = vmatprep.subr.bf16.mxu0 0
      %522 = vmatpush1.bf16.msra.mxu0 0
      %523 = vmatprep.subr.bf16.mxu0 0
      %524 = vmatpush1.bf16.msra.mxu0 0
      %525 = vmatprep.subr.bf16.mxu0 0
      %526 = vmatpush1.bf16.msra.mxu0 0
      %527 = vmatprep.subr.bf16.mxu0 0
      %528 = vmatpush1.bf16.msra.mxu0 0
      %529 = vmatprep.subr.bf16.mxu0 0
      %530 = vmatpush1.bf16.msra.mxu0 0
      %531 = vmatprep.mubr.bf16.mxu0 %v456
      %532 = vmatmul.mubr.bf16.gmra.mrb[0].mxu0 %v287
      %v533 = vpop.f32.mrb[0].mxu0
      %v534 = vadd.f32 %v493, %v533
      %v535 = vpop.f32.mrb[0].mxu0
      %v536 = vpop.f32.mrb[0].mxu0
      %v537 = vadd.f32 %v496, %v536
      %v538 = vpop.f32.mrb[0].mxu0
      %539 = vdwg.mxu0
      %vm540 = vcmask 523264
      %541 = vst.msk [vmem:[%s201] sm:$0xff] %vm540, %v534
      %542 = vst.msk [vmem:[%s201 + $0x8] sm:$0xff] %vm540, %v537
      %p543 = scmp.lt.s32.totalorder %s18, 1
      %s544 = scalar_select %p543, %s18, 1
      %p545 = scmp.lt.s32.totalorder %s19, 0
      %s546 = scalar_select %p545, %s19, 0
      %s547 = smul.addr %s544, 2
      %s548 = sadd.s32 %s546, %s547
      %s549 = smul.addr %s548, 8
      %s550 = scalar_lea.vmem %s3, %s549
      // Predicated region
      $region33: #{hrnet_forward.20} parent=31 // pred_check
        %p551 = pneg %p116
      $region34: #{hrnet_forward.20} parent=31 // pred_check_branch
        %553 = sbr.rel (%p551) target = $region36
      $region35: #{hrnet_forward.20} parent=31 // pred_region
        _
      $region36: #{hrnet_forward.20} parent=31 // pred_fallthru
        _
    $region32: #{hrnet_forward.20} parent=5 // pred_fallthru
      _
    %p554 = scmp.le.s32.totalorder 2, %s9
    // Predicated region
    $region37: #{hrnet_forward.20} parent=5 // pred_check
      %p555 = pneg %p554
    $region38: #{hrnet_forward.20} parent=5 // pred_check_branch
      %557 = sbr.rel (%p555) target = $region40
    $region39: #{hrnet_forward.20} parent=5 // pred_region
      %s558 = ssub.s32 %s9, 2
      // Predicated region
      $region41: #{hrnet_forward.20} parent=39 // pred_check
        %p559 = pneg %p122
      $region42: #{hrnet_forward.20} parent=39 // pred_check_branch
        %561 = sbr.rel (%p559) target = $region44
      $region43: #{hrnet_forward.20} parent=39 // pred_region
        %p562 = scmp.lt.s32.totalorder %s20, 1
        %s563 = scalar_select %p562, %s20, 1
        %p564 = scmp.lt.s32.totalorder %s21, 0
        %s565 = scalar_select %p564, %s21, 0
        %s566 = smul.addr %s563, 2
        %s567 = sadd.s32 %s565, %s566
        %s568 = smul.addr %s567, 8
        %s569 = scalar_lea.vmem %s3, %s568
      $region44: #{hrnet_forward.20} parent=39 // pred_fallthru
        _
    $region40: #{hrnet_forward.20} parent=5 // pred_fallthru
      _
  $region6: #{hrnet_forward.20} parent=0 // loop_footer
    %s13 = sadd.s32 1, %s9
  $region7: #{hrnet_forward.20} parent=0 // loop_footer_branch
    %8 = sbr.rel target = $region3
  $region8: #{hrnet_forward.20} parent=0 // loop_exit
    _

// kernel: hrnet_forward.21
$region0: #{hrnet_forward.21}
  #allocation0 [shape = 'u32[]', space=smem, size = 0x4, offset = 0x4, fixed_abs, tag = 'smem constant byte address 0x4 - core index']
  #allocation1 [shape = 'u32[144,128]{1,0:T(1,128)}', space=vmem, size = 0x12000, scoped, tag = 'internal scratch']
  %s0 = inlined_call_operand.vmem [shape: bf16[2,144,64], index: 0, kind: input, shape index: {}]
  %s1 = inlined_call_operand.vmem [shape: bf16[40,144], index: 1, kind: input, shape index: {}]
  %s2 = inlined_call_operand.vmem [shape: f32[40,1], index: 2, kind: input, shape index: {}]
  %s3 = inlined_call_operand.vmem [shape: f32[2,40,64], index: 3, kind: output, shape index: {}]
  %s4 = sld [smem:[#allocation0]]
  $region45: #{hrnet_forward.21} parent=0
    _
  %s6 = ssub.s32 1, %s4
  %s7 = scalar_select 0, %s6, %s4
  loop: start=0, step=1, limit=4
  $region2: #{hrnet_forward.21} parent=0 // loop_pre_header
    _
  $region3: #{hrnet_forward.21} parent=0 // loop_header
    %s9 = sphi 0, %s13
    %p10 = scmp.ge.s32.totalorder %s9, 4
    %s16 = sphi 0, %s28
    %s17 = sphi 0, %s24
    %s18 = sphi 0, %s16
    %s19 = sphi 0, %s17
    %s20 = sphi 0, %s18
    %s21 = sphi 0, %s19
    %s33 = sphi 0, %s35
    %s36 = sphi 0, %s33
    %s37 = sphi 0, %s36
    %s53 = sphi 0, %s37
    %s57 = sphi 0, %s57
    %s59 = sphi 0, %s57
    %s60 = sphi 0, %s59
    %s74 = sphi 0, %s60
    %s78 = sphi 0, %s78
    %s80 = sphi 0, %s78
    %s81 = sphi 0, %s80
    %s95 = sphi 0, %s81
    %s103 = sphi 0, %s105
    %s106 = sphi 0, %s103
    %s107 = sphi 0, %s106
    %s123 = sphi 0, %s107
  $region4: #{hrnet_forward.21} parent=0 // loop_header_branch
    %12 = sbr.rel (%p10) target = $region8
  $region5: #{hrnet_forward.21} parent=0 // loop_body
    %s14 = ssub.s32 %s9, 1
    %s15 = ssub.s32 %s9, 2
    %s22 = sadd.s32 1, %s17
    %p23 = scmp.ge.s32.totalorder %s22, 1
    %s24 = scalar_select %p23, 0, %s22
    %s25 = sadd.s32 1, %s16
    %s26 = scalar_select %p23, %s25, %s16
    %p27 = scmp.ge.s32.totalorder %s26, 2
    %s28 = scalar_select %p27, 0, %s26
    %s29 = ssub.s32 %s16, %s28
    %s30 = ssub.s32 %s17, %s24
    %s31 = sor.u32 %s29, %s30
    %p32 = scmp.eq.s32.totalorder %s31, 0
    %s34 = sadd.s32 %s33, 1
    %s35 = scalar_select %p32, %s33, %s34
    %p38 = pneg %p32
    %p39 = scmp.eq.s32.totalorder %s9, 1
    %p40 = por %p38, %p39
    %p41 = scmp.ne.s32.totalorder %s33, %s36
    %p42 = scmp.eq.s32.totalorder %s9, 0
    %p43 = por %p41, %p42
    %p44 = scmp.ne.s32.totalorder %s33, %s36
    %p45 = scmp.eq.s32.totalorder %s14, 1
    %p46 = por %p44, %p45
    %p47 = scmp.ne.s32.totalorder %s36, %s37
    %p48 = scmp.eq.s32.totalorder %s14, 0
    %p49 = por %p47, %p48
    %p50 = scmp.ne.s32.totalorder %s36, %s37
    %p51 = scmp.eq.s32.totalorder %s15, 1
    %p52 = por %p50, %p51
    %p54 = scmp.ne.s32.totalorder %s37, %s53
    %p55 = scmp.eq.s32.totalorder %s15, 0
    %p56 = por %p54, %p55
    %s58 = sadd.s32 %s57, 1
    %p61 = scmp.eq.s32.totalorder %s9, 1
    %p62 = scmp.ne.s32.totalorder %s57, %s59
    %p63 = scmp.eq.s32.totalorder %s9, 0
    %p64 = por %p62, %p63
    %p65 = scmp.ne.s32.totalorder %s57, %s59
    %p66 = scmp.eq.s32.totalorder %s14, 1
    %p67 = por %p65, %p66
    %p68 = scmp.ne.s32.totalorder %s59, %s60
    %p69 = scmp.eq.s32.totalorder %s14, 0
    %p70 = por %p68, %p69
    %p71 = scmp.ne.s32.totalorder %s59, %s60
    %p72 = scmp.eq.s32.totalorder %s15, 1
    %p73 = por %p71, %p72
    %p75 = scmp.ne.s32.totalorder %s60, %s74
    %p76 = scmp.eq.s32.totalorder %s15, 0
    %p77 = por %p75, %p76
    %s79 = sadd.s32 %s78, 1
    %p82 = scmp.eq.s32.totalorder %s9, 1
    %p83 = scmp.ne.s32.totalorder %s78, %s80
    %p84 = scmp.eq.s32.totalorder %s9, 0
    %p85 = por %p83, %p84
    %p86 = scmp.ne.s32.totalorder %s78, %s80
    %p87 = scmp.eq.s32.totalorder %s14, 1
    %p88 = por %p86, %p87
    %p89 = scmp.ne.s32.totalorder %s80, %s81
    %p90 = scmp.eq.s32.totalorder %s14, 0
    %p91 = por %p89, %p90
    %p92 = scmp.ne.s32.totalorder %s80, %s81
    %p93 = scmp.eq.s32.totalorder %s15, 1
    %p94 = por %p92, %p93
    %p96 = scmp.ne.s32.totalorder %s81, %s95
    %p97 = scmp.eq.s32.totalorder %s15, 0
    %p98 = por %p96, %p97
    %s99 = ssub.s32 %s16, %s28
    %s100 = ssub.s32 %s17, %s24
    %s101 = sor.u32 %s99, %s100
    %p102 = scmp.eq.s32.totalorder %s101, 0
    %s104 = sadd.s32 %s103, 1
    %s105 = scalar_select %p102, %s103, %s104
    %p108 = pneg %p102
    %p109 = scmp.eq.s32.totalorder %s9, 1
    %p110 = por %p108, %p109
    %p111 = scmp.ne.s32.totalorder %s103, %s106
    %p112 = scmp.eq.s32.totalorder %s9, 0
    %p113 = por %p111, %p112
    %p114 = scmp.ne.s32.totalorder %s103, %s106
    %p115 = scmp.eq.s32.totalorder %s14, 1
    %p116 = por %p114, %p115
    %p117 = scmp.ne.s32.totalorder %s106, %s107
    %p118 = scmp.eq.s32.totalorder %s14, 0
    %p119 = por %p117, %p118
    %p120 = scmp.ne.s32.totalorder %s106, %s107
    %p121 = scmp.eq.s32.totalorder %s15, 1
    %p122 = por %p120, %p121
    %p124 = scmp.ne.s32.totalorder %s107, %s123
    %p125 = scmp.eq.s32.totalorder %s15, 0
    %p126 = por %p124, %p125
    %p127 = scmp.le.s32.totalorder 1, %s9
    %p128 = scmp.lt.s32.totalorder %s9, 3
    %p129 = pnand %p127, %p128
    %p130 = pneg %p129
    // Predicated region
    $region9: #{hrnet_forward.21} parent=5 // pred_check
      _
    $region10: #{hrnet_forward.21} parent=5 // pred_check_branch
      %132 = sbr.rel (%p129) target = $region12
    $region11: #{hrnet_forward.21} parent=5 // pred_region
      %s133 = ssub.s32 %s9, 1
      // Predicated region
      $region13: #{hrnet_forward.21} parent=11 // pred_check
        %p134 = pneg %p70
      $region14: #{hrnet_forward.21} parent=11 // pred_check_branch
        %136 = sbr.rel (%p134) target = $region16
      $region15: #{hrnet_forward.21} parent=11 // pred_region
        _
      $region16: #{hrnet_forward.21} parent=11 // pred_fallthru
        _
      // Predicated region
      $region17: #{hrnet_forward.21} parent=11 // pred_check
        %p137 = pneg %p91
      $region18: #{hrnet_forward.21} parent=11 // pred_check_branch
        %139 = sbr.rel (%p137) target = $region20
      $region19: #{hrnet_forward.21} parent=11 // pred_region
        _
      $region20: #{hrnet_forward.21} parent=11 // pred_fallthru
        _
    $region12: #{hrnet_forward.21} parent=5 // pred_fallthru
      _
    %p140 = scmp.lt.s32.totalorder %s9, 2
    // Predicated region
    $region21: #{hrnet_forward.21} parent=5 // pred_check
      %p141 = pneg %p140
    $region22: #{hrnet_forward.21} parent=5 // pred_check_branch
      %143 = sbr.rel (%p141) target = $region24
    $region23: #{hrnet_forward.21} parent=5 // pred_region
      // Predicated region
      $region25: #{hrnet_forward.21} parent=23 // pred_check
        %p144 = pneg %p43
      $region26: #{hrnet_forward.21} parent=23 // pred_check_branch
        %146 = sbr.rel (%p144) target = $region28
      $region27: #{hrnet_forward.21} parent=23 // pred_region
        %p147 = scmp.lt.s32.totalorder %s16, 1
        %s148 = scalar_select %p147, %s16, 1
        %p149 = scmp.lt.s32.totalorder %s17, 0
        %s150 = scalar_select %p149, %s17, 0
        %s151 = smul.addr %s148, 18
        %s152 = sadd.s32 %s150, %s151
        %s153 = smul.addr %s152, 4
        %s154 = scalar_lea.vmem %s0, %s153
      $region28: #{hrnet_forward.21} parent=23 // pred_fallthru
        _
    $region24: #{hrnet_forward.21} parent=5 // pred_fallthru
      _
    %p155 = scmp.le.s32.totalorder 1, %s9
    %p156 = scmp.lt.s32.totalorder %s9, 3
    %p157 = pnand %p155, %p156
    %p158 = pneg %p157
    // Predicated region
    $region29: #{hrnet_forward.21} parent=5 // pred_check
      _
    $region30: #{hrnet_forward.21} parent=5 // pred_check_branch
      %160 = sbr.rel (%p157) target = $region32
    $region31: #{hrnet_forward.21} parent=5 // pred_region
      %s161 = ssub.s32 %s9, 1
      %p162 = scmp.lt.s32.totalorder %s18, 1
      %s163 = scalar_select %p162, %s18, 1
      %p164 = scmp.lt.s32.totalorder %s19, 0
      %s165 = scalar_select %p164, %s19, 0
      %s166 = smul.addr %s163, 18
      %s167 = sadd.s32 %s165, %s166
      %s168 = smul.addr %s167, 4
      %s169 = scalar_lea.vmem %s0, %s168
      %p170 = pneg %p49
      %p171 = pneg %p46
      %p172 = pneg %p70
      %p173 = pneg %p67
      %p174 = pneg %p91
      %p175 = pneg %p88
      %p176 = pneg %p119
      %p177 = pneg %p116
      %p178 = scmp.lt.s32.totalorder %s18, 1
      %s179 = scalar_select %p178, %s18, 1
      %p180 = scmp.lt.s32.totalorder %s19, 0
      %s181 = scalar_select %p180, %s19, 0
      %s182 = smul.addr %s179, 5
      %s183 = sadd.s32 %s181, %s182
      %s184 = smul.addr %s183, 8
      %s185 = scalar_lea.vmem %s3, %s184
      %p186 = scmp.lt.s32.totalorder %s18, 1
      %s187 = scalar_select %p186, %s18, 1
      %p188 = scmp.lt.s32.totalorder %s19, 0
      %s189 = scalar_select %p188, %s19, 0
      %s190 = smul.addr %s187, 18
      %s191 = sadd.s32 %s189, %s190
      %s192 = smul.addr %s191, 4
      %s193 = scalar_lea.vmem %s0, %s192
      %p194 = scmp.lt.s32.totalorder %s18, 1
      %s195 = scalar_select %p194, %s18, 1
      %p196 = scmp.lt.s32.totalorder %s19, 0
      %s197 = scalar_select %p196, %s19, 0
      %s198 = smul.addr %s195, 5
      %s199 = sadd.s32 %s197, %s198
      %s200 = smul.addr %s199, 8
      %s201 = scalar_lea.vmem %s3, %s200
      %v203 = vld [vmem:[%s1] sm:$0xff]
      %v204 = vld [vmem:[%s1 + $0x8] sm:$0xff]
      %v205 = vld [vmem:[%s1 + $0x10] sm:$0xff]
      %v206 = vld [vmem:[%s1 + $0x18] sm:$0xff]
      %v207 = vld [vmem:[%s1 + $0x20] sm:$0xff]
      %v208 = vld [vmem:[%s193] sm:$0xf]
      %v209 = vld [vmem:[%s193 + $0x4] sm:$0xf]
      %v210 = vld [vmem:[%s193 + $0x8] sm:$0xf]
      %v211 = vld [vmem:[%s193 + $0xc] sm:$0xf]
      %v212 = vld [vmem:[%s193 + $0x10] sm:$0xf]
      %v213 = vld [vmem:[%s193 + $0x14] sm:$0xf]
      %v214 = vld [vmem:[%s193 + $0x18] sm:$0xf]
      %v215 = vld [vmem:[%s193 + $0x1c] sm:$0xf]
      %v216 = vld [vmem:[%s193 + $0x20] sm:$0xf]
      %v217 = vld [vmem:[%s193 + $0x24] sm:$0xf]
      %v218 = vld [vmem:[%s193 + $0x28] sm:$0xf]
      %v219 = vld [vmem:[%s193 + $0x2c] sm:$0xf]
      %v220 = vld [vmem:[%s193 + $0x30] sm:$0xf]
      %v221 = vld [vmem:[%s193 + $0x34] sm:$0xf]
      %v222 = vld [vmem:[%s193 + $0x38] sm:$0xf]
      %v223 = vld [vmem:[%s193 + $0x3c] sm:$0xf]
      %v224 = vld [vmem:[%s193 + $0x40] sm:$0xf]
      %v225 = vld [vmem:[%s193 + $0x44] sm:$0xf]
      %v226 = vld [vmem:[%s2] sm:$0xff]
      %v227 = vld [vmem:[%s2 + $0x8] sm:$0xff]
      %v228 = vld [vmem:[%s2 + $0x10] sm:$0xff]
      %v229 = vld [vmem:[%s2 + $0x18] sm:$0xff]
      %v230 = vld [vmem:[%s2 + $0x20] sm:$0xff]
      %232 = vset.pattern.permute.xlu0 0
      %233 = vperm.xlu0 %232, %v226
      %v234 = vpop.permute.xlu0 %233
      %237 = vset.pattern.permute.xlu0 0
      %238 = vperm.xlu0 %237, %v227
      %v239 = vpop.permute.xlu0 %238
      %242 = vset.pattern.permute.xlu0 0
      %243 = vperm.xlu0 %242, %v228
      %v244 = vpop.permute.xlu0 %243
      %247 = vset.pattern.permute.xlu0 0
      %248 = vperm.xlu0 %247, %v229
      %v249 = vpop.permute.xlu0 %248
      %252 = vset.pattern.permute.xlu0 0
      %253 = vperm.xlu0 %252, %v230
      %v254 = vpop.permute.xlu0 %253
      %v261 = vunpack.c.l.b16 %v203
      %v262 = vunpack.c.h.b16 %v203
      %v263 = vunpack.c.l.b16 %v204
      %v264 = vunpack.c.h.b16 %v204
      %v265 = vunpack.c.l.b16 %v205
      %v266 = vunpack.c.h.b16 %v205
      %v267 = vunpack.c.l.b16 %v206
      %v268 = vunpack.c.h.b16 %v206
      %v269 = vunpack.c.l.b16 %v207
      %v270 = vunpack.c.h.b16 %v207
      %v271 = vpack.c.b16 %v263, %v261
      %v272 = vpack.c.b16 %v264, %v262
      %v273 = vpack.c.b16 %v267, %v265
      %v274 = vpack.c.b16 %v268, %v266
      %v275 = vpack.c.b16 %v269, %v269
      %v276 = vpack.c.b16 %v270, %v270
      %v298 = vunpack.c.l.b16 %v208
      %v299 = vunpack.c.l.b16 %v209
      %v300 = vunpack.c.l.b16 %v210
      %v301 = vunpack.c.l.b16 %v211
      %v302 = vunpack.c.l.b16 %v212
      %v303 = vunpack.c.l.b16 %v213
      %v304 = vunpack.c.l.b16 %v214
      %v305 = vunpack.c.l.b16 %v215
      %v306 = vunpack.c.l.b16 %v216
      %v307 = vunpack.c.l.b16 %v217
      %v308 = vunpack.c.l.b16 %v218
      %v309 = vunpack.c.l.b16 %v219
      %v310 = vunpack.c.l.b16 %v220
      %v311 = vunpack.c.l.b16 %v221
      %v312 = vunpack.c.l.b16 %v222
      %v313 = vunpack.c.l.b16 %v223
      %v314 = vunpack.c.l.b16 %v224
      %v315 = vunpack.c.l.b16 %v225
      %v316 = vpack.c.b16 %v299, %v298
      %v317 = vpack.c.b16 %v301, %v300
      %v318 = vpack.c.b16 %v303, %v302
      %v319 = vpack.c.b16 %v305, %v304
      %v320 = vpack.c.b16 %v307, %v306
      %v321 = vpack.c.b16 %v309, %v308
      %v322 = vpack.c.b16 %v311, %v310
      %v323 = vpack.c.b16 %v313, %v312
      %v324 = vpack.c.b16 %v315, %v314
      %vm334 = vcmask 130048
      %v336 = vsel %vm334, %v272, 0
      %v339 = vsel %vm334, %v274, 0
      %v342 = vsel %vm334, %v276, 0
      %344 = vmatprep.subr.bf16.mxu0 0
      %345 = vmatpush1.bf16.msra.mxu0 %v316
      %346 = vmatprep.subr.bf16.mxu0 0
      %347 = vmatpush1.bf16.msra.mxu0 %v317
      %348 = vmatprep.subr.bf16.mxu0 0
      %349 = vmatpush1.bf16.msra.mxu0 %v318
      %350 = vmatprep.subr.bf16.mxu0 0
      %351 = vmatpush1.bf16.msra.mxu0 %v319
      %352 = vmatprep.subr.bf16.mxu0 0
      %353 = vmatpush1.bf16.msra.mxu0 %v320
      %354 = vmatprep.subr.bf16.mxu0 0
      %355 = vmatpush1.bf16.msra.mxu0 %v321
      %356 = vmatprep.subr.bf16.mxu0 0
      %357 = vmatpush1.bf16.msra.mxu0 %v322
      %358 = vmatprep.subr.bf16.mxu0 0
      %359 = vmatpush1.bf16.msra.mxu0 %v323
      %360 = vmatprep.subr.bf16.mxu0 0
      %361 = vmatpush1.bf16.msra.mxu0 %v324
      %362 = vmatprep.subr.bf16.mxu0 0
      %363 = vmatpush1.bf16.msra.mxu0 0
      %364 = vmatprep.subr.bf16.mxu0 0
      %365 = vmatpush1.bf16.msra.mxu0 0
      %366 = vmatprep.subr.bf16.mxu0 0
      %367 = vmatpush1.bf16.msra.mxu0 0
      %368 = vmatprep.subr.bf16.mxu0 0
      %369 = vmatpush1.bf16.msra.mxu0 0
      %370 = vmatprep.subr.bf16.mxu0 0
      %371 = vmatpush1.bf16.msra.mxu0 0
      %372 = vmatprep.subr.bf16.mxu0 0
      %373 = vmatpush1.bf16.msra.mxu0 0
      %374 = vmatprep.subr.bf16.mxu0 0
      %375 = vmatpush1.bf16.msra.mxu0 0
      %376 = vmatprep.mubr.bf16.mxu0 %v336
      %377 = vmatmul.mubr.bf16.gmra.mrb[0].mxu0 %v271
      %v378 = vpop.f32.mrb[0].mxu0
      %v379 = vadd.f32 %v234, %v378
      %v380 = vpop.f32.mrb[0].mxu0
      %v381 = vpop.f32.mrb[0].mxu0
      %v382 = vadd.f32 %v239, %v381
      %v383 = vpop.f32.mrb[0].mxu0
      %384 = vmatprep.mubr.bf16.mxu0 %v339
      %385 = vmatmul.mubr.bf16.gmra.mrb[0].mxu0 %v273
      %v386 = vpop.f32.mrb[0].mxu0
      %v387 = vadd.f32 %v244, %v386
      %v388 = vpop.f32.mrb[0].mxu0
      %v389 = vpop.f32.mrb[0].mxu0
      %v390 = vadd.f32 %v249, %v389
      %v391 = vpop.f32.mrb[0].mxu0
      %392 = vmatprep.mubr.bf16.mxu0 %v342
      %393 = vmatmul.mubr.bf16.gmra.mrb[0].mxu0 %v275
      %v394 = vpop.f32.mrb[0].mxu0
      %v395 = vadd.f32 %v254, %v394
      %v396 = vpop.f32.mrb[0].mxu0
      %v397 = vpop.f32.mrb[0].mxu0
      %v398 = vpop.f32.mrb[0].mxu0
      %399 = vdwg.mxu0
      %vm400 = vcmask 523264
      %401 = vst.msk [vmem:[%s201] sm:$0xff] %vm400, %v379
      %402 = vst.msk [vmem:[%s201 + $0x8] sm:$0xff] %vm400, %v382
      %403 = vst.msk [vmem:[%s201 + $0x10] sm:$0xff] %vm400, %v387
      %404 = vst.msk [vmem:[%s201 + $0x18] sm:$0xff] %vm400, %v390
      %405 = vst.msk [vmem:[%s201 + $0x20] sm:$0xff] %vm400, %v395
      %p406 = scmp.lt.s32.totalorder %s18, 1
      %s407 = scalar_select %p406, %s18, 1
      %p408 = scmp.lt.s32.totalorder %s19, 0
      %s409 = scalar_select %p408, %s19, 0
      %s410 = smul.addr %s407, 5
      %s411 = sadd.s32 %s409, %s410
      %s412 = smul.addr %s411, 8
      %s413 = scalar_lea.vmem %s3, %s412
      // Predicated region
      $region33: #{hrnet_forward.21} parent=31 // pred_check
        %p414 = pneg %p116
      $region34: #{hrnet_forward.21} parent=31 // pred_check_branch
        %416 = sbr.rel (%p414) target = $region36
      $region35: #{hrnet_forward.21} parent=31 // pred_region
        _
      $region36: #{hrnet_forward.21} parent=31 // pred_fallthru
        _
    $region32: #{hrnet_forward.21} parent=5 // pred_fallthru
      _
    %p417 = scmp.le.s32.totalorder 2, %s9
    // Predicated region
    $region37: #{hrnet_forward.21} parent=5 // pred_check
      %p418 = pneg %p417
    $region38: #{hrnet_forward.21} parent=5 // pred_check_branch
      %420 = sbr.rel (%p418) target = $region40
    $region39: #{hrnet_forward.21} parent=5 // pred_region
      %s421 = ssub.s32 %s9, 2
      // Predicated region
      $region41: #{hrnet_forward.21} parent=39 // pred_check
        %p422 = pneg %p122
      $region42: #{hrnet_forward.21} parent=39 // pred_check_branch
        %424 = sbr.rel (%p422) target = $region44
      $region43: #{hrnet_forward.21} parent=39 // pred_region
        %p425 = scmp.lt.s32.totalorder %s20, 1
        %s426 = scalar_select %p425, %s20, 1
        %p427 = scmp.lt.s32.totalorder %s21, 0
        %s428 = scalar_select %p427, %s21, 0
        %s429 = smul.addr %s426, 5
        %s430 = sadd.s32 %s428, %s429
        %s431 = smul.addr %s430, 8
        %s432 = scalar_lea.vmem %s3, %s431
      $region44: #{hrnet_forward.21} parent=39 // pred_fallthru
        _
    $region40: #{hrnet_forward.21} parent=5 // pred_fallthru
      _
  $region6: #{hrnet_forward.21} parent=0 // loop_footer
    %s13 = sadd.s32 1, %s9
  $region7: #{hrnet_forward.21} parent=0 // loop_footer_branch
    %8 = sbr.rel target = $region3
  $region8: #{hrnet_forward.21} parent=0 // loop_exit
    _

// kernel: hrnet_forward.23
$region0: #{hrnet_forward.23}
  #allocation0 [shape = 'u32[]', space=smem, size = 0x4, offset = 0x4, fixed_abs, tag = 'smem constant byte address 0x4 - core index']
  #allocation1 [shape = 'u32[144,128]{1,0:T(1,128)}', space=vmem, size = 0x12000, scoped, tag = 'internal scratch']
  %s0 = inlined_call_operand.vmem [shape: bf16[2,16,64], index: 0, kind: input, shape index: {}]
  %s1 = inlined_call_operand.vmem [shape: bf16[8,16], index: 1, kind: input, shape index: {}]
  %s2 = inlined_call_operand.vmem [shape: f32[8,1], index: 2, kind: input, shape index: {}]
  %s3 = inlined_call_operand.vmem [shape: f32[2,8,64], index: 3, kind: output, shape index: {}]
  %s4 = sld [smem:[#allocation0]]
  $region45: #{hrnet_forward.23} parent=0
    _
  %s6 = ssub.s32 1, %s4
  %s7 = scalar_select 0, %s6, %s4
  loop: start=0, step=1, limit=4
  $region2: #{hrnet_forward.23} parent=0 // loop_pre_header
    _
  $region3: #{hrnet_forward.23} parent=0 // loop_header
    %s9 = sphi 0, %s13
    %p10 = scmp.ge.s32.totalorder %s9, 4
    %s16 = sphi 0, %s28
    %s17 = sphi 0, %s24
    %s18 = sphi 0, %s16
    %s19 = sphi 0, %s17
    %s20 = sphi 0, %s18
    %s21 = sphi 0, %s19
    %s33 = sphi 0, %s35
    %s36 = sphi 0, %s33
    %s37 = sphi 0, %s36
    %s53 = sphi 0, %s37
    %s57 = sphi 0, %s57
    %s59 = sphi 0, %s57
    %s60 = sphi 0, %s59
    %s74 = sphi 0, %s60
    %s78 = sphi 0, %s78
    %s80 = sphi 0, %s78
    %s81 = sphi 0, %s80
    %s95 = sphi 0, %s81
    %s103 = sphi 0, %s105
    %s106 = sphi 0, %s103
    %s107 = sphi 0, %s106
    %s123 = sphi 0, %s107
  $region4: #{hrnet_forward.23} parent=0 // loop_header_branch
    %12 = sbr.rel (%p10) target = $region8
  $region5: #{hrnet_forward.23} parent=0 // loop_body
    %s14 = ssub.s32 %s9, 1
    %s15 = ssub.s32 %s9, 2
    %s22 = sadd.s32 1, %s17
    %p23 = scmp.ge.s32.totalorder %s22, 1
    %s24 = scalar_select %p23, 0, %s22
    %s25 = sadd.s32 1, %s16
    %s26 = scalar_select %p23, %s25, %s16
    %p27 = scmp.ge.s32.totalorder %s26, 2
    %s28 = scalar_select %p27, 0, %s26
    %s29 = ssub.s32 %s16, %s28
    %s30 = ssub.s32 %s17, %s24
    %s31 = sor.u32 %s29, %s30
    %p32 = scmp.eq.s32.totalorder %s31, 0
    %s34 = sadd.s32 %s33, 1
    %s35 = scalar_select %p32, %s33, %s34
    %p38 = pneg %p32
    %p39 = scmp.eq.s32.totalorder %s9, 1
    %p40 = por %p38, %p39
    %p41 = scmp.ne.s32.totalorder %s33, %s36
    %p42 = scmp.eq.s32.totalorder %s9, 0
    %p43 = por %p41, %p42
    %p44 = scmp.ne.s32.totalorder %s33, %s36
    %p45 = scmp.eq.s32.totalorder %s14, 1
    %p46 = por %p44, %p45
    %p47 = scmp.ne.s32.totalorder %s36, %s37
    %p48 = scmp.eq.s32.totalorder %s14, 0
    %p49 = por %p47, %p48
    %p50 = scmp.ne.s32.totalorder %s36, %s37
    %p51 = scmp.eq.s32.totalorder %s15, 1
    %p52 = por %p50, %p51
    %p54 = scmp.ne.s32.totalorder %s37, %s53
    %p55 = scmp.eq.s32.totalorder %s15, 0
    %p56 = por %p54, %p55
    %s58 = sadd.s32 %s57, 1
    %p61 = scmp.eq.s32.totalorder %s9, 1
    %p62 = scmp.ne.s32.totalorder %s57, %s59
    %p63 = scmp.eq.s32.totalorder %s9, 0
    %p64 = por %p62, %p63
    %p65 = scmp.ne.s32.totalorder %s57, %s59
    %p66 = scmp.eq.s32.totalorder %s14, 1
    %p67 = por %p65, %p66
    %p68 = scmp.ne.s32.totalorder %s59, %s60
    %p69 = scmp.eq.s32.totalorder %s14, 0
    %p70 = por %p68, %p69
    %p71 = scmp.ne.s32.totalorder %s59, %s60
    %p72 = scmp.eq.s32.totalorder %s15, 1
    %p73 = por %p71, %p72
    %p75 = scmp.ne.s32.totalorder %s60, %s74
    %p76 = scmp.eq.s32.totalorder %s15, 0
    %p77 = por %p75, %p76
    %s79 = sadd.s32 %s78, 1
    %p82 = scmp.eq.s32.totalorder %s9, 1
    %p83 = scmp.ne.s32.totalorder %s78, %s80
    %p84 = scmp.eq.s32.totalorder %s9, 0
    %p85 = por %p83, %p84
    %p86 = scmp.ne.s32.totalorder %s78, %s80
    %p87 = scmp.eq.s32.totalorder %s14, 1
    %p88 = por %p86, %p87
    %p89 = scmp.ne.s32.totalorder %s80, %s81
    %p90 = scmp.eq.s32.totalorder %s14, 0
    %p91 = por %p89, %p90
    %p92 = scmp.ne.s32.totalorder %s80, %s81
    %p93 = scmp.eq.s32.totalorder %s15, 1
    %p94 = por %p92, %p93
    %p96 = scmp.ne.s32.totalorder %s81, %s95
    %p97 = scmp.eq.s32.totalorder %s15, 0
    %p98 = por %p96, %p97
    %s99 = ssub.s32 %s16, %s28
    %s100 = ssub.s32 %s17, %s24
    %s101 = sor.u32 %s99, %s100
    %p102 = scmp.eq.s32.totalorder %s101, 0
    %s104 = sadd.s32 %s103, 1
    %s105 = scalar_select %p102, %s103, %s104
    %p108 = pneg %p102
    %p109 = scmp.eq.s32.totalorder %s9, 1
    %p110 = por %p108, %p109
    %p111 = scmp.ne.s32.totalorder %s103, %s106
    %p112 = scmp.eq.s32.totalorder %s9, 0
    %p113 = por %p111, %p112
    %p114 = scmp.ne.s32.totalorder %s103, %s106
    %p115 = scmp.eq.s32.totalorder %s14, 1
    %p116 = por %p114, %p115
    %p117 = scmp.ne.s32.totalorder %s106, %s107
    %p118 = scmp.eq.s32.totalorder %s14, 0
    %p119 = por %p117, %p118
    %p120 = scmp.ne.s32.totalorder %s106, %s107
    %p121 = scmp.eq.s32.totalorder %s15, 1
    %p122 = por %p120, %p121
    %p124 = scmp.ne.s32.totalorder %s107, %s123
    %p125 = scmp.eq.s32.totalorder %s15, 0
    %p126 = por %p124, %p125
    %p127 = scmp.le.s32.totalorder 1, %s9
    %p128 = scmp.lt.s32.totalorder %s9, 3
    %p129 = pnand %p127, %p128
    %p130 = pneg %p129
    // Predicated region
    $region9: #{hrnet_forward.23} parent=5 // pred_check
      _
    $region10: #{hrnet_forward.23} parent=5 // pred_check_branch
      %132 = sbr.rel (%p129) target = $region12
    $region11: #{hrnet_forward.23} parent=5 // pred_region
      %s133 = ssub.s32 %s9, 1
      // Predicated region
      $region13: #{hrnet_forward.23} parent=11 // pred_check
        %p134 = pneg %p70
      $region14: #{hrnet_forward.23} parent=11 // pred_check_branch
        %136 = sbr.rel (%p134) target = $region16
      $region15: #{hrnet_forward.23} parent=11 // pred_region
        _
      $region16: #{hrnet_forward.23} parent=11 // pred_fallthru
        _
      // Predicated region
      $region17: #{hrnet_forward.23} parent=11 // pred_check
        %p137 = pneg %p91
      $region18: #{hrnet_forward.23} parent=11 // pred_check_branch
        %139 = sbr.rel (%p137) target = $region20
      $region19: #{hrnet_forward.23} parent=11 // pred_region
        _
      $region20: #{hrnet_forward.23} parent=11 // pred_fallthru
        _
    $region12: #{hrnet_forward.23} parent=5 // pred_fallthru
      _
    %p140 = scmp.lt.s32.totalorder %s9, 2
    // Predicated region
    $region21: #{hrnet_forward.23} parent=5 // pred_check
      %p141 = pneg %p140
    $region22: #{hrnet_forward.23} parent=5 // pred_check_branch
      %143 = sbr.rel (%p141) target = $region24
    $region23: #{hrnet_forward.23} parent=5 // pred_region
      // Predicated region
      $region25: #{hrnet_forward.23} parent=23 // pred_check
        %p144 = pneg %p43
      $region26: #{hrnet_forward.23} parent=23 // pred_check_branch
        %146 = sbr.rel (%p144) target = $region28
      $region27: #{hrnet_forward.23} parent=23 // pred_region
        %p147 = scmp.lt.s32.totalorder %s16, 1
        %s148 = scalar_select %p147, %s16, 1
        %p149 = scmp.lt.s32.totalorder %s17, 0
        %s150 = scalar_select %p149, %s17, 0
        %s151 = smul.addr %s148, 2
        %s152 = sadd.s32 %s150, %s151
        %s153 = smul.addr %s152, 4
        %s154 = scalar_lea.vmem %s0, %s153
      $region28: #{hrnet_forward.23} parent=23 // pred_fallthru
        _
    $region24: #{hrnet_forward.23} parent=5 // pred_fallthru
      _
    %p155 = scmp.le.s32.totalorder 1, %s9
    %p156 = scmp.lt.s32.totalorder %s9, 3
    %p157 = pnand %p155, %p156
    %p158 = pneg %p157
    // Predicated region
    $region29: #{hrnet_forward.23} parent=5 // pred_check
      _
    $region30: #{hrnet_forward.23} parent=5 // pred_check_branch
      %160 = sbr.rel (%p157) target = $region32
    $region31: #{hrnet_forward.23} parent=5 // pred_region
      %s161 = ssub.s32 %s9, 1
      %p162 = scmp.lt.s32.totalorder %s18, 1
      %s163 = scalar_select %p162, %s18, 1
      %p164 = scmp.lt.s32.totalorder %s19, 0
      %s165 = scalar_select %p164, %s19, 0
      %s166 = smul.addr %s163, 2
      %s167 = sadd.s32 %s165, %s166
      %s168 = smul.addr %s167, 4
      %s169 = scalar_lea.vmem %s0, %s168
      %p170 = pneg %p49
      %p171 = pneg %p46
      %p172 = pneg %p70
      %p173 = pneg %p67
      %p174 = pneg %p91
      %p175 = pneg %p88
      %p176 = pneg %p119
      %p177 = pneg %p116
      %p178 = scmp.lt.s32.totalorder %s18, 1
      %s179 = scalar_select %p178, %s18, 1
      %p180 = scmp.lt.s32.totalorder %s19, 0
      %s181 = scalar_select %p180, %s19, 0
      %s182 = sadd.s32 %s181, %s179
      %s183 = smul.addr %s182, 8
      %s184 = scalar_lea.vmem %s3, %s183
      %p185 = scmp.lt.s32.totalorder %s18, 1
      %s186 = scalar_select %p185, %s18, 1
      %p187 = scmp.lt.s32.totalorder %s19, 0
      %s188 = scalar_select %p187, %s19, 0
      %s189 = smul.addr %s186, 2
      %s190 = sadd.s32 %s188, %s189
      %s191 = smul.addr %s190, 4
      %s192 = scalar_lea.vmem %s0, %s191
      %p193 = scmp.lt.s32.totalorder %s18, 1
      %s194 = scalar_select %p193, %s18, 1
      %p195 = scmp.lt.s32.totalorder %s19, 0
      %s196 = scalar_select %p195, %s19, 0
      %s197 = sadd.s32 %s196, %s194
      %s198 = smul.addr %s197, 8
      %s199 = scalar_lea.vmem %s3, %s198
      %v201 = vld [vmem:[%s1] sm:$0xf]
      %v202 = vld [vmem:[%s192] sm:$0xf]
      %v203 = vld [vmem:[%s192 + $0x4] sm:$0xf]
      %v204 = vld [vmem:[%s2] sm:$0xff]
      %206 = vset.pattern.permute.xlu0 0
      %207 = vperm.xlu0 %206, %v204
      %v208 = vpop.permute.xlu0 %207
      %v212 = vunpack.c.l.b16 %v202
      %v213 = vunpack.c.l.b16 %v203
      %v214 = vpack.c.b16 %v213, %v212
      %vm216 = vcmask 130048
      %v218 = vsel %vm216, %v201, 0
      %220 = vmatprep.subr.bf16.mxu0 0
      %221 = vmatpush1.bf16.msra.mxu0 %v214
      %222 = vmatprep.subr.bf16.mxu0 0
      %223 = vmatpush1.bf16.msra.mxu0 0
      %224 = vmatprep.subr.bf16.mxu0 0
      %225 = vmatpush1.bf16.msra.mxu0 0
      %226 = vmatprep.subr.bf16.mxu0 0
      %227 = vmatpush1.bf16.msra.mxu0 0
      %228 = vmatprep.subr.bf16.mxu0 0
      %229 = vmatpush1.bf16.msra.mxu0 0
      %230 = vmatprep.subr.bf16.mxu0 0
      %231 = vmatpush1.bf16.msra.mxu0 0
      %232 = vmatprep.subr.bf16.mxu0 0
      %233 = vmatpush1.bf16.msra.mxu0 0
      %234 = vmatprep.subr.bf16.mxu0 0
      %235 = vmatpush1.bf16.msra.mxu0 0
      %236 = vmatprep.subr.bf16.mxu0 0
      %237 = vmatpush1.bf16.msra.mxu0 0
      %238 = vmatprep.subr.bf16.mxu0 0
      %239 = vmatpush1.bf16.msra.mxu0 0
      %240 = vmatprep.subr.bf16.mxu0 0
      %241 = vmatpush1.bf16.msra.mxu0 0
      %242 = vmatprep.subr.bf16.mxu0 0
      %243 = vmatpush1.bf16.msra.mxu0 0
      %244 = vmatprep.subr.bf16.mxu0 0
      %245 = vmatpush1.bf16.msra.mxu0 0
      %246 = vmatprep.subr.bf16.mxu0 0
      %247 = vmatpush1.bf16.msra.mxu0 0
      %248 = vmatprep.subr.bf16.mxu0 0
      %249 = vmatpush1.bf16.msra.mxu0 0
      %250 = vmatprep.subr.bf16.mxu0 0
      %251 = vmatpush1.bf16.msra.mxu0 0
      %252 = vmatprep.mubr.bf16.mxu0 0
      %253 = vmatmul.mubr.bf16.gmra.mrb[0].mxu0 %v218
      %v254 = vpop.f32.mrb[0].mxu0
      %v255 = vadd.f32 %v208, %v254
      %v256 = vpop.f32.mrb[0].mxu0
      %v257 = vpop.f32.mrb[0].mxu0
      %v258 = vpop.f32.mrb[0].mxu0
      %259 = vdwg.mxu0
      %vm260 = vcmask 523264
      %261 = vst.msk [vmem:[%s199] sm:$0xff] %vm260, %v255
      %p262 = scmp.lt.s32.totalorder %s18, 1
      %s263 = scalar_select %p262, %s18, 1
      %p264 = scmp.lt.s32.totalorder %s19, 0
      %s265 = scalar_select %p264, %s19, 0
      %s266 = sadd.s32 %s265, %s263
      %s267 = smul.addr %s266, 8
      %s268 = scalar_lea.vmem %s3, %s267
      // Predicated region
      $region33: #{hrnet_forward.23} parent=31 // pred_check
        %p269 = pneg %p116
      $region34: #{hrnet_forward.23} parent=31 // pred_check_branch
        %271 = sbr.rel (%p269) target = $region36
      $region35: #{hrnet_forward.23} parent=31 // pred_region
        _
      $region36: #{hrnet_forward.23} parent=31 // pred_fallthru
        _
    $region32: #{hrnet_forward.23} parent=5 // pred_fallthru
      _
    %p272 = scmp.le.s32.totalorder 2, %s9
    // Predicated region
    $region37: #{hrnet_forward.23} parent=5 // pred_check
      %p273 = pneg %p272
    $region38: #{hrnet_forward.23} parent=5 // pred_check_branch
      %275 = sbr.rel (%p273) target = $region40
    $region39: #{hrnet_forward.23} parent=5 // pred_region
      %s276 = ssub.s32 %s9, 2
      // Predicated region
      $region41: #{hrnet_forward.23} parent=39 // pred_check
        %p277 = pneg %p122
      $region42: #{hrnet_forward.23} parent=39 // pred_check_branch
        %279 = sbr.rel (%p277) target = $region44
      $region43: #{hrnet_forward.23} parent=39 // pred_region
        %p280 = scmp.lt.s32.totalorder %s20, 1
        %s281 = scalar_select %p280, %s20, 1
        %p282 = scmp.lt.s32.totalorder %s21, 0
        %s283 = scalar_select %p282, %s21, 0
        %s284 = sadd.s32 %s283, %s281
        %s285 = smul.addr %s284, 8
        %s286 = scalar_lea.vmem %s3, %s285
      $region44: #{hrnet_forward.23} parent=39 // pred_fallthru
        _
    $region40: #{hrnet_forward.23} parent=5 // pred_fallthru
      _
  $region6: #{hrnet_forward.23} parent=0 // loop_footer
    %s13 = sadd.s32 1, %s9
  $region7: #{hrnet_forward.23} parent=0 // loop_footer_branch
    %8 = sbr.rel target = $region3
  $region8: #{hrnet_forward.23} parent=0 // loop_exit
    _

// kernel: hrnet_forward.22
$region0: #{hrnet_forward.22}
  #allocation0 [shape = 'u32[]', space=smem, size = 0x4, offset = 0x4, fixed_abs, tag = 'smem constant byte address 0x4 - core index']
  #allocation1 [shape = 'u32[144,128]{1,0:T(1,128)}', space=vmem, size = 0x12000, scoped, tag = 'internal scratch']
  %s0 = inlined_call_operand.vmem [shape: bf16[2,360,64], index: 0, kind: input, shape index: {}]
  %s1 = inlined_call_operand.vmem [shape: bf16[16,360], index: 1, kind: input, shape index: {}]
  %s2 = inlined_call_operand.vmem [shape: f32[16,1], index: 2, kind: input, shape index: {}]
  %s3 = inlined_call_operand.vmem [shape: f32[2,16,64], index: 3, kind: output, shape index: {}]
  %s4 = sld [smem:[#allocation0]]
  $region45: #{hrnet_forward.22} parent=0
    _
  %s6 = ssub.s32 1, %s4
  %s7 = scalar_select 0, %s6, %s4
  loop: start=0, step=1, limit=4
  $region2: #{hrnet_forward.22} parent=0 // loop_pre_header
    _
  $region3: #{hrnet_forward.22} parent=0 // loop_header
    %s9 = sphi 0, %s13
    %p10 = scmp.ge.s32.totalorder %s9, 4
    %s16 = sphi 0, %s28
    %s17 = sphi 0, %s24
    %s18 = sphi 0, %s16
    %s19 = sphi 0, %s17
    %s20 = sphi 0, %s18
    %s21 = sphi 0, %s19
    %s33 = sphi 0, %s35
    %s36 = sphi 0, %s33
    %s37 = sphi 0, %s36
    %s53 = sphi 0, %s37
    %s57 = sphi 0, %s57
    %s59 = sphi 0, %s57
    %s60 = sphi 0, %s59
    %s74 = sphi 0, %s60
    %s78 = sphi 0, %s78
    %s80 = sphi 0, %s78
    %s81 = sphi 0, %s80
    %s95 = sphi 0, %s81
    %s103 = sphi 0, %s105
    %s106 = sphi 0, %s103
    %s107 = sphi 0, %s106
    %s123 = sphi 0, %s107
  $region4: #{hrnet_forward.22} parent=0 // loop_header_branch
    %12 = sbr.rel (%p10) target = $region8
  $region5: #{hrnet_forward.22} parent=0 // loop_body
    %s14 = ssub.s32 %s9, 1
    %s15 = ssub.s32 %s9, 2
    %s22 = sadd.s32 1, %s17
    %p23 = scmp.ge.s32.totalorder %s22, 1
    %s24 = scalar_select %p23, 0, %s22
    %s25 = sadd.s32 1, %s16
    %s26 = scalar_select %p23, %s25, %s16
    %p27 = scmp.ge.s32.totalorder %s26, 2
    %s28 = scalar_select %p27, 0, %s26
    %s29 = ssub.s32 %s16, %s28
    %s30 = ssub.s32 %s17, %s24
    %s31 = sor.u32 %s29, %s30
    %p32 = scmp.eq.s32.totalorder %s31, 0
    %s34 = sadd.s32 %s33, 1
    %s35 = scalar_select %p32, %s33, %s34
    %p38 = pneg %p32
    %p39 = scmp.eq.s32.totalorder %s9, 1
    %p40 = por %p38, %p39
    %p41 = scmp.ne.s32.totalorder %s33, %s36
    %p42 = scmp.eq.s32.totalorder %s9, 0
    %p43 = por %p41, %p42
    %p44 = scmp.ne.s32.totalorder %s33, %s36
    %p45 = scmp.eq.s32.totalorder %s14, 1
    %p46 = por %p44, %p45
    %p47 = scmp.ne.s32.totalorder %s36, %s37
    %p48 = scmp.eq.s32.totalorder %s14, 0
    %p49 = por %p47, %p48
    %p50 = scmp.ne.s32.totalorder %s36, %s37
    %p51 = scmp.eq.s32.totalorder %s15, 1
    %p52 = por %p50, %p51
    %p54 = scmp.ne.s32.totalorder %s37, %s53
    %p55 = scmp.eq.s32.totalorder %s15, 0
    %p56 = por %p54, %p55
    %s58 = sadd.s32 %s57, 1
    %p61 = scmp.eq.s32.totalorder %s9, 1
    %p62 = scmp.ne.s32.totalorder %s57, %s59
    %p63 = scmp.eq.s32.totalorder %s9, 0
    %p64 = por %p62, %p63
    %p65 = scmp.ne.s32.totalorder %s57, %s59
    %p66 = scmp.eq.s32.totalorder %s14, 1
    %p67 = por %p65, %p66
    %p68 = scmp.ne.s32.totalorder %s59, %s60
    %p69 = scmp.eq.s32.totalorder %s14, 0
    %p70 = por %p68, %p69
    %p71 = scmp.ne.s32.totalorder %s59, %s60
    %p72 = scmp.eq.s32.totalorder %s15, 1
    %p73 = por %p71, %p72
    %p75 = scmp.ne.s32.totalorder %s60, %s74
    %p76 = scmp.eq.s32.totalorder %s15, 0
    %p77 = por %p75, %p76
    %s79 = sadd.s32 %s78, 1
    %p82 = scmp.eq.s32.totalorder %s9, 1
    %p83 = scmp.ne.s32.totalorder %s78, %s80
    %p84 = scmp.eq.s32.totalorder %s9, 0
    %p85 = por %p83, %p84
    %p86 = scmp.ne.s32.totalorder %s78, %s80
    %p87 = scmp.eq.s32.totalorder %s14, 1
    %p88 = por %p86, %p87
    %p89 = scmp.ne.s32.totalorder %s80, %s81
    %p90 = scmp.eq.s32.totalorder %s14, 0
    %p91 = por %p89, %p90
    %p92 = scmp.ne.s32.totalorder %s80, %s81
    %p93 = scmp.eq.s32.totalorder %s15, 1
    %p94 = por %p92, %p93
    %p96 = scmp.ne.s32.totalorder %s81, %s95
    %p97 = scmp.eq.s32.totalorder %s15, 0
    %p98 = por %p96, %p97
    %s99 = ssub.s32 %s16, %s28
    %s100 = ssub.s32 %s17, %s24
    %s101 = sor.u32 %s99, %s100
    %p102 = scmp.eq.s32.totalorder %s101, 0
    %s104 = sadd.s32 %s103, 1
    %s105 = scalar_select %p102, %s103, %s104
    %p108 = pneg %p102
    %p109 = scmp.eq.s32.totalorder %s9, 1
    %p110 = por %p108, %p109
    %p111 = scmp.ne.s32.totalorder %s103, %s106
    %p112 = scmp.eq.s32.totalorder %s9, 0
    %p113 = por %p111, %p112
    %p114 = scmp.ne.s32.totalorder %s103, %s106
    %p115 = scmp.eq.s32.totalorder %s14, 1
    %p116 = por %p114, %p115
    %p117 = scmp.ne.s32.totalorder %s106, %s107
    %p118 = scmp.eq.s32.totalorder %s14, 0
    %p119 = por %p117, %p118
    %p120 = scmp.ne.s32.totalorder %s106, %s107
    %p121 = scmp.eq.s32.totalorder %s15, 1
    %p122 = por %p120, %p121
    %p124 = scmp.ne.s32.totalorder %s107, %s123
    %p125 = scmp.eq.s32.totalorder %s15, 0
    %p126 = por %p124, %p125
    %p127 = scmp.le.s32.totalorder 1, %s9
    %p128 = scmp.lt.s32.totalorder %s9, 3
    %p129 = pnand %p127, %p128
    %p130 = pneg %p129
    // Predicated region
    $region9: #{hrnet_forward.22} parent=5 // pred_check
      _
    $region10: #{hrnet_forward.22} parent=5 // pred_check_branch
      %132 = sbr.rel (%p129) target = $region12
    $region11: #{hrnet_forward.22} parent=5 // pred_region
      %s133 = ssub.s32 %s9, 1
      // Predicated region
      $region13: #{hrnet_forward.22} parent=11 // pred_check
        %p134 = pneg %p70
      $region14: #{hrnet_forward.22} parent=11 // pred_check_branch
        %136 = sbr.rel (%p134) target = $region16
      $region15: #{hrnet_forward.22} parent=11 // pred_region
        _
      $region16: #{hrnet_forward.22} parent=11 // pred_fallthru
        _
      // Predicated region
      $region17: #{hrnet_forward.22} parent=11 // pred_check
        %p137 = pneg %p91
      $region18: #{hrnet_forward.22} parent=11 // pred_check_branch
        %139 = sbr.rel (%p137) target = $region20
      $region19: #{hrnet_forward.22} parent=11 // pred_region
        _
      $region20: #{hrnet_forward.22} parent=11 // pred_fallthru
        _
    $region12: #{hrnet_forward.22} parent=5 // pred_fallthru
      _
    %p140 = scmp.lt.s32.totalorder %s9, 2
    // Predicated region
    $region21: #{hrnet_forward.22} parent=5 // pred_check
      %p141 = pneg %p140
    $region22: #{hrnet_forward.22} parent=5 // pred_check_branch
      %143 = sbr.rel (%p141) target = $region24
    $region23: #{hrnet_forward.22} parent=5 // pred_region
      // Predicated region
      $region25: #{hrnet_forward.22} parent=23 // pred_check
        %p144 = pneg %p43
      $region26: #{hrnet_forward.22} parent=23 // pred_check_branch
        %146 = sbr.rel (%p144) target = $region28
      $region27: #{hrnet_forward.22} parent=23 // pred_region
        %p147 = scmp.lt.s32.totalorder %s16, 1
        %s148 = scalar_select %p147, %s16, 1
        %p149 = scmp.lt.s32.totalorder %s17, 0
        %s150 = scalar_select %p149, %s17, 0
        %s151 = smul.addr %s148, 45
        %s152 = sadd.s32 %s150, %s151
        %s153 = smul.addr %s152, 4
        %s154 = scalar_lea.vmem %s0, %s153
      $region28: #{hrnet_forward.22} parent=23 // pred_fallthru
        _
    $region24: #{hrnet_forward.22} parent=5 // pred_fallthru
      _
    %p155 = scmp.le.s32.totalorder 1, %s9
    %p156 = scmp.lt.s32.totalorder %s9, 3
    %p157 = pnand %p155, %p156
    %p158 = pneg %p157
    // Predicated region
    $region29: #{hrnet_forward.22} parent=5 // pred_check
      _
    $region30: #{hrnet_forward.22} parent=5 // pred_check_branch
      %160 = sbr.rel (%p157) target = $region32
    $region31: #{hrnet_forward.22} parent=5 // pred_region
      %s161 = ssub.s32 %s9, 1
      %p162 = scmp.lt.s32.totalorder %s18, 1
      %s163 = scalar_select %p162, %s18, 1
      %p164 = scmp.lt.s32.totalorder %s19, 0
      %s165 = scalar_select %p164, %s19, 0
      %s166 = smul.addr %s163, 45
      %s167 = sadd.s32 %s165, %s166
      %s168 = smul.addr %s167, 4
      %s169 = scalar_lea.vmem %s0, %s168
      %p170 = pneg %p49
      %p171 = pneg %p46
      %p172 = pneg %p70
      %p173 = pneg %p67
      %p174 = pneg %p91
      %p175 = pneg %p88
      %p176 = pneg %p119
      %p177 = pneg %p116
      %p178 = scmp.lt.s32.totalorder %s18, 1
      %s179 = scalar_select %p178, %s18, 1
      %p180 = scmp.lt.s32.totalorder %s19, 0
      %s181 = scalar_select %p180, %s19, 0
      %s182 = smul.addr %s179, 2
      %s183 = sadd.s32 %s181, %s182
      %s184 = smul.addr %s183, 8
      %s185 = scalar_lea.vmem %s3, %s184
      %p186 = scmp.lt.s32.totalorder %s18, 1
      %s187 = scalar_select %p186, %s18, 1
      %p188 = scmp.lt.s32.totalorder %s19, 0
      %s189 = scalar_select %p188, %s19, 0
      %s190 = smul.addr %s187, 45
      %s191 = sadd.s32 %s189, %s190
      %s192 = smul.addr %s191, 4
      %s193 = scalar_lea.vmem %s0, %s192
      %p194 = scmp.lt.s32.totalorder %s18, 1
      %s195 = scalar_select %p194, %s18, 1
      %p196 = scmp.lt.s32.totalorder %s19, 0
      %s197 = scalar_select %p196, %s19, 0
      %s198 = smul.addr %s195, 2
      %s199 = sadd.s32 %s197, %s198
      %s200 = smul.addr %s199, 8
      %s201 = scalar_lea.vmem %s3, %s200
      %v203 = vld [vmem:[%s1] sm:$0xff]
      %v204 = vld [vmem:[%s1 + $0x8] sm:$0xf]
      %v205 = vld [vmem:[%s1 + $0xc] sm:$0xff]
      %v206 = vld [vmem:[%s1 + $0x14] sm:$0xf]
      %v207 = vld [vmem:[%s193] sm:$0xf]
      %v208 = vld [vmem:[%s193 + $0x4] sm:$0xf]
      %v209 = vld [vmem:[%s193 + $0x8] sm:$0xf]
      %v210 = vld [vmem:[%s193 + $0xc] sm:$0xf]
      %v211 = vld [vmem:[%s193 + $0x10] sm:$0xf]
      %v212 = vld [vmem:[%s193 + $0x14] sm:$0xf]
      %v213 = vld [vmem:[%s193 + $0x18] sm:$0xf]
      %v214 = vld [vmem:[%s193 + $0x1c] sm:$0xf]
      %v215 = vld [vmem:[%s193 + $0x20] sm:$0xf]
      %v216 = vld [vmem:[%s193 + $0x24] sm:$0xf]
      %v217 = vld [vmem:[%s193 + $0x28] sm:$0xf]
      %v218 = vld [vmem:[%s193 + $0x2c] sm:$0xf]
      %v219 = vld [vmem:[%s193 + $0x30] sm:$0xf]
      %v220 = vld [vmem:[%s193 + $0x34] sm:$0xf]
      %v221 = vld [vmem:[%s193 + $0x38] sm:$0xf]
      %v222 = vld [vmem:[%s193 + $0x3c] sm:$0xf]
      %v223 = vld [vmem:[%s193 + $0x40] sm:$0xf]
      %v224 = vld [vmem:[%s193 + $0x44] sm:$0xf]
      %v225 = vld [vmem:[%s193 + $0x48] sm:$0xf]
      %v226 = vld [vmem:[%s193 + $0x4c] sm:$0xf]
      %v227 = vld [vmem:[%s193 + $0x50] sm:$0xf]
      %v228 = vld [vmem:[%s193 + $0x54] sm:$0xf]
      %v229 = vld [vmem:[%s193 + $0x58] sm:$0xf]
      %v230 = vld [vmem:[%s193 + $0x5c] sm:$0xf]
      %v231 = vld [vmem:[%s193 + $0x60] sm:$0xf]
      %v232 = vld [vmem:[%s193 + $0x64] sm:$0xf]
      %v233 = vld [vmem:[%s193 + $0x68] sm:$0xf]
      %v234 = vld [vmem:[%s193 + $0x6c] sm:$0xf]
      %v235 = vld [vmem:[%s193 + $0x70] sm:$0xf]
      %v236 = vld [vmem:[%s193 + $0x74] sm:$0xf]
      %v237 = vld [vmem:[%s193 + $0x78] sm:$0xf]
      %v238 = vld [vmem:[%s193 + $0x7c] sm:$0xf]
      %v239 = vld [vmem:[%s193 + $0x80] sm:$0xf]
      %v240 = vld [vmem:[%s193 + $0x84] sm:$0xf]
      %v241 = vld [vmem:[%s193 + $0x88] sm:$0xf]
      %v242 = vld [vmem:[%s193 + $0x8c] sm:$0xf]
      %v243 = vld [vmem:[%s193 + $0x90] sm:$0xf]
      %v244 = vld [vmem:[%s193 + $0x94] sm:$0xf]
      %v245 = vld [vmem:[%s193 + $0x98] sm:$0xf]
      %v246 = vld [vmem:[%s193 + $0x9c] sm:$0xf]
      %v247 = vld [vmem:[%s193 + $0xa0] sm:$0xf]
      %v248 = vld [vmem:[%s193 + $0xa4] sm:$0xf]
      %v249 = vld [vmem:[%s193 + $0xa8] sm:$0xf]
      %v250 = vld [vmem:[%s193 + $0xac] sm:$0xf]
      %v251 = vld [vmem:[%s193 + $0xb0] sm:$0xf]
      %v252 = vld [vmem:[%s2] sm:$0xff]
      %v253 = vld [vmem:[%s2 + $0x8] sm:$0xff]
      %255 = vset.pattern.permute.xlu0 0
      %256 = vperm.xlu0 %255, %v252
      %v257 = vpop.permute.xlu0 %256
      %260 = vset.pattern.permute.xlu0 0
      %261 = vperm.xlu0 %260, %v253
      %v262 = vpop.permute.xlu0 %261
      %v268 = vunpack.c.l.b16 %v203
      %v269 = vunpack.c.h.b16 %v203
      %v270 = vunpack.c.l.b16 %v204
      %v271 = vunpack.c.l.b16 %v205
      %v272 = vunpack.c.h.b16 %v205
      %v273 = vunpack.c.l.b16 %v206
      %v274 = vpack.c.b16 %v271, %v268
      %v275 = vpack.c.b16 %v272, %v269
      %v276 = vpack.c.b16 %v273, %v270
      %v324 = vunpack.c.l.b16 %v207
      %v325 = vunpack.c.l.b16 %v208
      %v326 = vunpack.c.l.b16 %v209
      %v327 = vunpack.c.l.b16 %v210
      %v328 = vunpack.c.l.b16 %v211
      %v329 = vunpack.c.l.b16 %v212
      %v330 = vunpack.c.l.b16 %v213
      %v331 = vunpack.c.l.b16 %v214
      %v332 = vunpack.c.l.b16 %v215
      %v333 = vunpack.c.l.b16 %v216
      %v334 = vunpack.c.l.b16 %v217
      %v335 = vunpack.c.l.b16 %v218
      %v336 = vunpack.c.l.b16 %v219
      %v337 = vunpack.c.l.b16 %v220
      %v338 = vunpack.c.l.b16 %v221
      %v339 = vunpack.c.l.b16 %v222
      %v340 = vunpack.c.l.b16 %v223
      %v341 = vunpack.c.l.b16 %v224
      %v342 = vunpack.c.l.b16 %v225
      %v343 = vunpack.c.l.b16 %v226
      %v344 = vunpack.c.l.b16 %v227
      %v345 = vunpack.c.l.b16 %v228
      %v346 = vunpack.c.l.b16 %v229
      %v347 = vunpack.c.l.b16 %v230
      %v348 = vunpack.c.l.b16 %v231
      %v349 = vunpack.c.l.b16 %v232
      %v350 = vunpack.c.l.b16 %v233
      %v351 = vunpack.c.l.b16 %v234
      %v352 = vunpack.c.l.b16 %v235
      %v353 = vunpack.c.l.b16 %v236
      %v354 = vunpack.c.l.b16 %v237
      %v355 = vunpack.c.l.b16 %v238
      %v356 = vunpack.c.l.b16 %v239
      %v357 = vunpack.c.l.b16 %v240
      %v358 = vunpack.c.l.b16 %v241
      %v359 = vunpack.c.l.b16 %v242
      %v360 = vunpack.c.l.b16 %v243
      %v361 = vunpack.c.l.b16 %v244
      %v362 = vunpack.c.l.b16 %v245
      %v363 = vunpack.c.l.b16 %v246
      %v364 = vunpack.c.l.b16 %v247
      %v365 = vunpack.c.l.b16 %v248
      %v366 = vunpack.c.l.b16 %v249
      %v367 = vunpack.c.l.b16 %v250
      %v368 = vunpack.c.l.b16 %v251
      %v369 = vpack.c.b16 %v325, %v324
      %v370 = vpack.c.b16 %v327, %v326
      %v371 = vpack.c.b16 %v329, %v328
      %v372 = vpack.c.b16 %v331, %v330
      %v373 = vpack.c.b16 %v333, %v332
      %v374 = vpack.c.b16 %v335, %v334
      %v375 = vpack.c.b16 %v337, %v336
      %v376 = vpack.c.b16 %v339, %v338
      %v377 = vpack.c.b16 %v341, %v340
      %v378 = vpack.c.b16 %v343, %v342
      %v379 = vpack.c.b16 %v345, %v344
      %v380 = vpack.c.b16 %v347, %v346
      %v381 = vpack.c.b16 %v349, %v348
      %v382 = vpack.c.b16 %v351, %v350
      %v383 = vpack.c.b16 %v353, %v352
      %v384 = vpack.c.b16 %v355, %v354
      %v385 = vpack.c.b16 %v357, %v356
      %v386 = vpack.c.b16 %v359, %v358
      %v387 = vpack.c.b16 %v361, %v360
      %v388 = vpack.c.b16 %v363, %v362
      %v389 = vpack.c.b16 %v365, %v364
      %v390 = vpack.c.b16 %v367, %v366
      %v391 = vpack.c.b16 %v368, %v368
      %vm414 = vcmask 850944
      %v416 = vsel %vm414, %v276, 0
      %vm418 = vcmask 1043456
      %v420 = vsel %vm418, %v391, 0
      %422 = vmatprep.subr.bf16.mxu0 0
      %423 = vmatpush1.bf16.msra.mxu0 %v369
      %424 = vmatprep.subr.bf16.mxu0 0
      %425 = vmatpush1.bf16.msra.mxu0 %v370
      %426 = vmatprep.subr.bf16.mxu0 0
      %427 = vmatpush1.bf16.msra.mxu0 %v371
      %428 = vmatprep.subr.bf16.mxu0 0
      %429 = vmatpush1.bf16.msra.mxu0 %v372
      %430 = vmatprep.subr.bf16.mxu0 0
      %431 = vmatpush1.bf16.msra.mxu0 %v373
      %432 = vmatprep.subr.bf16.mxu0 0
      %433 = vmatpush1.bf16.msra.mxu0 %v374
      %434 = vmatprep.subr.bf16.mxu0 0
      %435 = vmatpush1.bf16.msra.mxu0 %v375
      %436 = vmatprep.subr.bf16.mxu0 0
      %437 = vmatpush1.bf16.msra.mxu0 %v376
      %438 = vmatprep.subr.bf16.mxu0 0
      %439 = vmatpush1.bf16.msra.mxu0 %v377
      %440 = vmatprep.subr.bf16.mxu0 0
      %441 = vmatpush1.bf16.msra.mxu0 %v378
      %442 = vmatprep.subr.bf16.mxu0 0
      %443 = vmatpush1.bf16.msra.mxu0 %v379
      %444 = vmatprep.subr.bf16.mxu0 0
      %445 = vmatpush1.bf16.msra.mxu0 %v380
      %446 = vmatprep.subr.bf16.mxu0 0
      %447 = vmatpush1.bf16.msra.mxu0 %v381
      %448 = vmatprep.subr.bf16.mxu0 0
      %449 = vmatpush1.bf16.msra.mxu0 %v382
      %450 = vmatprep.subr.bf16.mxu0 0
      %451 = vmatpush1.bf16.msra.mxu0 %v383
      %452 = vmatprep.subr.bf16.mxu0 0
      %453 = vmatpush1.bf16.msra.mxu0 %v384
      %454 = vmatprep.mubr.bf16.mxu0 %v275
      %455 = vmatmul.mubr.bf16.gmra.mrb[0].mxu0 %v274
      %v456 = vpop.f32.mrb[0].mxu0
      %v457 = vadd.f32 %v257, %v456
      %v458 = vpop.f32.mrb[0].mxu0
      %v459 = vpop.f32.mrb[0].mxu0
      %v460 = vadd.f32 %v262, %v459
      %v461 = vpop.f32.mrb[0].mxu0
      %462 = vdwg.mxu0
      %463 = vmatprep.subr.bf16.mxu0 0
      %464 = vmatpush1.bf16.msra.mxu0 %v385
      %465 = vmatprep.subr.bf16.mxu0 0
      %466 = vmatpush1.bf16.msra.mxu0 %v386
      %467 = vmatprep.subr.bf16.mxu0 0
      %468 = vmatpush1.bf16.msra.mxu0 %v387
      %469 = vmatprep.subr.bf16.mxu0 0
      %470 = vmatpush1.bf16.msra.mxu0 %v388
      %471 = vmatprep.subr.bf16.mxu0 0
      %472 = vmatpush1.bf16.msra.mxu0 %v389
      %473 = vmatprep.subr.bf16.mxu0 0
      %474 = vmatpush1.bf16.msra.mxu0 %v390
      %475 = vmatprep.subr.bf16.mxu0 0
      %476 = vmatpush1.bf16.msra.mxu0 %v420
      %477 = vmatprep.subr.bf16.mxu0 0
      %478 = vmatpush1.bf16.msra.mxu0 0
      %479 = vmatprep.subr.bf16.mxu0 0
      %480 = vmatpush1.bf16.msra.mxu0 0
      %481 = vmatprep.subr.bf16.mxu0 0
      %482 = vmatpush1.bf16.msra.mxu0 0
      %483 = vmatprep.subr.bf16.mxu0 0
      %484 = vmatpush1.bf16.msra.mxu0 0
      %485 = vmatprep.subr.bf16.mxu0 0
      %486 = vmatpush1.bf16.msra.mxu0 0
      %487 = vmatprep.subr.bf16.mxu0 0
      %488 = vmatpush1.bf16.msra.mxu0 0
      %489 = vmatprep.subr.bf16.mxu0 0
      %490 = vmatpush1.bf16.msra.mxu0 0
      %491 = vmatprep.subr.bf16.mxu0 0
      %492 = vmatpush1.bf16.msra.mxu0 0
      %493 = vmatprep.subr.bf16.mxu0 0
      %494 = vmatpush1.bf16.msra.mxu0 0
      %495 = vmatprep.mubr.bf16.mxu0 0
      %496 = vmatmul.mubr.bf16.gmra.mrb[0].mxu0 %v416
      %v497 = vpop.f32.mrb[0].mxu0
      %v498 = vadd.f32 %v457, %v497
      %v499 = vpop.f32.mrb[0].mxu0
      %v500 = vpop.f32.mrb[0].mxu0
      %v501 = vadd.f32 %v460, %v500
      %v502 = vpop.f32.mrb[0].mxu0
      %503 = vdwg.mxu0
      %vm504 = vcmask 523264
      %505 = vst.msk [vmem:[%s201] sm:$0xff] %vm504, %v498
      %506 = vst.msk [vmem:[%s201 + $0x8] sm:$0xff] %vm504, %v501
      %p507 = scmp.lt.s32.totalorder %s18, 1
      %s508 = scalar_select %p507, %s18, 1
      %p509 = scmp.lt.s32.totalorder %s19, 0
      %s510 = scalar_select %p509, %s19, 0
      %s511 = smul.addr %s508, 2
      %s512 = sadd.s32 %s510, %s511
      %s513 = smul.addr %s512, 8
      %s514 = scalar_lea.vmem %s3, %s513
      // Predicated region
      $region33: #{hrnet_forward.22} parent=31 // pred_check
        %p515 = pneg %p116
      $region34: #{hrnet_forward.22} parent=31 // pred_check_branch
        %517 = sbr.rel (%p515) target = $region36
      $region35: #{hrnet_forward.22} parent=31 // pred_region
        _
      $region36: #{hrnet_forward.22} parent=31 // pred_fallthru
        _
    $region32: #{hrnet_forward.22} parent=5 // pred_fallthru
      _
    %p518 = scmp.le.s32.totalorder 2, %s9
    // Predicated region
    $region37: #{hrnet_forward.22} parent=5 // pred_check
      %p519 = pneg %p518
    $region38: #{hrnet_forward.22} parent=5 // pred_check_branch
      %521 = sbr.rel (%p519) target = $region40
    $region39: #{hrnet_forward.22} parent=5 // pred_region
      %s522 = ssub.s32 %s9, 2
      // Predicated region
      $region41: #{hrnet_forward.22} parent=39 // pred_check
        %p523 = pneg %p122
      $region42: #{hrnet_forward.22} parent=39 // pred_check_branch
        %525 = sbr.rel (%p523) target = $region44
      $region43: #{hrnet_forward.22} parent=39 // pred_region
        %p526 = scmp.lt.s32.totalorder %s20, 1
        %s527 = scalar_select %p526, %s20, 1
        %p528 = scmp.lt.s32.totalorder %s21, 0
        %s529 = scalar_select %p528, %s21, 0
        %s530 = smul.addr %s527, 2
        %s531 = sadd.s32 %s529, %s530
        %s532 = smul.addr %s531, 8
        %s533 = scalar_lea.vmem %s3, %s532
      $region44: #{hrnet_forward.22} parent=39 // pred_fallthru
        _
    $region40: #{hrnet_forward.22} parent=5 // pred_fallthru
      _
  $region6: #{hrnet_forward.22} parent=0 // loop_footer
    %s13 = sadd.s32 1, %s9
  $region7: #{hrnet_forward.22} parent=0 // loop_footer_branch
    %8 = sbr.rel target = $region3
  $region8: #{hrnet_forward.22} parent=0 // loop_exit
    _

// kernel: hrnet_forward.15
$region0: #{hrnet_forward.15}
  #allocation0 [shape = 'u32[]', space=smem, size = 0x4, offset = 0x4, fixed_abs, tag = 'smem constant byte address 0x4 - core index']
  #allocation1 [shape = 'u32[144,128]{1,0:T(1,128)}', space=vmem, size = 0x12000, scoped, tag = 'internal scratch']
  %s0 = inlined_call_operand.vmem [shape: bf16[2,72,256], index: 0, kind: input, shape index: {}]
  %s1 = inlined_call_operand.vmem [shape: bf16[24,72], index: 1, kind: input, shape index: {}]
  %s2 = inlined_call_operand.vmem [shape: f32[24,1], index: 2, kind: input, shape index: {}]
  %s3 = inlined_call_operand.vmem [shape: f32[2,24,256], index: 3, kind: output, shape index: {}]
  %s4 = sld [smem:[#allocation0]]
  $region45: #{hrnet_forward.15} parent=0
    _
  %s6 = ssub.s32 1, %s4
  %s7 = scalar_select 0, %s6, %s4
  loop: start=0, step=1, limit=4
  $region2: #{hrnet_forward.15} parent=0 // loop_pre_header
    _
  $region3: #{hrnet_forward.15} parent=0 // loop_header
    %s9 = sphi 0, %s13
    %p10 = scmp.ge.s32.totalorder %s9, 4
    %s16 = sphi 0, %s28
    %s17 = sphi 0, %s24
    %s18 = sphi 0, %s16
    %s19 = sphi 0, %s17
    %s20 = sphi 0, %s18
    %s21 = sphi 0, %s19
    %s33 = sphi 0, %s35
    %s36 = sphi 0, %s33
    %s37 = sphi 0, %s36
    %s53 = sphi 0, %s37
    %s57 = sphi 0, %s57
    %s59 = sphi 0, %s57
    %s60 = sphi 0, %s59
    %s74 = sphi 0, %s60
    %s78 = sphi 0, %s78
    %s80 = sphi 0, %s78
    %s81 = sphi 0, %s80
    %s95 = sphi 0, %s81
    %s103 = sphi 0, %s105
    %s106 = sphi 0, %s103
    %s107 = sphi 0, %s106
    %s123 = sphi 0, %s107
  $region4: #{hrnet_forward.15} parent=0 // loop_header_branch
    %12 = sbr.rel (%p10) target = $region8
  $region5: #{hrnet_forward.15} parent=0 // loop_body
    %s14 = ssub.s32 %s9, 1
    %s15 = ssub.s32 %s9, 2
    %s22 = sadd.s32 1, %s17
    %p23 = scmp.ge.s32.totalorder %s22, 1
    %s24 = scalar_select %p23, 0, %s22
    %s25 = sadd.s32 1, %s16
    %s26 = scalar_select %p23, %s25, %s16
    %p27 = scmp.ge.s32.totalorder %s26, 2
    %s28 = scalar_select %p27, 0, %s26
    %s29 = ssub.s32 %s16, %s28
    %s30 = ssub.s32 %s17, %s24
    %s31 = sor.u32 %s29, %s30
    %p32 = scmp.eq.s32.totalorder %s31, 0
    %s34 = sadd.s32 %s33, 1
    %s35 = scalar_select %p32, %s33, %s34
    %p38 = pneg %p32
    %p39 = scmp.eq.s32.totalorder %s9, 1
    %p40 = por %p38, %p39
    %p41 = scmp.ne.s32.totalorder %s33, %s36
    %p42 = scmp.eq.s32.totalorder %s9, 0
    %p43 = por %p41, %p42
    %p44 = scmp.ne.s32.totalorder %s33, %s36
    %p45 = scmp.eq.s32.totalorder %s14, 1
    %p46 = por %p44, %p45
    %p47 = scmp.ne.s32.totalorder %s36, %s37
    %p48 = scmp.eq.s32.totalorder %s14, 0
    %p49 = por %p47, %p48
    %p50 = scmp.ne.s32.totalorder %s36, %s37
    %p51 = scmp.eq.s32.totalorder %s15, 1
    %p52 = por %p50, %p51
    %p54 = scmp.ne.s32.totalorder %s37, %s53
    %p55 = scmp.eq.s32.totalorder %s15, 0
    %p56 = por %p54, %p55
    %s58 = sadd.s32 %s57, 1
    %p61 = scmp.eq.s32.totalorder %s9, 1
    %p62 = scmp.ne.s32.totalorder %s57, %s59
    %p63 = scmp.eq.s32.totalorder %s9, 0
    %p64 = por %p62, %p63
    %p65 = scmp.ne.s32.totalorder %s57, %s59
    %p66 = scmp.eq.s32.totalorder %s14, 1
    %p67 = por %p65, %p66
    %p68 = scmp.ne.s32.totalorder %s59, %s60
    %p69 = scmp.eq.s32.totalorder %s14, 0
    %p70 = por %p68, %p69
    %p71 = scmp.ne.s32.totalorder %s59, %s60
    %p72 = scmp.eq.s32.totalorder %s15, 1
    %p73 = por %p71, %p72
    %p75 = scmp.ne.s32.totalorder %s60, %s74
    %p76 = scmp.eq.s32.totalorder %s15, 0
    %p77 = por %p75, %p76
    %s79 = sadd.s32 %s78, 1
    %p82 = scmp.eq.s32.totalorder %s9, 1
    %p83 = scmp.ne.s32.totalorder %s78, %s80
    %p84 = scmp.eq.s32.totalorder %s9, 0
    %p85 = por %p83, %p84
    %p86 = scmp.ne.s32.totalorder %s78, %s80
    %p87 = scmp.eq.s32.totalorder %s14, 1
    %p88 = por %p86, %p87
    %p89 = scmp.ne.s32.totalorder %s80, %s81
    %p90 = scmp.eq.s32.totalorder %s14, 0
    %p91 = por %p89, %p90
    %p92 = scmp.ne.s32.totalorder %s80, %s81
    %p93 = scmp.eq.s32.totalorder %s15, 1
    %p94 = por %p92, %p93
    %p96 = scmp.ne.s32.totalorder %s81, %s95
    %p97 = scmp.eq.s32.totalorder %s15, 0
    %p98 = por %p96, %p97
    %s99 = ssub.s32 %s16, %s28
    %s100 = ssub.s32 %s17, %s24
    %s101 = sor.u32 %s99, %s100
    %p102 = scmp.eq.s32.totalorder %s101, 0
    %s104 = sadd.s32 %s103, 1
    %s105 = scalar_select %p102, %s103, %s104
    %p108 = pneg %p102
    %p109 = scmp.eq.s32.totalorder %s9, 1
    %p110 = por %p108, %p109
    %p111 = scmp.ne.s32.totalorder %s103, %s106
    %p112 = scmp.eq.s32.totalorder %s9, 0
    %p113 = por %p111, %p112
    %p114 = scmp.ne.s32.totalorder %s103, %s106
    %p115 = scmp.eq.s32.totalorder %s14, 1
    %p116 = por %p114, %p115
    %p117 = scmp.ne.s32.totalorder %s106, %s107
    %p118 = scmp.eq.s32.totalorder %s14, 0
    %p119 = por %p117, %p118
    %p120 = scmp.ne.s32.totalorder %s106, %s107
    %p121 = scmp.eq.s32.totalorder %s15, 1
    %p122 = por %p120, %p121
    %p124 = scmp.ne.s32.totalorder %s107, %s123
    %p125 = scmp.eq.s32.totalorder %s15, 0
    %p126 = por %p124, %p125
    %p127 = scmp.le.s32.totalorder 1, %s9
    %p128 = scmp.lt.s32.totalorder %s9, 3
    %p129 = pnand %p127, %p128
    %p130 = pneg %p129
    // Predicated region
    $region9: #{hrnet_forward.15} parent=5 // pred_check
      _
    $region10: #{hrnet_forward.15} parent=5 // pred_check_branch
      %132 = sbr.rel (%p129) target = $region12
    $region11: #{hrnet_forward.15} parent=5 // pred_region
      %s133 = ssub.s32 %s9, 1
      // Predicated region
      $region13: #{hrnet_forward.15} parent=11 // pred_check
        %p134 = pneg %p70
      $region14: #{hrnet_forward.15} parent=11 // pred_check_branch
        %136 = sbr.rel (%p134) target = $region16
      $region15: #{hrnet_forward.15} parent=11 // pred_region
        _
      $region16: #{hrnet_forward.15} parent=11 // pred_fallthru
        _
      // Predicated region
      $region17: #{hrnet_forward.15} parent=11 // pred_check
        %p137 = pneg %p91
      $region18: #{hrnet_forward.15} parent=11 // pred_check_branch
        %139 = sbr.rel (%p137) target = $region20
      $region19: #{hrnet_forward.15} parent=11 // pred_region
        _
      $region20: #{hrnet_forward.15} parent=11 // pred_fallthru
        _
    $region12: #{hrnet_forward.15} parent=5 // pred_fallthru
      _
    %p140 = scmp.lt.s32.totalorder %s9, 2
    // Predicated region
    $region21: #{hrnet_forward.15} parent=5 // pred_check
      %p141 = pneg %p140
    $region22: #{hrnet_forward.15} parent=5 // pred_check_branch
      %143 = sbr.rel (%p141) target = $region24
    $region23: #{hrnet_forward.15} parent=5 // pred_region
      // Predicated region
      $region25: #{hrnet_forward.15} parent=23 // pred_check
        %p144 = pneg %p43
      $region26: #{hrnet_forward.15} parent=23 // pred_check_branch
        %146 = sbr.rel (%p144) target = $region28
      $region27: #{hrnet_forward.15} parent=23 // pred_region
        %s147 = smul.u32 2, %s17
        %p148 = scmp.lt.s32.totalorder %s16, 1
        %s149 = scalar_select %p148, %s16, 1
        %p150 = scmp.lt.s32.totalorder %s147, 1
        %s151 = scalar_select %p150, %s147, 1
        %s152 = smul.addr %s149, 18
        %s153 = sadd.s32 %s151, %s152
        %s154 = smul.addr %s153, 4
        %s155 = scalar_lea.vmem %s0, %s154
        %s156 = smul.u32 2, %s17
      $region28: #{hrnet_forward.15} parent=23 // pred_fallthru
        _
    $region24: #{hrnet_forward.15} parent=5 // pred_fallthru
      _
    %p157 = scmp.le.s32.totalorder 1, %s9
    %p158 = scmp.lt.s32.totalorder %s9, 3
    %p159 = pnand %p157, %p158
    %p160 = pneg %p159
    // Predicated region
    $region29: #{hrnet_forward.15} parent=5 // pred_check
      _
    $region30: #{hrnet_forward.15} parent=5 // pred_check_branch
      %162 = sbr.rel (%p159) target = $region32
    $region31: #{hrnet_forward.15} parent=5 // pred_region
      %s163 = ssub.s32 %s9, 1
      %s164 = smul.u32 2, %s19
      %p165 = scmp.lt.s32.totalorder %s18, 1
      %s166 = scalar_select %p165, %s18, 1
      %p167 = scmp.lt.s32.totalorder %s164, 1
      %s168 = scalar_select %p167, %s164, 1
      %s169 = smul.addr %s166, 18
      %s170 = sadd.s32 %s168, %s169
      %s171 = smul.addr %s170, 4
      %s172 = scalar_lea.vmem %s0, %s171
      %p173 = pneg %p49
      %p174 = pneg %p46
      %p175 = pneg %p70
      %p176 = pneg %p67
      %p177 = pneg %p91
      %p178 = pneg %p88
      %p179 = pneg %p119
      %p180 = pneg %p116
      %s181 = smul.u32 2, %s19
      %p182 = scmp.lt.s32.totalorder %s18, 1
      %s183 = scalar_select %p182, %s18, 1
      %p184 = scmp.lt.s32.totalorder %s181, 1
      %s185 = scalar_select %p184, %s181, 1
      %s186 = smul.addr %s183, 6
      %s187 = sadd.s32 %s185, %s186
      %s188 = smul.addr %s187, 8
      %s189 = scalar_lea.vmem %s3, %s188
      %s190 = smul.u32 2, %s19
      %p191 = scmp.lt.s32.totalorder %s18, 1
      %s192 = scalar_select %p191, %s18, 1
      %p193 = scmp.lt.s32.totalorder %s190, 1
      %s194 = scalar_select %p193, %s190, 1
      %s195 = smul.addr %s192, 18
      %s196 = sadd.s32 %s194, %s195
      %s197 = smul.addr %s196, 4
      %s198 = scalar_lea.vmem %s0, %s197
      %s199 = smul.u32 2, %s19
      %s200 = smul.u32 2, %s19
      %p201 = scmp.lt.s32.totalorder %s18, 1
      %s202 = scalar_select %p201, %s18, 1
      %p203 = scmp.lt.s32.totalorder %s200, 1
      %s204 = scalar_select %p203, %s200, 1
      %s205 = smul.addr %s202, 6
      %s206 = sadd.s32 %s204, %s205
      %s207 = smul.addr %s206, 8
      %s208 = scalar_lea.vmem %s3, %s207
      %s209 = smul.u32 2, %s19
      %v211 = vld [vmem:[%s1] sm:$0xf]
      %v212 = vld [vmem:[%s1 + $0x4] sm:$0xf]
      %v213 = vld [vmem:[%s1 + $0x8] sm:$0xf]
      %v214 = vld [vmem:[%s198] sm:$0xff]
      %v215 = vld [vmem:[%s198 + $0x8] sm:$0xff]
      %v216 = vld [vmem:[%s198 + $0x10] sm:$0xff]
      %v217 = vld [vmem:[%s198 + $0x18] sm:$0xff]
      %v218 = vld [vmem:[%s198 + $0x20] sm:$0xff]
      %v219 = vld [vmem:[%s198 + $0x28] sm:$0xff]
      %v220 = vld [vmem:[%s198 + $0x30] sm:$0xff]
      %v221 = vld [vmem:[%s198 + $0x38] sm:$0xff]
      %v222 = vld [vmem:[%s198 + $0x40] sm:$0xff]
      %v223 = vld [vmem:[%s2] sm:$0xff]
      %v224 = vld [vmem:[%s2 + $0x8] sm:$0xff]
      %v225 = vld [vmem:[%s2 + $0x10] sm:$0xff]
      %227 = vset.pattern.permute.xlu0 0
      %228 = vperm.xlu0 %227, %v223
      %v229 = vpop.permute.xlu0 %228
      %232 = vset.pattern.permute.xlu0 0
      %233 = vperm.xlu0 %232, %v224
      %v234 = vpop.permute.xlu0 %233
      %237 = vset.pattern.permute.xlu0 0
      %238 = vperm.xlu0 %237, %v225
      %v239 = vpop.permute.xlu0 %238
      %v244 = vunpack.c.l.b16 %v211
      %v245 = vunpack.c.l.b16 %v212
      %v246 = vunpack.c.l.b16 %v213
      %v247 = vpack.c.b16 %v245, %v244
      %v248 = vpack.c.b16 %v246, %v246
      %v258 = vunpack.c.l.b16 %v214
      %v259 = vunpack.c.h.b16 %v214
      %v260 = vunpack.c.l.b16 %v215
      %v261 = vunpack.c.h.b16 %v215
      %v262 = vunpack.c.l.b16 %v216
      %v263 = vunpack.c.h.b16 %v216
      %v264 = vunpack.c.l.b16 %v217
      %v265 = vunpack.c.h.b16 %v217
      %v266 = vunpack.c.l.b16 %v218
      %v267 = vunpack.c.h.b16 %v218
      %v268 = vunpack.c.l.b16 %v219
      %v269 = vunpack.c.h.b16 %v219
      %v270 = vunpack.c.l.b16 %v220
      %v271 = vunpack.c.h.b16 %v220
      %v272 = vunpack.c.l.b16 %v221
      %v273 = vunpack.c.h.b16 %v221
      %v274 = vunpack.c.l.b16 %v222
      %v275 = vunpack.c.h.b16 %v222
      %v276 = vpack.c.b16 %v260, %v258
      %v277 = vpack.c.b16 %v261, %v259
      %v278 = vpack.c.b16 %v264, %v262
      %v279 = vpack.c.b16 %v265, %v263
      %v280 = vpack.c.b16 %v268, %v266
      %v281 = vpack.c.b16 %v269, %v267
      %v282 = vpack.c.b16 %v272, %v270
      %v283 = vpack.c.b16 %v273, %v271
      %v284 = vpack.c.b16 %v274, %v274
      %v285 = vpack.c.b16 %v275, %v275
      %vm294 = vcmask 588800
      %v296 = vsel %vm294, %v247, 0
      %v299 = vsel %vm294, %v248, 0
      %vm301 = vcmask 1043456
      %v303 = vsel %vm301, %v284, 0
      %v306 = vsel %vm301, %v285, 0
      %308 = vmatprep.subr.bf16.mxu0 %v277
      %309 = vmatpush1.bf16.msra.mxu0 %v276
      %310 = vmatprep.subr.bf16.mxu0 %v279
      %311 = vmatpush1.bf16.msra.mxu0 %v278
      %312 = vmatprep.subr.bf16.mxu0 %v281
      %313 = vmatpush1.bf16.msra.mxu0 %v280
      %314 = vmatprep.subr.bf16.mxu0 %v283
      %315 = vmatpush1.bf16.msra.mxu0 %v282
      %316 = vmatprep.subr.bf16.mxu0 %v306
      %317 = vmatpush1.bf16.msra.mxu0 %v303
      %318 = vmatprep.subr.bf16.mxu0 0
      %319 = vmatpush1.bf16.msra.mxu0 0
      %320 = vmatprep.subr.bf16.mxu0 0
      %321 = vmatpush1.bf16.msra.mxu0 0
      %322 = vmatprep.subr.bf16.mxu0 0
      %323 = vmatpush1.bf16.msra.mxu0 0
      %324 = vmatprep.subr.bf16.mxu0 0
      %325 = vmatpush1.bf16.msra.mxu0 0
      %326 = vmatprep.subr.bf16.mxu0 0
      %327 = vmatpush1.bf16.msra.mxu0 0
      %328 = vmatprep.subr.bf16.mxu0 0
      %329 = vmatpush1.bf16.msra.mxu0 0
      %330 = vmatprep.subr.bf16.mxu0 0
      %331 = vmatpush1.bf16.msra.mxu0 0
      %332 = vmatprep.subr.bf16.mxu0 0
      %333 = vmatpush1.bf16.msra.mxu0 0
      %334 = vmatprep.subr.bf16.mxu0 0
      %335 = vmatpush1.bf16.msra.mxu0 0
      %336 = vmatprep.subr.bf16.mxu0 0
      %337 = vmatpush1.bf16.msra.mxu0 0
      %338 = vmatprep.subr.bf16.mxu0 0
      %339 = vmatpush1.bf16.msra.mxu0 0
      %340 = vmatprep.mubr.bf16.mxu0 0
      %341 = vmatmul.mubr.bf16.gmra.mrb[0].mxu0 %v296
      %v342 = vpop.f32.mrb[0].mxu0
      %v343 = vadd.f32 %v229, %v342
      %v344 = vpop.f32.mrb[0].mxu0
      %v345 = vadd.f32 %v229, %v344
      %v346 = vpop.f32.mrb[0].mxu0
      %v347 = vadd.f32 %v234, %v346
      %v348 = vpop.f32.mrb[0].mxu0
      %v349 = vadd.f32 %v234, %v348
      %350 = vmatprep.mubr.bf16.mxu0 0
      %351 = vmatmul.mubr.bf16.gmra.mrb[0].mxu0 %v299
      %v352 = vpop.f32.mrb[0].mxu0
      %v353 = vadd.f32 %v239, %v352
      %v354 = vpop.f32.mrb[0].mxu0
      %v355 = vadd.f32 %v239, %v354
      %v356 = vpop.f32.mrb[0].mxu0
      %v357 = vpop.f32.mrb[0].mxu0
      %358 = vdwg.mxu0
      %359 = vst [vmem:[%s208] sm:$0xff] %v343
      %360 = vst [vmem:[%s208 + $0x8] sm:$0xff] %v345
      %361 = vst [vmem:[%s208 + $0x10] sm:$0xff] %v347
      %362 = vst [vmem:[%s208 + $0x18] sm:$0xff] %v349
      %363 = vst [vmem:[%s208 + $0x20] sm:$0xff] %v353
      %364 = vst [vmem:[%s208 + $0x28] sm:$0xff] %v355
      %s365 = smul.u32 2, %s19
      %p366 = scmp.lt.s32.totalorder %s18, 1
      %s367 = scalar_select %p366, %s18, 1
      %p368 = scmp.lt.s32.totalorder %s365, 1
      %s369 = scalar_select %p368, %s365, 1
      %s370 = smul.addr %s367, 6
      %s371 = sadd.s32 %s369, %s370
      %s372 = smul.addr %s371, 8
      %s373 = scalar_lea.vmem %s3, %s372
      // Predicated region
      $region33: #{hrnet_forward.15} parent=31 // pred_check
        %p374 = pneg %p116
      $region34: #{hrnet_forward.15} parent=31 // pred_check_branch
        %376 = sbr.rel (%p374) target = $region36
      $region35: #{hrnet_forward.15} parent=31 // pred_region
        %s377 = smul.u32 2, %s19
      $region36: #{hrnet_forward.15} parent=31 // pred_fallthru
        _
    $region32: #{hrnet_forward.15} parent=5 // pred_fallthru
      _
    %p378 = scmp.le.s32.totalorder 2, %s9
    // Predicated region
    $region37: #{hrnet_forward.15} parent=5 // pred_check
      %p379 = pneg %p378
    $region38: #{hrnet_forward.15} parent=5 // pred_check_branch
      %381 = sbr.rel (%p379) target = $region40
    $region39: #{hrnet_forward.15} parent=5 // pred_region
      %s382 = ssub.s32 %s9, 2
      // Predicated region
      $region41: #{hrnet_forward.15} parent=39 // pred_check
        %p383 = pneg %p122
      $region42: #{hrnet_forward.15} parent=39 // pred_check_branch
        %385 = sbr.rel (%p383) target = $region44
      $region43: #{hrnet_forward.15} parent=39 // pred_region
        %s386 = smul.u32 2, %s21
        %p387 = scmp.lt.s32.totalorder %s20, 1
        %s388 = scalar_select %p387, %s20, 1
        %p389 = scmp.lt.s32.totalorder %s386, 1
        %s390 = scalar_select %p389, %s386, 1
        %s391 = smul.addr %s388, 6
        %s392 = sadd.s32 %s390, %s391
        %s393 = smul.addr %s392, 8
        %s394 = scalar_lea.vmem %s3, %s393
      $region44: #{hrnet_forward.15} parent=39 // pred_fallthru
        _
    $region40: #{hrnet_forward.15} parent=5 // pred_fallthru
      _
  $region6: #{hrnet_forward.15} parent=0 // loop_footer
    %s13 = sadd.s32 1, %s9
  $region7: #{hrnet_forward.15} parent=0 // loop_footer_branch
    %8 = sbr.rel target = $region3
  $region8: #{hrnet_forward.15} parent=0 // loop_exit
    _

// kernel: hrnet_forward.19
$region0: #{hrnet_forward.19}
  #allocation0 [shape = 'u32[]', space=smem, size = 0x4, offset = 0x4, fixed_abs, tag = 'smem constant byte address 0x4 - core index']
  #allocation1 [shape = 'u32[144,128]{1,0:T(1,128)}', space=vmem, size = 0x12000, scoped, tag = 'internal scratch']
  %s0 = inlined_call_operand.vmem [shape: bf16[2,216,256], index: 0, kind: input, shape index: {}]
  %s1 = inlined_call_operand.vmem [shape: bf16[8,216], index: 1, kind: input, shape index: {}]
  %s2 = inlined_call_operand.vmem [shape: f32[8,1], index: 2, kind: input, shape index: {}]
  %s3 = inlined_call_operand.vmem [shape: f32[2,8,256], index: 3, kind: output, shape index: {}]
  %s4 = sld [smem:[#allocation0]]
  $region45: #{hrnet_forward.19} parent=0
    _
  %s6 = ssub.s32 1, %s4
  %s7 = scalar_select 0, %s6, %s4
  loop: start=0, step=1, limit=4
  $region2: #{hrnet_forward.19} parent=0 // loop_pre_header
    _
  $region3: #{hrnet_forward.19} parent=0 // loop_header
    %s9 = sphi 0, %s13
    %p10 = scmp.ge.s32.totalorder %s9, 4
    %s16 = sphi 0, %s28
    %s17 = sphi 0, %s24
    %s18 = sphi 0, %s16
    %s19 = sphi 0, %s17
    %s20 = sphi 0, %s18
    %s21 = sphi 0, %s19
    %s33 = sphi 0, %s35
    %s36 = sphi 0, %s33
    %s37 = sphi 0, %s36
    %s53 = sphi 0, %s37
    %s57 = sphi 0, %s57
    %s59 = sphi 0, %s57
    %s60 = sphi 0, %s59
    %s74 = sphi 0, %s60
    %s78 = sphi 0, %s78
    %s80 = sphi 0, %s78
    %s81 = sphi 0, %s80
    %s95 = sphi 0, %s81
    %s103 = sphi 0, %s105
    %s106 = sphi 0, %s103
    %s107 = sphi 0, %s106
    %s123 = sphi 0, %s107
  $region4: #{hrnet_forward.19} parent=0 // loop_header_branch
    %12 = sbr.rel (%p10) target = $region8
  $region5: #{hrnet_forward.19} parent=0 // loop_body
    %s14 = ssub.s32 %s9, 1
    %s15 = ssub.s32 %s9, 2
    %s22 = sadd.s32 1, %s17
    %p23 = scmp.ge.s32.totalorder %s22, 1
    %s24 = scalar_select %p23, 0, %s22
    %s25 = sadd.s32 1, %s16
    %s26 = scalar_select %p23, %s25, %s16
    %p27 = scmp.ge.s32.totalorder %s26, 2
    %s28 = scalar_select %p27, 0, %s26
    %s29 = ssub.s32 %s16, %s28
    %s30 = ssub.s32 %s17, %s24
    %s31 = sor.u32 %s29, %s30
    %p32 = scmp.eq.s32.totalorder %s31, 0
    %s34 = sadd.s32 %s33, 1
    %s35 = scalar_select %p32, %s33, %s34
    %p38 = pneg %p32
    %p39 = scmp.eq.s32.totalorder %s9, 1
    %p40 = por %p38, %p39
    %p41 = scmp.ne.s32.totalorder %s33, %s36
    %p42 = scmp.eq.s32.totalorder %s9, 0
    %p43 = por %p41, %p42
    %p44 = scmp.ne.s32.totalorder %s33, %s36
    %p45 = scmp.eq.s32.totalorder %s14, 1
    %p46 = por %p44, %p45
    %p47 = scmp.ne.s32.totalorder %s36, %s37
    %p48 = scmp.eq.s32.totalorder %s14, 0
    %p49 = por %p47, %p48
    %p50 = scmp.ne.s32.totalorder %s36, %s37
    %p51 = scmp.eq.s32.totalorder %s15, 1
    %p52 = por %p50, %p51
    %p54 = scmp.ne.s32.totalorder %s37, %s53
    %p55 = scmp.eq.s32.totalorder %s15, 0
    %p56 = por %p54, %p55
    %s58 = sadd.s32 %s57, 1
    %p61 = scmp.eq.s32.totalorder %s9, 1
    %p62 = scmp.ne.s32.totalorder %s57, %s59
    %p63 = scmp.eq.s32.totalorder %s9, 0
    %p64 = por %p62, %p63
    %p65 = scmp.ne.s32.totalorder %s57, %s59
    %p66 = scmp.eq.s32.totalorder %s14, 1
    %p67 = por %p65, %p66
    %p68 = scmp.ne.s32.totalorder %s59, %s60
    %p69 = scmp.eq.s32.totalorder %s14, 0
    %p70 = por %p68, %p69
    %p71 = scmp.ne.s32.totalorder %s59, %s60
    %p72 = scmp.eq.s32.totalorder %s15, 1
    %p73 = por %p71, %p72
    %p75 = scmp.ne.s32.totalorder %s60, %s74
    %p76 = scmp.eq.s32.totalorder %s15, 0
    %p77 = por %p75, %p76
    %s79 = sadd.s32 %s78, 1
    %p82 = scmp.eq.s32.totalorder %s9, 1
    %p83 = scmp.ne.s32.totalorder %s78, %s80
    %p84 = scmp.eq.s32.totalorder %s9, 0
    %p85 = por %p83, %p84
    %p86 = scmp.ne.s32.totalorder %s78, %s80
    %p87 = scmp.eq.s32.totalorder %s14, 1
    %p88 = por %p86, %p87
    %p89 = scmp.ne.s32.totalorder %s80, %s81
    %p90 = scmp.eq.s32.totalorder %s14, 0
    %p91 = por %p89, %p90
    %p92 = scmp.ne.s32.totalorder %s80, %s81
    %p93 = scmp.eq.s32.totalorder %s15, 1
    %p94 = por %p92, %p93
    %p96 = scmp.ne.s32.totalorder %s81, %s95
    %p97 = scmp.eq.s32.totalorder %s15, 0
    %p98 = por %p96, %p97
    %s99 = ssub.s32 %s16, %s28
    %s100 = ssub.s32 %s17, %s24
    %s101 = sor.u32 %s99, %s100
    %p102 = scmp.eq.s32.totalorder %s101, 0
    %s104 = sadd.s32 %s103, 1
    %s105 = scalar_select %p102, %s103, %s104
    %p108 = pneg %p102
    %p109 = scmp.eq.s32.totalorder %s9, 1
    %p110 = por %p108, %p109
    %p111 = scmp.ne.s32.totalorder %s103, %s106
    %p112 = scmp.eq.s32.totalorder %s9, 0
    %p113 = por %p111, %p112
    %p114 = scmp.ne.s32.totalorder %s103, %s106
    %p115 = scmp.eq.s32.totalorder %s14, 1
    %p116 = por %p114, %p115
    %p117 = scmp.ne.s32.totalorder %s106, %s107
    %p118 = scmp.eq.s32.totalorder %s14, 0
    %p119 = por %p117, %p118
    %p120 = scmp.ne.s32.totalorder %s106, %s107
    %p121 = scmp.eq.s32.totalorder %s15, 1
    %p122 = por %p120, %p121
    %p124 = scmp.ne.s32.totalorder %s107, %s123
    %p125 = scmp.eq.s32.totalorder %s15, 0
    %p126 = por %p124, %p125
    %p127 = scmp.le.s32.totalorder 1, %s9
    %p128 = scmp.lt.s32.totalorder %s9, 3
    %p129 = pnand %p127, %p128
    %p130 = pneg %p129
    // Predicated region
    $region9: #{hrnet_forward.19} parent=5 // pred_check
      _
    $region10: #{hrnet_forward.19} parent=5 // pred_check_branch
      %132 = sbr.rel (%p129) target = $region12
    $region11: #{hrnet_forward.19} parent=5 // pred_region
      %s133 = ssub.s32 %s9, 1
      // Predicated region
      $region13: #{hrnet_forward.19} parent=11 // pred_check
        %p134 = pneg %p70
      $region14: #{hrnet_forward.19} parent=11 // pred_check_branch
        %136 = sbr.rel (%p134) target = $region16
      $region15: #{hrnet_forward.19} parent=11 // pred_region
        _
      $region16: #{hrnet_forward.19} parent=11 // pred_fallthru
        _
      // Predicated region
      $region17: #{hrnet_forward.19} parent=11 // pred_check
        %p137 = pneg %p91
      $region18: #{hrnet_forward.19} parent=11 // pred_check_branch
        %139 = sbr.rel (%p137) target = $region20
      $region19: #{hrnet_forward.19} parent=11 // pred_region
        _
      $region20: #{hrnet_forward.19} parent=11 // pred_fallthru
        _
    $region12: #{hrnet_forward.19} parent=5 // pred_fallthru
      _
    %p140 = scmp.lt.s32.totalorder %s9, 2
    // Predicated region
    $region21: #{hrnet_forward.19} parent=5 // pred_check
      %p141 = pneg %p140
    $region22: #{hrnet_forward.19} parent=5 // pred_check_branch
      %143 = sbr.rel (%p141) target = $region24
    $region23: #{hrnet_forward.19} parent=5 // pred_region
      // Predicated region
      $region25: #{hrnet_forward.19} parent=23 // pred_check
        %p144 = pneg %p43
      $region26: #{hrnet_forward.19} parent=23 // pred_check_branch
        %146 = sbr.rel (%p144) target = $region28
      $region27: #{hrnet_forward.19} parent=23 // pred_region
        %s147 = smul.u32 2, %s17
        %p148 = scmp.lt.s32.totalorder %s16, 1
        %s149 = scalar_select %p148, %s16, 1
        %p150 = scmp.lt.s32.totalorder %s147, 1
        %s151 = scalar_select %p150, %s147, 1
        %s152 = smul.addr %s149, 54
        %s153 = sadd.s32 %s151, %s152
        %s154 = smul.addr %s153, 4
        %s155 = scalar_lea.vmem %s0, %s154
        %s156 = smul.u32 2, %s17
      $region28: #{hrnet_forward.19} parent=23 // pred_fallthru
        _
    $region24: #{hrnet_forward.19} parent=5 // pred_fallthru
      _
    %p157 = scmp.le.s32.totalorder 1, %s9
    %p158 = scmp.lt.s32.totalorder %s9, 3
    %p159 = pnand %p157, %p158
    %p160 = pneg %p159
    // Predicated region
    $region29: #{hrnet_forward.19} parent=5 // pred_check
      _
    $region30: #{hrnet_forward.19} parent=5 // pred_check_branch
      %162 = sbr.rel (%p159) target = $region32
    $region31: #{hrnet_forward.19} parent=5 // pred_region
      %s163 = ssub.s32 %s9, 1
      %s164 = smul.u32 2, %s19
      %p165 = scmp.lt.s32.totalorder %s18, 1
      %s166 = scalar_select %p165, %s18, 1
      %p167 = scmp.lt.s32.totalorder %s164, 1
      %s168 = scalar_select %p167, %s164, 1
      %s169 = smul.addr %s166, 54
      %s170 = sadd.s32 %s168, %s169
      %s171 = smul.addr %s170, 4
      %s172 = scalar_lea.vmem %s0, %s171
      %p173 = pneg %p49
      %p174 = pneg %p46
      %p175 = pneg %p70
      %p176 = pneg %p67
      %p177 = pneg %p91
      %p178 = pneg %p88
      %p179 = pneg %p119
      %p180 = pneg %p116
      %s181 = smul.u32 2, %s19
      %p182 = scmp.lt.s32.totalorder %s18, 1
      %s183 = scalar_select %p182, %s18, 1
      %p184 = scmp.lt.s32.totalorder %s181, 1
      %s185 = scalar_select %p184, %s181, 1
      %s186 = smul.addr %s183, 2
      %s187 = sadd.s32 %s185, %s186
      %s188 = smul.addr %s187, 8
      %s189 = scalar_lea.vmem %s3, %s188
      %s190 = smul.u32 2, %s19
      %p191 = scmp.lt.s32.totalorder %s18, 1
      %s192 = scalar_select %p191, %s18, 1
      %p193 = scmp.lt.s32.totalorder %s190, 1
      %s194 = scalar_select %p193, %s190, 1
      %s195 = smul.addr %s192, 54
      %s196 = sadd.s32 %s194, %s195
      %s197 = smul.addr %s196, 4
      %s198 = scalar_lea.vmem %s0, %s197
      %s199 = smul.u32 2, %s19
      %s200 = smul.u32 2, %s19
      %p201 = scmp.lt.s32.totalorder %s18, 1
      %s202 = scalar_select %p201, %s18, 1
      %p203 = scmp.lt.s32.totalorder %s200, 1
      %s204 = scalar_select %p203, %s200, 1
      %s205 = smul.addr %s202, 2
      %s206 = sadd.s32 %s204, %s205
      %s207 = smul.addr %s206, 8
      %s208 = scalar_lea.vmem %s3, %s207
      %s209 = smul.u32 2, %s19
      %v211 = vld [vmem:[%s1] sm:$0xff]
      %v212 = vld [vmem:[%s198] sm:$0xff]
      %v213 = vld [vmem:[%s198 + $0x8] sm:$0xff]
      %v214 = vld [vmem:[%s198 + $0x10] sm:$0xff]
      %v215 = vld [vmem:[%s198 + $0x18] sm:$0xff]
      %v216 = vld [vmem:[%s198 + $0x20] sm:$0xff]
      %v217 = vld [vmem:[%s198 + $0x28] sm:$0xff]
      %v218 = vld [vmem:[%s198 + $0x30] sm:$0xff]
      %v219 = vld [vmem:[%s198 + $0x38] sm:$0xff]
      %v220 = vld [vmem:[%s198 + $0x40] sm:$0xff]
      %v221 = vld [vmem:[%s198 + $0x48] sm:$0xff]
      %v222 = vld [vmem:[%s198 + $0x50] sm:$0xff]
      %v223 = vld [vmem:[%s198 + $0x58] sm:$0xff]
      %v224 = vld [vmem:[%s198 + $0x60] sm:$0xff]
      %v225 = vld [vmem:[%s198 + $0x68] sm:$0xff]
      %v226 = vld [vmem:[%s198 + $0x70] sm:$0xff]
      %v227 = vld [vmem:[%s198 + $0x78] sm:$0xff]
      %v228 = vld [vmem:[%s198 + $0x80] sm:$0xff]
      %v229 = vld [vmem:[%s198 + $0x88] sm:$0xff]
      %v230 = vld [vmem:[%s198 + $0x90] sm:$0xff]
      %v231 = vld [vmem:[%s198 + $0x98] sm:$0xff]
      %v232 = vld [vmem:[%s198 + $0xa0] sm:$0xff]
      %v233 = vld [vmem:[%s198 + $0xa8] sm:$0xff]
      %v234 = vld [vmem:[%s198 + $0xb0] sm:$0xff]
      %v235 = vld [vmem:[%s198 + $0xb8] sm:$0xff]
      %v236 = vld [vmem:[%s198 + $0xc0] sm:$0xff]
      %v237 = vld [vmem:[%s198 + $0xc8] sm:$0xff]
      %v238 = vld [vmem:[%s198 + $0xd0] sm:$0xff]
      %v239 = vld [vmem:[%s2] sm:$0xff]
      %241 = vset.pattern.permute.xlu0 0
      %242 = vperm.xlu0 %241, %v239
      %v243 = vpop.permute.xlu0 %242
      %v246 = vunpack.c.l.b16 %v211
      %v247 = vunpack.c.h.b16 %v211
      %v248 = vpack.c.b16 %v246, %v246
      %v249 = vpack.c.b16 %v247, %v247
      %v278 = vunpack.c.l.b16 %v212
      %v279 = vunpack.c.h.b16 %v212
      %v280 = vunpack.c.l.b16 %v213
      %v281 = vunpack.c.h.b16 %v213
      %v282 = vunpack.c.l.b16 %v214
      %v283 = vunpack.c.h.b16 %v214
      %v284 = vunpack.c.l.b16 %v215
      %v285 = vunpack.c.h.b16 %v215
      %v286 = vunpack.c.l.b16 %v216
      %v287 = vunpack.c.h.b16 %v216
      %v288 = vunpack.c.l.b16 %v217
      %v289 = vunpack.c.h.b16 %v217
      %v290 = vunpack.c.l.b16 %v218
      %v291 = vunpack.c.h.b16 %v218
      %v292 = vunpack.c.l.b16 %v219
      %v293 = vunpack.c.h.b16 %v219
      %v294 = vunpack.c.l.b16 %v220
      %v295 = vunpack.c.h.b16 %v220
      %v296 = vunpack.c.l.b16 %v221
      %v297 = vunpack.c.h.b16 %v221
      %v298 = vunpack.c.l.b16 %v222
      %v299 = vunpack.c.h.b16 %v222
      %v300 = vunpack.c.l.b16 %v223
      %v301 = vunpack.c.h.b16 %v223
      %v302 = vunpack.c.l.b16 %v224
      %v303 = vunpack.c.h.b16 %v224
      %v304 = vunpack.c.l.b16 %v225
      %v305 = vunpack.c.h.b16 %v225
      %v306 = vunpack.c.l.b16 %v226
      %v307 = vunpack.c.h.b16 %v226
      %v308 = vunpack.c.l.b16 %v227
      %v309 = vunpack.c.h.b16 %v227
      %v310 = vunpack.c.l.b16 %v228
      %v311 = vunpack.c.h.b16 %v228
      %v312 = vunpack.c.l.b16 %v229
      %v313 = vunpack.c.h.b16 %v229
      %v314 = vunpack.c.l.b16 %v230
      %v315 = vunpack.c.h.b16 %v230
      %v316 = vunpack.c.l.b16 %v231
      %v317 = vunpack.c.h.b16 %v231
      %v318 = vunpack.c.l.b16 %v232
      %v319 = vunpack.c.h.b16 %v232
      %v320 = vunpack.c.l.b16 %v233
      %v321 = vunpack.c.h.b16 %v233
      %v322 = vunpack.c.l.b16 %v234
      %v323 = vunpack.c.h.b16 %v234
      %v324 = vunpack.c.l.b16 %v235
      %v325 = vunpack.c.h.b16 %v235
      %v326 = vunpack.c.l.b16 %v236
      %v327 = vunpack.c.h.b16 %v236
      %v328 = vunpack.c.l.b16 %v237
      %v329 = vunpack.c.h.b16 %v237
      %v330 = vunpack.c.l.b16 %v238
      %v331 = vunpack.c.h.b16 %v238
      %v332 = vpack.c.b16 %v280, %v278
      %v333 = vpack.c.b16 %v281, %v279
      %v334 = vpack.c.b16 %v284, %v282
      %v335 = vpack.c.b16 %v285, %v283
      %v336 = vpack.c.b16 %v288, %v286
      %v337 = vpack.c.b16 %v289, %v287
      %v338 = vpack.c.b16 %v292, %v290
      %v339 = vpack.c.b16 %v293, %v291
      %v340 = vpack.c.b16 %v296, %v294
      %v341 = vpack.c.b16 %v297, %v295
      %v342 = vpack.c.b16 %v300, %v298
      %v343 = vpack.c.b16 %v301, %v299
      %v344 = vpack.c.b16 %v304, %v302
      %v345 = vpack.c.b16 %v305, %v303
      %v346 = vpack.c.b16 %v308, %v306
      %v347 = vpack.c.b16 %v309, %v307
      %v348 = vpack.c.b16 %v312, %v310
      %v349 = vpack.c.b16 %v313, %v311
      %v350 = vpack.c.b16 %v316, %v314
      %v351 = vpack.c.b16 %v317, %v315
      %v352 = vpack.c.b16 %v320, %v318
      %v353 = vpack.c.b16 %v321, %v319
      %v354 = vpack.c.b16 %v324, %v322
      %v355 = vpack.c.b16 %v325, %v323
      %v356 = vpack.c.b16 %v328, %v326
      %v357 = vpack.c.b16 %v329, %v327
      %v358 = vpack.c.b16 %v330, %v330
      %v359 = vpack.c.b16 %v331, %v331
      %vm386 = vcmask 719872
      %v388 = vsel %vm386, %v249, 0
      %vm390 = vcmask 1043456
      %v392 = vsel %vm390, %v358, 0
      %v395 = vsel %vm390, %v359, 0
      %397 = vmatprep.subr.bf16.mxu0 %v333
      %398 = vmatpush1.bf16.msra.mxu0 %v332
      %399 = vmatprep.subr.bf16.mxu0 %v335
      %400 = vmatpush1.bf16.msra.mxu0 %v334
      %401 = vmatprep.subr.bf16.mxu0 %v337
      %402 = vmatpush1.bf16.msra.mxu0 %v336
      %403 = vmatprep.subr.bf16.mxu0 %v339
      %404 = vmatpush1.bf16.msra.mxu0 %v338
      %405 = vmatprep.subr.bf16.mxu0 %v341
      %406 = vmatpush1.bf16.msra.mxu0 %v340
      %407 = vmatprep.subr.bf16.mxu0 %v343
      %408 = vmatpush1.bf16.msra.mxu0 %v342
      %409 = vmatprep.subr.bf16.mxu0 %v345
      %410 = vmatpush1.bf16.msra.mxu0 %v344
      %411 = vmatprep.subr.bf16.mxu0 %v347
      %412 = vmatpush1.bf16.msra.mxu0 %v346
      %413 = vmatprep.subr.bf16.mxu0 %v349
      %414 = vmatpush1.bf16.msra.mxu0 %v348
      %415 = vmatprep.subr.bf16.mxu0 %v351
      %416 = vmatpush1.bf16.msra.mxu0 %v350
      %417 = vmatprep.subr.bf16.mxu0 %v353
      %418 = vmatpush1.bf16.msra.mxu0 %v352
      %419 = vmatprep.subr.bf16.mxu0 %v355
      %420 = vmatpush1.bf16.msra.mxu0 %v354
      %421 = vmatprep.subr.bf16.mxu0 %v357
      %422 = vmatpush1.bf16.msra.mxu0 %v356
      %423 = vmatprep.subr.bf16.mxu0 %v395
      %424 = vmatpush1.bf16.msra.mxu0 %v392
      %425 = vmatprep.subr.bf16.mxu0 0
      %426 = vmatpush1.bf16.msra.mxu0 0
      %427 = vmatprep.subr.bf16.mxu0 0
      %428 = vmatpush1.bf16.msra.mxu0 0
      %429 = vmatprep.mubr.bf16.mxu0 %v388
      %430 = vmatmul.mubr.bf16.gmra.mrb[0].mxu0 %v248
      %v431 = vpop.f32.mrb[0].mxu0
      %v432 = vadd.f32 %v243, %v431
      %v433 = vpop.f32.mrb[0].mxu0
      %v434 = vadd.f32 %v243, %v433
      %v435 = vpop.f32.mrb[0].mxu0
      %v436 = vpop.f32.mrb[0].mxu0
      %437 = vdwg.mxu0
      %438 = vst [vmem:[%s208] sm:$0xff] %v432
      %439 = vst [vmem:[%s208 + $0x8] sm:$0xff] %v434
      %s440 = smul.u32 2, %s19
      %p441 = scmp.lt.s32.totalorder %s18, 1
      %s442 = scalar_select %p441, %s18, 1
      %p443 = scmp.lt.s32.totalorder %s440, 1
      %s444 = scalar_select %p443, %s440, 1
      %s445 = smul.addr %s442, 2
      %s446 = sadd.s32 %s444, %s445
      %s447 = smul.addr %s446, 8
      %s448 = scalar_lea.vmem %s3, %s447
      // Predicated region
      $region33: #{hrnet_forward.19} parent=31 // pred_check
        %p449 = pneg %p116
      $region34: #{hrnet_forward.19} parent=31 // pred_check_branch
        %451 = sbr.rel (%p449) target = $region36
      $region35: #{hrnet_forward.19} parent=31 // pred_region
        %s452 = smul.u32 2, %s19
      $region36: #{hrnet_forward.19} parent=31 // pred_fallthru
        _
    $region32: #{hrnet_forward.19} parent=5 // pred_fallthru
      _
    %p453 = scmp.le.s32.totalorder 2, %s9
    // Predicated region
    $region37: #{hrnet_forward.19} parent=5 // pred_check
      %p454 = pneg %p453
    $region38: #{hrnet_forward.19} parent=5 // pred_check_branch
      %456 = sbr.rel (%p454) target = $region40
    $region39: #{hrnet_forward.19} parent=5 // pred_region
      %s457 = ssub.s32 %s9, 2
      // Predicated region
      $region41: #{hrnet_forward.19} parent=39 // pred_check
        %p458 = pneg %p122
      $region42: #{hrnet_forward.19} parent=39 // pred_check_branch
        %460 = sbr.rel (%p458) target = $region44
      $region43: #{hrnet_forward.19} parent=39 // pred_region
        %s461 = smul.u32 2, %s21
        %p462 = scmp.lt.s32.totalorder %s20, 1
        %s463 = scalar_select %p462, %s20, 1
        %p464 = scmp.lt.s32.totalorder %s461, 1
        %s465 = scalar_select %p464, %s461, 1
        %s466 = smul.addr %s463, 2
        %s467 = sadd.s32 %s465, %s466
        %s468 = smul.addr %s467, 8
        %s469 = scalar_lea.vmem %s3, %s468
      $region44: #{hrnet_forward.19} parent=39 // pred_fallthru
        _
    $region40: #{hrnet_forward.19} parent=5 // pred_fallthru
      _
  $region6: #{hrnet_forward.19} parent=0 // loop_footer
    %s13 = sadd.s32 1, %s9
  $region7: #{hrnet_forward.19} parent=0 // loop_footer_branch
    %8 = sbr.rel target = $region3
  $region8: #{hrnet_forward.19} parent=0 // loop_exit
    _

// kernel: hrnet_forward.25
$region0: #{hrnet_forward.25}
  #allocation0 [shape = 'u32[]', space=smem, size = 0x4, offset = 0x4, fixed_abs, tag = 'smem constant byte address 0x4 - core index']
  #allocation1 [shape = 'u32[144,128]{1,0:T(1,128)}', space=vmem, size = 0x12000, scoped, tag = 'internal scratch']
  %s0 = inlined_call_operand.vmem [shape: bf16[2,216,256], index: 0, kind: input, shape index: {}]
  %s1 = inlined_call_operand.vmem [shape: bf16[24,216], index: 1, kind: input, shape index: {}]
  %s2 = inlined_call_operand.vmem [shape: f32[24,1], index: 2, kind: input, shape index: {}]
  %s3 = inlined_call_operand.vmem [shape: f32[2,24,256], index: 3, kind: output, shape index: {}]
  %s4 = sld [smem:[#allocation0]]
  $region45: #{hrnet_forward.25} parent=0
    _
  %s6 = ssub.s32 1, %s4
  %s7 = scalar_select 0, %s6, %s4
  loop: start=0, step=1, limit=4
  $region2: #{hrnet_forward.25} parent=0 // loop_pre_header
    _
  $region3: #{hrnet_forward.25} parent=0 // loop_header
    %s9 = sphi 0, %s13
    %p10 = scmp.ge.s32.totalorder %s9, 4
    %s16 = sphi 0, %s28
    %s17 = sphi 0, %s24
    %s18 = sphi 0, %s16
    %s19 = sphi 0, %s17
    %s20 = sphi 0, %s18
    %s21 = sphi 0, %s19
    %s33 = sphi 0, %s35
    %s36 = sphi 0, %s33
    %s37 = sphi 0, %s36
    %s53 = sphi 0, %s37
    %s57 = sphi 0, %s57
    %s59 = sphi 0, %s57
    %s60 = sphi 0, %s59
    %s74 = sphi 0, %s60
    %s78 = sphi 0, %s78
    %s80 = sphi 0, %s78
    %s81 = sphi 0, %s80
    %s95 = sphi 0, %s81
    %s103 = sphi 0, %s105
    %s106 = sphi 0, %s103
    %s107 = sphi 0, %s106
    %s123 = sphi 0, %s107
  $region4: #{hrnet_forward.25} parent=0 // loop_header_branch
    %12 = sbr.rel (%p10) target = $region8
  $region5: #{hrnet_forward.25} parent=0 // loop_body
    %s14 = ssub.s32 %s9, 1
    %s15 = ssub.s32 %s9, 2
    %s22 = sadd.s32 1, %s17
    %p23 = scmp.ge.s32.totalorder %s22, 1
    %s24 = scalar_select %p23, 0, %s22
    %s25 = sadd.s32 1, %s16
    %s26 = scalar_select %p23, %s25, %s16
    %p27 = scmp.ge.s32.totalorder %s26, 2
    %s28 = scalar_select %p27, 0, %s26
    %s29 = ssub.s32 %s16, %s28
    %s30 = ssub.s32 %s17, %s24
    %s31 = sor.u32 %s29, %s30
    %p32 = scmp.eq.s32.totalorder %s31, 0
    %s34 = sadd.s32 %s33, 1
    %s35 = scalar_select %p32, %s33, %s34
    %p38 = pneg %p32
    %p39 = scmp.eq.s32.totalorder %s9, 1
    %p40 = por %p38, %p39
    %p41 = scmp.ne.s32.totalorder %s33, %s36
    %p42 = scmp.eq.s32.totalorder %s9, 0
    %p43 = por %p41, %p42
    %p44 = scmp.ne.s32.totalorder %s33, %s36
    %p45 = scmp.eq.s32.totalorder %s14, 1
    %p46 = por %p44, %p45
    %p47 = scmp.ne.s32.totalorder %s36, %s37
    %p48 = scmp.eq.s32.totalorder %s14, 0
    %p49 = por %p47, %p48
    %p50 = scmp.ne.s32.totalorder %s36, %s37
    %p51 = scmp.eq.s32.totalorder %s15, 1
    %p52 = por %p50, %p51
    %p54 = scmp.ne.s32.totalorder %s37, %s53
    %p55 = scmp.eq.s32.totalorder %s15, 0
    %p56 = por %p54, %p55
    %s58 = sadd.s32 %s57, 1
    %p61 = scmp.eq.s32.totalorder %s9, 1
    %p62 = scmp.ne.s32.totalorder %s57, %s59
    %p63 = scmp.eq.s32.totalorder %s9, 0
    %p64 = por %p62, %p63
    %p65 = scmp.ne.s32.totalorder %s57, %s59
    %p66 = scmp.eq.s32.totalorder %s14, 1
    %p67 = por %p65, %p66
    %p68 = scmp.ne.s32.totalorder %s59, %s60
    %p69 = scmp.eq.s32.totalorder %s14, 0
    %p70 = por %p68, %p69
    %p71 = scmp.ne.s32.totalorder %s59, %s60
    %p72 = scmp.eq.s32.totalorder %s15, 1
    %p73 = por %p71, %p72
    %p75 = scmp.ne.s32.totalorder %s60, %s74
    %p76 = scmp.eq.s32.totalorder %s15, 0
    %p77 = por %p75, %p76
    %s79 = sadd.s32 %s78, 1
    %p82 = scmp.eq.s32.totalorder %s9, 1
    %p83 = scmp.ne.s32.totalorder %s78, %s80
    %p84 = scmp.eq.s32.totalorder %s9, 0
    %p85 = por %p83, %p84
    %p86 = scmp.ne.s32.totalorder %s78, %s80
    %p87 = scmp.eq.s32.totalorder %s14, 1
    %p88 = por %p86, %p87
    %p89 = scmp.ne.s32.totalorder %s80, %s81
    %p90 = scmp.eq.s32.totalorder %s14, 0
    %p91 = por %p89, %p90
    %p92 = scmp.ne.s32.totalorder %s80, %s81
    %p93 = scmp.eq.s32.totalorder %s15, 1
    %p94 = por %p92, %p93
    %p96 = scmp.ne.s32.totalorder %s81, %s95
    %p97 = scmp.eq.s32.totalorder %s15, 0
    %p98 = por %p96, %p97
    %s99 = ssub.s32 %s16, %s28
    %s100 = ssub.s32 %s17, %s24
    %s101 = sor.u32 %s99, %s100
    %p102 = scmp.eq.s32.totalorder %s101, 0
    %s104 = sadd.s32 %s103, 1
    %s105 = scalar_select %p102, %s103, %s104
    %p108 = pneg %p102
    %p109 = scmp.eq.s32.totalorder %s9, 1
    %p110 = por %p108, %p109
    %p111 = scmp.ne.s32.totalorder %s103, %s106
    %p112 = scmp.eq.s32.totalorder %s9, 0
    %p113 = por %p111, %p112
    %p114 = scmp.ne.s32.totalorder %s103, %s106
    %p115 = scmp.eq.s32.totalorder %s14, 1
    %p116 = por %p114, %p115
    %p117 = scmp.ne.s32.totalorder %s106, %s107
    %p118 = scmp.eq.s32.totalorder %s14, 0
    %p119 = por %p117, %p118
    %p120 = scmp.ne.s32.totalorder %s106, %s107
    %p121 = scmp.eq.s32.totalorder %s15, 1
    %p122 = por %p120, %p121
    %p124 = scmp.ne.s32.totalorder %s107, %s123
    %p125 = scmp.eq.s32.totalorder %s15, 0
    %p126 = por %p124, %p125
    %p127 = scmp.le.s32.totalorder 1, %s9
    %p128 = scmp.lt.s32.totalorder %s9, 3
    %p129 = pnand %p127, %p128
    %p130 = pneg %p129
    // Predicated region
    $region9: #{hrnet_forward.25} parent=5 // pred_check
      _
    $region10: #{hrnet_forward.25} parent=5 // pred_check_branch
      %132 = sbr.rel (%p129) target = $region12
    $region11: #{hrnet_forward.25} parent=5 // pred_region
      %s133 = ssub.s32 %s9, 1
      // Predicated region
      $region13: #{hrnet_forward.25} parent=11 // pred_check
        %p134 = pneg %p70
      $region14: #{hrnet_forward.25} parent=11 // pred_check_branch
        %136 = sbr.rel (%p134) target = $region16
      $region15: #{hrnet_forward.25} parent=11 // pred_region
        _
      $region16: #{hrnet_forward.25} parent=11 // pred_fallthru
        _
      // Predicated region
      $region17: #{hrnet_forward.25} parent=11 // pred_check
        %p137 = pneg %p91
      $region18: #{hrnet_forward.25} parent=11 // pred_check_branch
        %139 = sbr.rel (%p137) target = $region20
      $region19: #{hrnet_forward.25} parent=11 // pred_region
        _
      $region20: #{hrnet_forward.25} parent=11 // pred_fallthru
        _
    $region12: #{hrnet_forward.25} parent=5 // pred_fallthru
      _
    %p140 = scmp.lt.s32.totalorder %s9, 2
    // Predicated region
    $region21: #{hrnet_forward.25} parent=5 // pred_check
      %p141 = pneg %p140
    $region22: #{hrnet_forward.25} parent=5 // pred_check_branch
      %143 = sbr.rel (%p141) target = $region24
    $region23: #{hrnet_forward.25} parent=5 // pred_region
      // Predicated region
      $region25: #{hrnet_forward.25} parent=23 // pred_check
        %p144 = pneg %p43
      $region26: #{hrnet_forward.25} parent=23 // pred_check_branch
        %146 = sbr.rel (%p144) target = $region28
      $region27: #{hrnet_forward.25} parent=23 // pred_region
        %s147 = smul.u32 2, %s17
        %p148 = scmp.lt.s32.totalorder %s16, 1
        %s149 = scalar_select %p148, %s16, 1
        %p150 = scmp.lt.s32.totalorder %s147, 1
        %s151 = scalar_select %p150, %s147, 1
        %s152 = smul.addr %s149, 54
        %s153 = sadd.s32 %s151, %s152
        %s154 = smul.addr %s153, 4
        %s155 = scalar_lea.vmem %s0, %s154
        %s156 = smul.u32 2, %s17
      $region28: #{hrnet_forward.25} parent=23 // pred_fallthru
        _
    $region24: #{hrnet_forward.25} parent=5 // pred_fallthru
      _
    %p157 = scmp.le.s32.totalorder 1, %s9
    %p158 = scmp.lt.s32.totalorder %s9, 3
    %p159 = pnand %p157, %p158
    %p160 = pneg %p159
    // Predicated region
    $region29: #{hrnet_forward.25} parent=5 // pred_check
      _
    $region30: #{hrnet_forward.25} parent=5 // pred_check_branch
      %162 = sbr.rel (%p159) target = $region32
    $region31: #{hrnet_forward.25} parent=5 // pred_region
      %s163 = ssub.s32 %s9, 1
      %s164 = smul.u32 2, %s19
      %p165 = scmp.lt.s32.totalorder %s18, 1
      %s166 = scalar_select %p165, %s18, 1
      %p167 = scmp.lt.s32.totalorder %s164, 1
      %s168 = scalar_select %p167, %s164, 1
      %s169 = smul.addr %s166, 54
      %s170 = sadd.s32 %s168, %s169
      %s171 = smul.addr %s170, 4
      %s172 = scalar_lea.vmem %s0, %s171
      %p173 = pneg %p49
      %p174 = pneg %p46
      %p175 = pneg %p70
      %p176 = pneg %p67
      %p177 = pneg %p91
      %p178 = pneg %p88
      %p179 = pneg %p119
      %p180 = pneg %p116
      %s181 = smul.u32 2, %s19
      %p182 = scmp.lt.s32.totalorder %s18, 1
      %s183 = scalar_select %p182, %s18, 1
      %p184 = scmp.lt.s32.totalorder %s181, 1
      %s185 = scalar_select %p184, %s181, 1
      %s186 = smul.addr %s183, 6
      %s187 = sadd.s32 %s185, %s186
      %s188 = smul.addr %s187, 8
      %s189 = scalar_lea.vmem %s3, %s188
      %s190 = smul.u32 2, %s19
      %p191 = scmp.lt.s32.totalorder %s18, 1
      %s192 = scalar_select %p191, %s18, 1
      %p193 = scmp.lt.s32.totalorder %s190, 1
      %s194 = scalar_select %p193, %s190, 1
      %s195 = smul.addr %s192, 54
      %s196 = sadd.s32 %s194, %s195
      %s197 = smul.addr %s196, 4
      %s198 = scalar_lea.vmem %s0, %s197
      %s199 = smul.u32 2, %s19
      %s200 = smul.u32 2, %s19
      %p201 = scmp.lt.s32.totalorder %s18, 1
      %s202 = scalar_select %p201, %s18, 1
      %p203 = scmp.lt.s32.totalorder %s200, 1
      %s204 = scalar_select %p203, %s200, 1
      %s205 = smul.addr %s202, 6
      %s206 = sadd.s32 %s204, %s205
      %s207 = smul.addr %s206, 8
      %s208 = scalar_lea.vmem %s3, %s207
      %s209 = smul.u32 2, %s19
      %v211 = vld [vmem:[%s1] sm:$0xff]
      %v212 = vld [vmem:[%s1 + $0x8] sm:$0xff]
      %v213 = vld [vmem:[%s1 + $0x10] sm:$0xff]
      %v214 = vld [vmem:[%s198] sm:$0xff]
      %v215 = vld [vmem:[%s198 + $0x8] sm:$0xff]
      %v216 = vld [vmem:[%s198 + $0x10] sm:$0xff]
      %v217 = vld [vmem:[%s198 + $0x18] sm:$0xff]
      %v218 = vld [vmem:[%s198 + $0x20] sm:$0xff]
      %v219 = vld [vmem:[%s198 + $0x28] sm:$0xff]
      %v220 = vld [vmem:[%s198 + $0x30] sm:$0xff]
      %v221 = vld [vmem:[%s198 + $0x38] sm:$0xff]
      %v222 = vld [vmem:[%s198 + $0x40] sm:$0xff]
      %v223 = vld [vmem:[%s198 + $0x48] sm:$0xff]
      %v224 = vld [vmem:[%s198 + $0x50] sm:$0xff]
      %v225 = vld [vmem:[%s198 + $0x58] sm:$0xff]
      %v226 = vld [vmem:[%s198 + $0x60] sm:$0xff]
      %v227 = vld [vmem:[%s198 + $0x68] sm:$0xff]
      %v228 = vld [vmem:[%s198 + $0x70] sm:$0xff]
      %v229 = vld [vmem:[%s198 + $0x78] sm:$0xff]
      %v230 = vld [vmem:[%s198 + $0x80] sm:$0xff]
      %v231 = vld [vmem:[%s198 + $0x88] sm:$0xff]
      %v232 = vld [vmem:[%s198 + $0x90] sm:$0xff]
      %v233 = vld [vmem:[%s198 + $0x98] sm:$0xff]
      %v234 = vld [vmem:[%s198 + $0xa0] sm:$0xff]
      %v235 = vld [vmem:[%s198 + $0xa8] sm:$0xff]
      %v236 = vld [vmem:[%s198 + $0xb0] sm:$0xff]
      %v237 = vld [vmem:[%s198 + $0xb8] sm:$0xff]
      %v238 = vld [vmem:[%s198 + $0xc0] sm:$0xff]
      %v239 = vld [vmem:[%s198 + $0xc8] sm:$0xff]
      %v240 = vld [vmem:[%s198 + $0xd0] sm:$0xff]
      %v241 = vld [vmem:[%s2] sm:$0xff]
      %v242 = vld [vmem:[%s2 + $0x8] sm:$0xff]
      %v243 = vld [vmem:[%s2 + $0x10] sm:$0xff]
      %245 = vset.pattern.permute.xlu0 0
      %246 = vperm.xlu0 %245, %v241
      %v247 = vpop.permute.xlu0 %246
      %250 = vset.pattern.permute.xlu0 0
      %251 = vperm.xlu0 %250, %v242
      %v252 = vpop.permute.xlu0 %251
      %255 = vset.pattern.permute.xlu0 0
      %256 = vperm.xlu0 %255, %v243
      %v257 = vpop.permute.xlu0 %256
      %v262 = vunpack.c.l.b16 %v211
      %v263 = vunpack.c.h.b16 %v211
      %v264 = vunpack.c.l.b16 %v212
      %v265 = vunpack.c.h.b16 %v212
      %v266 = vunpack.c.l.b16 %v213
      %v267 = vunpack.c.h.b16 %v213
      %v268 = vpack.c.b16 %v264, %v262
      %v269 = vpack.c.b16 %v265, %v263
      %v270 = vpack.c.b16 %v266, %v266
      %v271 = vpack.c.b16 %v267, %v267
      %v301 = vunpack.c.l.b16 %v214
      %v302 = vunpack.c.h.b16 %v214
      %v303 = vunpack.c.l.b16 %v215
      %v304 = vunpack.c.h.b16 %v215
      %v305 = vunpack.c.l.b16 %v216
      %v306 = vunpack.c.h.b16 %v216
      %v307 = vunpack.c.l.b16 %v217
      %v308 = vunpack.c.h.b16 %v217
      %v309 = vunpack.c.l.b16 %v218
      %v310 = vunpack.c.h.b16 %v218
      %v311 = vunpack.c.l.b16 %v219
      %v312 = vunpack.c.h.b16 %v219
      %v313 = vunpack.c.l.b16 %v220
      %v314 = vunpack.c.h.b16 %v220
      %v315 = vunpack.c.l.b16 %v221
      %v316 = vunpack.c.h.b16 %v221
      %v317 = vunpack.c.l.b16 %v222
      %v318 = vunpack.c.h.b16 %v222
      %v319 = vunpack.c.l.b16 %v223
      %v320 = vunpack.c.h.b16 %v223
      %v321 = vunpack.c.l.b16 %v224
      %v322 = vunpack.c.h.b16 %v224
      %v323 = vunpack.c.l.b16 %v225
      %v324 = vunpack.c.h.b16 %v225
      %v325 = vunpack.c.l.b16 %v226
      %v326 = vunpack.c.h.b16 %v226
      %v327 = vunpack.c.l.b16 %v227
      %v328 = vunpack.c.h.b16 %v227
      %v329 = vunpack.c.l.b16 %v228
      %v330 = vunpack.c.h.b16 %v228
      %v331 = vunpack.c.l.b16 %v229
      %v332 = vunpack.c.h.b16 %v229
      %v333 = vunpack.c.l.b16 %v230
      %v334 = vunpack.c.h.b16 %v230
      %v335 = vunpack.c.l.b16 %v231
      %v336 = vunpack.c.h.b16 %v231
      %v337 = vunpack.c.l.b16 %v232
      %v338 = vunpack.c.h.b16 %v232
      %v339 = vunpack.c.l.b16 %v233
      %v340 = vunpack.c.h.b16 %v233
      %v341 = vunpack.c.l.b16 %v234
      %v342 = vunpack.c.h.b16 %v234
      %v343 = vunpack.c.l.b16 %v235
      %v344 = vunpack.c.h.b16 %v235
      %v345 = vunpack.c.l.b16 %v236
      %v346 = vunpack.c.h.b16 %v236
      %v347 = vunpack.c.l.b16 %v237
      %v348 = vunpack.c.h.b16 %v237
      %v349 = vunpack.c.l.b16 %v238
      %v350 = vunpack.c.h.b16 %v238
      %v351 = vunpack.c.l.b16 %v239
      %v352 = vunpack.c.h.b16 %v239
      %v353 = vunpack.c.l.b16 %v240
      %v354 = vunpack.c.h.b16 %v240
      %v355 = vpack.c.b16 %v303, %v301
      %v356 = vpack.c.b16 %v304, %v302
      %v357 = vpack.c.b16 %v307, %v305
      %v358 = vpack.c.b16 %v308, %v306
      %v359 = vpack.c.b16 %v311, %v309
      %v360 = vpack.c.b16 %v312, %v310
      %v361 = vpack.c.b16 %v315, %v313
      %v362 = vpack.c.b16 %v316, %v314
      %v363 = vpack.c.b16 %v319, %v317
      %v364 = vpack.c.b16 %v320, %v318
      %v365 = vpack.c.b16 %v323, %v321
      %v366 = vpack.c.b16 %v324, %v322
      %v367 = vpack.c.b16 %v327, %v325
      %v368 = vpack.c.b16 %v328, %v326
      %v369 = vpack.c.b16 %v331, %v329
      %v370 = vpack.c.b16 %v332, %v330
      %v371 = vpack.c.b16 %v335, %v333
      %v372 = vpack.c.b16 %v336, %v334
      %v373 = vpack.c.b16 %v339, %v337
      %v374 = vpack.c.b16 %v340, %v338
      %v375 = vpack.c.b16 %v343, %v341
      %v376 = vpack.c.b16 %v344, %v342
      %v377 = vpack.c.b16 %v347, %v345
      %v378 = vpack.c.b16 %v348, %v346
      %v379 = vpack.c.b16 %v351, %v349
      %v380 = vpack.c.b16 %v352, %v350
      %v381 = vpack.c.b16 %v353, %v353
      %v382 = vpack.c.b16 %v354, %v354
      %vm409 = vcmask 719872
      %v411 = vsel %vm409, %v269, 0
      %v414 = vsel %vm409, %v271, 0
      %vm416 = vcmask 1043456
      %v418 = vsel %vm416, %v381, 0
      %v421 = vsel %vm416, %v382, 0
      %423 = vmatprep.subr.bf16.mxu0 %v356
      %424 = vmatpush1.bf16.msra.mxu0 %v355
      %425 = vmatprep.subr.bf16.mxu0 %v358
      %426 = vmatpush1.bf16.msra.mxu0 %v357
      %427 = vmatprep.subr.bf16.mxu0 %v360
      %428 = vmatpush1.bf16.msra.mxu0 %v359
      %429 = vmatprep.subr.bf16.mxu0 %v362
      %430 = vmatpush1.bf16.msra.mxu0 %v361
      %431 = vmatprep.subr.bf16.mxu0 %v364
      %432 = vmatpush1.bf16.msra.mxu0 %v363
      %433 = vmatprep.subr.bf16.mxu0 %v366
      %434 = vmatpush1.bf16.msra.mxu0 %v365
      %435 = vmatprep.subr.bf16.mxu0 %v368
      %436 = vmatpush1.bf16.msra.mxu0 %v367
      %437 = vmatprep.subr.bf16.mxu0 %v370
      %438 = vmatpush1.bf16.msra.mxu0 %v369
      %439 = vmatprep.subr.bf16.mxu0 %v372
      %440 = vmatpush1.bf16.msra.mxu0 %v371
      %441 = vmatprep.subr.bf16.mxu0 %v374
      %442 = vmatpush1.bf16.msra.mxu0 %v373
      %443 = vmatprep.subr.bf16.mxu0 %v376
      %444 = vmatpush1.bf16.msra.mxu0 %v375
      %445 = vmatprep.subr.bf16.mxu0 %v378
      %446 = vmatpush1.bf16.msra.mxu0 %v377
      %447 = vmatprep.subr.bf16.mxu0 %v380
      %448 = vmatpush1.bf16.msra.mxu0 %v379
      %449 = vmatprep.subr.bf16.mxu0 %v421
      %450 = vmatpush1.bf16.msra.mxu0 %v418
      %451 = vmatprep.subr.bf16.mxu0 0
      %452 = vmatpush1.bf16.msra.mxu0 0
      %453 = vmatprep.subr.bf16.mxu0 0
      %454 = vmatpush1.bf16.msra.mxu0 0
      %455 = vmatprep.mubr.bf16.mxu0 %v411
      %456 = vmatmul.mubr.bf16.gmra.mrb[0].mxu0 %v268
      %v457 = vpop.f32.mrb[0].mxu0
      %v458 = vadd.f32 %v247, %v457
      %v459 = vpop.f32.mrb[0].mxu0
      %v460 = vadd.f32 %v247, %v459
      %v461 = vpop.f32.mrb[0].mxu0
      %v462 = vadd.f32 %v252, %v461
      %v463 = vpop.f32.mrb[0].mxu0
      %v464 = vadd.f32 %v252, %v463
      %465 = vmatprep.mubr.bf16.mxu0 %v414
      %466 = vmatmul.mubr.bf16.gmra.mrb[0].mxu0 %v270
      %v467 = vpop.f32.mrb[0].mxu0
      %v468 = vadd.f32 %v257, %v467
      %v469 = vpop.f32.mrb[0].mxu0
      %v470 = vadd.f32 %v257, %v469
      %v471 = vpop.f32.mrb[0].mxu0
      %v472 = vpop.f32.mrb[0].mxu0
      %473 = vdwg.mxu0
      %474 = vst [vmem:[%s208] sm:$0xff] %v458
      %475 = vst [vmem:[%s208 + $0x8] sm:$0xff] %v460
      %476 = vst [vmem:[%s208 + $0x10] sm:$0xff] %v462
      %477 = vst [vmem:[%s208 + $0x18] sm:$0xff] %v464
      %478 = vst [vmem:[%s208 + $0x20] sm:$0xff] %v468
      %479 = vst [vmem:[%s208 + $0x28] sm:$0xff] %v470
      %s480 = smul.u32 2, %s19
      %p481 = scmp.lt.s32.totalorder %s18, 1
      %s482 = scalar_select %p481, %s18, 1
      %p483 = scmp.lt.s32.totalorder %s480, 1
      %s484 = scalar_select %p483, %s480, 1
      %s485 = smul.addr %s482, 6
      %s486 = sadd.s32 %s484, %s485
      %s487 = smul.addr %s486, 8
      %s488 = scalar_lea.vmem %s3, %s487
      // Predicated region
      $region33: #{hrnet_forward.25} parent=31 // pred_check
        %p489 = pneg %p116
      $region34: #{hrnet_forward.25} parent=31 // pred_check_branch
        %491 = sbr.rel (%p489) target = $region36
      $region35: #{hrnet_forward.25} parent=31 // pred_region
        %s492 = smul.u32 2, %s19
      $region36: #{hrnet_forward.25} parent=31 // pred_fallthru
        _
    $region32: #{hrnet_forward.25} parent=5 // pred_fallthru
      _
    %p493 = scmp.le.s32.totalorder 2, %s9
    // Predicated region
    $region37: #{hrnet_forward.25} parent=5 // pred_check
      %p494 = pneg %p493
    $region38: #{hrnet_forward.25} parent=5 // pred_check_branch
      %496 = sbr.rel (%p494) target = $region40
    $region39: #{hrnet_forward.25} parent=5 // pred_region
      %s497 = ssub.s32 %s9, 2
      // Predicated region
      $region41: #{hrnet_forward.25} parent=39 // pred_check
        %p498 = pneg %p122
      $region42: #{hrnet_forward.25} parent=39 // pred_check_branch
        %500 = sbr.rel (%p498) target = $region44
      $region43: #{hrnet_forward.25} parent=39 // pred_region
        %s501 = smul.u32 2, %s21
        %p502 = scmp.lt.s32.totalorder %s20, 1
        %s503 = scalar_select %p502, %s20, 1
        %p504 = scmp.lt.s32.totalorder %s501, 1
        %s505 = scalar_select %p504, %s501, 1
        %s506 = smul.addr %s503, 6
        %s507 = sadd.s32 %s505, %s506
        %s508 = smul.addr %s507, 8
        %s509 = scalar_lea.vmem %s3, %s508
      $region44: #{hrnet_forward.25} parent=39 // pred_fallthru
        _
    $region40: #{hrnet_forward.25} parent=5 // pred_fallthru
      _
  $region6: #{hrnet_forward.25} parent=0 // loop_footer
    %s13 = sadd.s32 1, %s9
  $region7: #{hrnet_forward.25} parent=0 // loop_footer_branch
    %8 = sbr.rel target = $region3
  $region8: #{hrnet_forward.25} parent=0 // loop_exit
    _

// kernel: hrnet_forward.26
$region0: #{hrnet_forward.26}
  #allocation0 [shape = 'u32[]', space=smem, size = 0x4, offset = 0x4, fixed_abs, tag = 'smem constant byte address 0x4 - core index']
  #allocation1 [shape = 'u32[144,128]{1,0:T(1,128)}', space=vmem, size = 0x12000, scoped, tag = 'internal scratch']
  %s0 = inlined_call_operand.vmem [shape: bf16[2,216,256], index: 0, kind: input, shape index: {}]
  %s1 = inlined_call_operand.vmem [shape: bf16[8,216], index: 1, kind: input, shape index: {}]
  %s2 = inlined_call_operand.vmem [shape: f32[8,1], index: 2, kind: input, shape index: {}]
  %s3 = inlined_call_operand.vmem [shape: f32[2,8,256], index: 3, kind: output, shape index: {}]
  %s4 = sld [smem:[#allocation0]]
  $region45: #{hrnet_forward.26} parent=0
    _
  %s6 = ssub.s32 1, %s4
  %s7 = scalar_select 0, %s6, %s4
  loop: start=0, step=1, limit=4
  $region2: #{hrnet_forward.26} parent=0 // loop_pre_header
    _
  $region3: #{hrnet_forward.26} parent=0 // loop_header
    %s9 = sphi 0, %s13
    %p10 = scmp.ge.s32.totalorder %s9, 4
    %s16 = sphi 0, %s28
    %s17 = sphi 0, %s24
    %s18 = sphi 0, %s16
    %s19 = sphi 0, %s17
    %s20 = sphi 0, %s18
    %s21 = sphi 0, %s19
    %s33 = sphi 0, %s35
    %s36 = sphi 0, %s33
    %s37 = sphi 0, %s36
    %s53 = sphi 0, %s37
    %s57 = sphi 0, %s57
    %s59 = sphi 0, %s57
    %s60 = sphi 0, %s59
    %s74 = sphi 0, %s60
    %s78 = sphi 0, %s78
    %s80 = sphi 0, %s78
    %s81 = sphi 0, %s80
    %s95 = sphi 0, %s81
    %s103 = sphi 0, %s105
    %s106 = sphi 0, %s103
    %s107 = sphi 0, %s106
    %s123 = sphi 0, %s107
  $region4: #{hrnet_forward.26} parent=0 // loop_header_branch
    %12 = sbr.rel (%p10) target = $region8
  $region5: #{hrnet_forward.26} parent=0 // loop_body
    %s14 = ssub.s32 %s9, 1
    %s15 = ssub.s32 %s9, 2
    %s22 = sadd.s32 1, %s17
    %p23 = scmp.ge.s32.totalorder %s22, 1
    %s24 = scalar_select %p23, 0, %s22
    %s25 = sadd.s32 1, %s16
    %s26 = scalar_select %p23, %s25, %s16
    %p27 = scmp.ge.s32.totalorder %s26, 2
    %s28 = scalar_select %p27, 0, %s26
    %s29 = ssub.s32 %s16, %s28
    %s30 = ssub.s32 %s17, %s24
    %s31 = sor.u32 %s29, %s30
    %p32 = scmp.eq.s32.totalorder %s31, 0
    %s34 = sadd.s32 %s33, 1
    %s35 = scalar_select %p32, %s33, %s34
    %p38 = pneg %p32
    %p39 = scmp.eq.s32.totalorder %s9, 1
    %p40 = por %p38, %p39
    %p41 = scmp.ne.s32.totalorder %s33, %s36
    %p42 = scmp.eq.s32.totalorder %s9, 0
    %p43 = por %p41, %p42
    %p44 = scmp.ne.s32.totalorder %s33, %s36
    %p45 = scmp.eq.s32.totalorder %s14, 1
    %p46 = por %p44, %p45
    %p47 = scmp.ne.s32.totalorder %s36, %s37
    %p48 = scmp.eq.s32.totalorder %s14, 0
    %p49 = por %p47, %p48
    %p50 = scmp.ne.s32.totalorder %s36, %s37
    %p51 = scmp.eq.s32.totalorder %s15, 1
    %p52 = por %p50, %p51
    %p54 = scmp.ne.s32.totalorder %s37, %s53
    %p55 = scmp.eq.s32.totalorder %s15, 0
    %p56 = por %p54, %p55
    %s58 = sadd.s32 %s57, 1
    %p61 = scmp.eq.s32.totalorder %s9, 1
    %p62 = scmp.ne.s32.totalorder %s57, %s59
    %p63 = scmp.eq.s32.totalorder %s9, 0
    %p64 = por %p62, %p63
    %p65 = scmp.ne.s32.totalorder %s57, %s59
    %p66 = scmp.eq.s32.totalorder %s14, 1
    %p67 = por %p65, %p66
    %p68 = scmp.ne.s32.totalorder %s59, %s60
    %p69 = scmp.eq.s32.totalorder %s14, 0
    %p70 = por %p68, %p69
    %p71 = scmp.ne.s32.totalorder %s59, %s60
    %p72 = scmp.eq.s32.totalorder %s15, 1
    %p73 = por %p71, %p72
    %p75 = scmp.ne.s32.totalorder %s60, %s74
    %p76 = scmp.eq.s32.totalorder %s15, 0
    %p77 = por %p75, %p76
    %s79 = sadd.s32 %s78, 1
    %p82 = scmp.eq.s32.totalorder %s9, 1
    %p83 = scmp.ne.s32.totalorder %s78, %s80
    %p84 = scmp.eq.s32.totalorder %s9, 0
    %p85 = por %p83, %p84
    %p86 = scmp.ne.s32.totalorder %s78, %s80
    %p87 = scmp.eq.s32.totalorder %s14, 1
    %p88 = por %p86, %p87
    %p89 = scmp.ne.s32.totalorder %s80, %s81
    %p90 = scmp.eq.s32.totalorder %s14, 0
    %p91 = por %p89, %p90
    %p92 = scmp.ne.s32.totalorder %s80, %s81
    %p93 = scmp.eq.s32.totalorder %s15, 1
    %p94 = por %p92, %p93
    %p96 = scmp.ne.s32.totalorder %s81, %s95
    %p97 = scmp.eq.s32.totalorder %s15, 0
    %p98 = por %p96, %p97
    %s99 = ssub.s32 %s16, %s28
    %s100 = ssub.s32 %s17, %s24
    %s101 = sor.u32 %s99, %s100
    %p102 = scmp.eq.s32.totalorder %s101, 0
    %s104 = sadd.s32 %s103, 1
    %s105 = scalar_select %p102, %s103, %s104
    %p108 = pneg %p102
    %p109 = scmp.eq.s32.totalorder %s9, 1
    %p110 = por %p108, %p109
    %p111 = scmp.ne.s32.totalorder %s103, %s106
    %p112 = scmp.eq.s32.totalorder %s9, 0
    %p113 = por %p111, %p112
    %p114 = scmp.ne.s32.totalorder %s103, %s106
    %p115 = scmp.eq.s32.totalorder %s14, 1
    %p116 = por %p114, %p115
    %p117 = scmp.ne.s32.totalorder %s106, %s107
    %p118 = scmp.eq.s32.totalorder %s14, 0
    %p119 = por %p117, %p118
    %p120 = scmp.ne.s32.totalorder %s106, %s107
    %p121 = scmp.eq.s32.totalorder %s15, 1
    %p122 = por %p120, %p121
    %p124 = scmp.ne.s32.totalorder %s107, %s123
    %p125 = scmp.eq.s32.totalorder %s15, 0
    %p126 = por %p124, %p125
    %p127 = scmp.le.s32.totalorder 1, %s9
    %p128 = scmp.lt.s32.totalorder %s9, 3
    %p129 = pnand %p127, %p128
    %p130 = pneg %p129
    // Predicated region
    $region9: #{hrnet_forward.26} parent=5 // pred_check
      _
    $region10: #{hrnet_forward.26} parent=5 // pred_check_branch
      %132 = sbr.rel (%p129) target = $region12
    $region11: #{hrnet_forward.26} parent=5 // pred_region
      %s133 = ssub.s32 %s9, 1
      // Predicated region
      $region13: #{hrnet_forward.26} parent=11 // pred_check
        %p134 = pneg %p70
      $region14: #{hrnet_forward.26} parent=11 // pred_check_branch
        %136 = sbr.rel (%p134) target = $region16
      $region15: #{hrnet_forward.26} parent=11 // pred_region
        _
      $region16: #{hrnet_forward.26} parent=11 // pred_fallthru
        _
      // Predicated region
      $region17: #{hrnet_forward.26} parent=11 // pred_check
        %p137 = pneg %p91
      $region18: #{hrnet_forward.26} parent=11 // pred_check_branch
        %139 = sbr.rel (%p137) target = $region20
      $region19: #{hrnet_forward.26} parent=11 // pred_region
        _
      $region20: #{hrnet_forward.26} parent=11 // pred_fallthru
        _
    $region12: #{hrnet_forward.26} parent=5 // pred_fallthru
      _
    %p140 = scmp.lt.s32.totalorder %s9, 2
    // Predicated region
    $region21: #{hrnet_forward.26} parent=5 // pred_check
      %p141 = pneg %p140
    $region22: #{hrnet_forward.26} parent=5 // pred_check_branch
      %143 = sbr.rel (%p141) target = $region24
    $region23: #{hrnet_forward.26} parent=5 // pred_region
      // Predicated region
      $region25: #{hrnet_forward.26} parent=23 // pred_check
        %p144 = pneg %p43
      $region26: #{hrnet_forward.26} parent=23 // pred_check_branch
        %146 = sbr.rel (%p144) target = $region28
      $region27: #{hrnet_forward.26} parent=23 // pred_region
        %s147 = smul.u32 2, %s17
        %p148 = scmp.lt.s32.totalorder %s16, 1
        %s149 = scalar_select %p148, %s16, 1
        %p150 = scmp.lt.s32.totalorder %s147, 1
        %s151 = scalar_select %p150, %s147, 1
        %s152 = smul.addr %s149, 54
        %s153 = sadd.s32 %s151, %s152
        %s154 = smul.addr %s153, 4
        %s155 = scalar_lea.vmem %s0, %s154
        %s156 = smul.u32 2, %s17
      $region28: #{hrnet_forward.26} parent=23 // pred_fallthru
        _
    $region24: #{hrnet_forward.26} parent=5 // pred_fallthru
      _
    %p157 = scmp.le.s32.totalorder 1, %s9
    %p158 = scmp.lt.s32.totalorder %s9, 3
    %p159 = pnand %p157, %p158
    %p160 = pneg %p159
    // Predicated region
    $region29: #{hrnet_forward.26} parent=5 // pred_check
      _
    $region30: #{hrnet_forward.26} parent=5 // pred_check_branch
      %162 = sbr.rel (%p159) target = $region32
    $region31: #{hrnet_forward.26} parent=5 // pred_region
      %s163 = ssub.s32 %s9, 1
      %s164 = smul.u32 2, %s19
      %p165 = scmp.lt.s32.totalorder %s18, 1
      %s166 = scalar_select %p165, %s18, 1
      %p167 = scmp.lt.s32.totalorder %s164, 1
      %s168 = scalar_select %p167, %s164, 1
      %s169 = smul.addr %s166, 54
      %s170 = sadd.s32 %s168, %s169
      %s171 = smul.addr %s170, 4
      %s172 = scalar_lea.vmem %s0, %s171
      %p173 = pneg %p49
      %p174 = pneg %p46
      %p175 = pneg %p70
      %p176 = pneg %p67
      %p177 = pneg %p91
      %p178 = pneg %p88
      %p179 = pneg %p119
      %p180 = pneg %p116
      %s181 = smul.u32 2, %s19
      %p182 = scmp.lt.s32.totalorder %s18, 1
      %s183 = scalar_select %p182, %s18, 1
      %p184 = scmp.lt.s32.totalorder %s181, 1
      %s185 = scalar_select %p184, %s181, 1
      %s186 = smul.addr %s183, 2
      %s187 = sadd.s32 %s185, %s186
      %s188 = smul.addr %s187, 8
      %s189 = scalar_lea.vmem %s3, %s188
      %s190 = smul.u32 2, %s19
      %p191 = scmp.lt.s32.totalorder %s18, 1
      %s192 = scalar_select %p191, %s18, 1
      %p193 = scmp.lt.s32.totalorder %s190, 1
      %s194 = scalar_select %p193, %s190, 1
      %s195 = smul.addr %s192, 54
      %s196 = sadd.s32 %s194, %s195
      %s197 = smul.addr %s196, 4
      %s198 = scalar_lea.vmem %s0, %s197
      %s199 = smul.u32 2, %s19
      %s200 = smul.u32 2, %s19
      %p201 = scmp.lt.s32.totalorder %s18, 1
      %s202 = scalar_select %p201, %s18, 1
      %p203 = scmp.lt.s32.totalorder %s200, 1
      %s204 = scalar_select %p203, %s200, 1
      %s205 = smul.addr %s202, 2
      %s206 = sadd.s32 %s204, %s205
      %s207 = smul.addr %s206, 8
      %s208 = scalar_lea.vmem %s3, %s207
      %s209 = smul.u32 2, %s19
      %v211 = vld [vmem:[%s1] sm:$0xff]
      %v212 = vld [vmem:[%s198] sm:$0xff]
      %v213 = vld [vmem:[%s198 + $0x8] sm:$0xff]
      %v214 = vld [vmem:[%s198 + $0x10] sm:$0xff]
      %v215 = vld [vmem:[%s198 + $0x18] sm:$0xff]
      %v216 = vld [vmem:[%s198 + $0x20] sm:$0xff]
      %v217 = vld [vmem:[%s198 + $0x28] sm:$0xff]
      %v218 = vld [vmem:[%s198 + $0x30] sm:$0xff]
      %v219 = vld [vmem:[%s198 + $0x38] sm:$0xff]
      %v220 = vld [vmem:[%s198 + $0x40] sm:$0xff]
      %v221 = vld [vmem:[%s198 + $0x48] sm:$0xff]
      %v222 = vld [vmem:[%s198 + $0x50] sm:$0xff]
      %v223 = vld [vmem:[%s198 + $0x58] sm:$0xff]
      %v224 = vld [vmem:[%s198 + $0x60] sm:$0xff]
      %v225 = vld [vmem:[%s198 + $0x68] sm:$0xff]
      %v226 = vld [vmem:[%s198 + $0x70] sm:$0xff]
      %v227 = vld [vmem:[%s198 + $0x78] sm:$0xff]
      %v228 = vld [vmem:[%s198 + $0x80] sm:$0xff]
      %v229 = vld [vmem:[%s198 + $0x88] sm:$0xff]
      %v230 = vld [vmem:[%s198 + $0x90] sm:$0xff]
      %v231 = vld [vmem:[%s198 + $0x98] sm:$0xff]
      %v232 = vld [vmem:[%s198 + $0xa0] sm:$0xff]
      %v233 = vld [vmem:[%s198 + $0xa8] sm:$0xff]
      %v234 = vld [vmem:[%s198 + $0xb0] sm:$0xff]
      %v235 = vld [vmem:[%s198 + $0xb8] sm:$0xff]
      %v236 = vld [vmem:[%s198 + $0xc0] sm:$0xff]
      %v237 = vld [vmem:[%s198 + $0xc8] sm:$0xff]
      %v238 = vld [vmem:[%s198 + $0xd0] sm:$0xff]
      %v239 = vld [vmem:[%s2] sm:$0xff]
      %241 = vset.pattern.permute.xlu0 0
      %242 = vperm.xlu0 %241, %v239
      %v243 = vpop.permute.xlu0 %242
      %v246 = vunpack.c.l.b16 %v211
      %v247 = vunpack.c.h.b16 %v211
      %v248 = vpack.c.b16 %v246, %v246
      %v249 = vpack.c.b16 %v247, %v247
      %v278 = vunpack.c.l.b16 %v212
      %v279 = vunpack.c.h.b16 %v212
      %v280 = vunpack.c.l.b16 %v213
      %v281 = vunpack.c.h.b16 %v213
      %v282 = vunpack.c.l.b16 %v214
      %v283 = vunpack.c.h.b16 %v214
      %v284 = vunpack.c.l.b16 %v215
      %v285 = vunpack.c.h.b16 %v215
      %v286 = vunpack.c.l.b16 %v216
      %v287 = vunpack.c.h.b16 %v216
      %v288 = vunpack.c.l.b16 %v217
      %v289 = vunpack.c.h.b16 %v217
      %v290 = vunpack.c.l.b16 %v218
      %v291 = vunpack.c.h.b16 %v218
      %v292 = vunpack.c.l.b16 %v219
      %v293 = vunpack.c.h.b16 %v219
      %v294 = vunpack.c.l.b16 %v220
      %v295 = vunpack.c.h.b16 %v220
      %v296 = vunpack.c.l.b16 %v221
      %v297 = vunpack.c.h.b16 %v221
      %v298 = vunpack.c.l.b16 %v222
      %v299 = vunpack.c.h.b16 %v222
      %v300 = vunpack.c.l.b16 %v223
      %v301 = vunpack.c.h.b16 %v223
      %v302 = vunpack.c.l.b16 %v224
      %v303 = vunpack.c.h.b16 %v224
      %v304 = vunpack.c.l.b16 %v225
      %v305 = vunpack.c.h.b16 %v225
      %v306 = vunpack.c.l.b16 %v226
      %v307 = vunpack.c.h.b16 %v226
      %v308 = vunpack.c.l.b16 %v227
      %v309 = vunpack.c.h.b16 %v227
      %v310 = vunpack.c.l.b16 %v228
      %v311 = vunpack.c.h.b16 %v228
      %v312 = vunpack.c.l.b16 %v229
      %v313 = vunpack.c.h.b16 %v229
      %v314 = vunpack.c.l.b16 %v230
      %v315 = vunpack.c.h.b16 %v230
      %v316 = vunpack.c.l.b16 %v231
      %v317 = vunpack.c.h.b16 %v231
      %v318 = vunpack.c.l.b16 %v232
      %v319 = vunpack.c.h.b16 %v232
      %v320 = vunpack.c.l.b16 %v233
      %v321 = vunpack.c.h.b16 %v233
      %v322 = vunpack.c.l.b16 %v234
      %v323 = vunpack.c.h.b16 %v234
      %v324 = vunpack.c.l.b16 %v235
      %v325 = vunpack.c.h.b16 %v235
      %v326 = vunpack.c.l.b16 %v236
      %v327 = vunpack.c.h.b16 %v236
      %v328 = vunpack.c.l.b16 %v237
      %v329 = vunpack.c.h.b16 %v237
      %v330 = vunpack.c.l.b16 %v238
      %v331 = vunpack.c.h.b16 %v238
      %v332 = vpack.c.b16 %v280, %v278
      %v333 = vpack.c.b16 %v281, %v279
      %v334 = vpack.c.b16 %v284, %v282
      %v335 = vpack.c.b16 %v285, %v283
      %v336 = vpack.c.b16 %v288, %v286
      %v337 = vpack.c.b16 %v289, %v287
      %v338 = vpack.c.b16 %v292, %v290
      %v339 = vpack.c.b16 %v293, %v291
      %v340 = vpack.c.b16 %v296, %v294
      %v341 = vpack.c.b16 %v297, %v295
      %v342 = vpack.c.b16 %v300, %v298
      %v343 = vpack.c.b16 %v301, %v299
      %v344 = vpack.c.b16 %v304, %v302
      %v345 = vpack.c.b16 %v305, %v303
      %v346 = vpack.c.b16 %v308, %v306
      %v347 = vpack.c.b16 %v309, %v307
      %v348 = vpack.c.b16 %v312, %v310
      %v349 = vpack.c.b16 %v313, %v311
      %v350 = vpack.c.b16 %v316, %v314
      %v351 = vpack.c.b16 %v317, %v315
      %v352 = vpack.c.b16 %v320, %v318
      %v353 = vpack.c.b16 %v321, %v319
      %v354 = vpack.c.b16 %v324, %v322
      %v355 = vpack.c.b16 %v325, %v323
      %v356 = vpack.c.b16 %v328, %v326
      %v357 = vpack.c.b16 %v329, %v327
      %v358 = vpack.c.b16 %v330, %v330
      %v359 = vpack.c.b16 %v331, %v331
      %vm386 = vcmask 719872
      %v388 = vsel %vm386, %v249, 0
      %vm390 = vcmask 1043456
      %v392 = vsel %vm390, %v358, 0
      %v395 = vsel %vm390, %v359, 0
      %397 = vmatprep.subr.bf16.mxu0 %v333
      %398 = vmatpush1.bf16.msra.mxu0 %v332
      %399 = vmatprep.subr.bf16.mxu0 %v335
      %400 = vmatpush1.bf16.msra.mxu0 %v334
      %401 = vmatprep.subr.bf16.mxu0 %v337
      %402 = vmatpush1.bf16.msra.mxu0 %v336
      %403 = vmatprep.subr.bf16.mxu0 %v339
      %404 = vmatpush1.bf16.msra.mxu0 %v338
      %405 = vmatprep.subr.bf16.mxu0 %v341
      %406 = vmatpush1.bf16.msra.mxu0 %v340
      %407 = vmatprep.subr.bf16.mxu0 %v343
      %408 = vmatpush1.bf16.msra.mxu0 %v342
      %409 = vmatprep.subr.bf16.mxu0 %v345
      %410 = vmatpush1.bf16.msra.mxu0 %v344
      %411 = vmatprep.subr.bf16.mxu0 %v347
      %412 = vmatpush1.bf16.msra.mxu0 %v346
      %413 = vmatprep.subr.bf16.mxu0 %v349
      %414 = vmatpush1.bf16.msra.mxu0 %v348
      %415 = vmatprep.subr.bf16.mxu0 %v351
      %416 = vmatpush1.bf16.msra.mxu0 %v350
      %417 = vmatprep.subr.bf16.mxu0 %v353
      %418 = vmatpush1.bf16.msra.mxu0 %v352
      %419 = vmatprep.subr.bf16.mxu0 %v355
      %420 = vmatpush1.bf16.msra.mxu0 %v354
      %421 = vmatprep.subr.bf16.mxu0 %v357
      %422 = vmatpush1.bf16.msra.mxu0 %v356
      %423 = vmatprep.subr.bf16.mxu0 %v395
      %424 = vmatpush1.bf16.msra.mxu0 %v392
      %425 = vmatprep.subr.bf16.mxu0 0
      %426 = vmatpush1.bf16.msra.mxu0 0
      %427 = vmatprep.subr.bf16.mxu0 0
      %428 = vmatpush1.bf16.msra.mxu0 0
      %429 = vmatprep.mubr.bf16.mxu0 %v388
      %430 = vmatmul.mubr.bf16.gmra.mrb[0].mxu0 %v248
      %v431 = vpop.f32.mrb[0].mxu0
      %v432 = vadd.f32 %v243, %v431
      %v433 = vpop.f32.mrb[0].mxu0
      %v434 = vadd.f32 %v243, %v433
      %v435 = vpop.f32.mrb[0].mxu0
      %v436 = vpop.f32.mrb[0].mxu0
      %437 = vdwg.mxu0
      %v438 = vrot.slane %v432, 4
      %v439 = vmax.f32 %v432, %v438
      %v440 = vrot.slane %v439, 2
      %v441 = vmax.f32 %v439, %v440
      %v442 = vrot.slane %v441, 1
      %v443 = vmax.f32 %v441, %v442
      %v444 = vrot.slane %v434, 4
      %v445 = vmax.f32 %v434, %v444
      %v446 = vrot.slane %v445, 2
      %v447 = vmax.f32 %v445, %v446
      %v448 = vrot.slane %v447, 1
      %v449 = vmax.f32 %v447, %v448
      %v450 = vsub.f32 %v432, %v443
      %v451 = vsub.f32 %v434, %v449
      %v452 = vmul.f32 %v450, 1.442695
      %v453 = vpow.pop %v452
      %v454 = vmul.f32 %v451, 1.442695
      %v455 = vpow.pop %v454
      %v456 = vrot.slane %v453, 4
      %v457 = vadd.f32 %v453, %v456
      %v458 = vrot.slane %v457, 2
      %v459 = vadd.f32 %v457, %v458
      %v460 = vrot.slane %v459, 1
      %v461 = vadd.f32 %v459, %v460
      %v462 = vrot.slane %v455, 4
      %v463 = vadd.f32 %v455, %v462
      %v464 = vrot.slane %v463, 2
      %v465 = vadd.f32 %v463, %v464
      %v466 = vrot.slane %v465, 1
      %v467 = vadd.f32 %v465, %v466
      %v468 = vrcp.pop %v461
      %v469 = vrcp.pop %v467
      %v470 = vmul.f32 %v453, %v468
      %v471 = vmul.f32 %v455, %v469
      %472 = vst [vmem:[%s208] sm:$0xff] %v470
      %473 = vst [vmem:[%s208 + $0x8] sm:$0xff] %v471
      %s474 = smul.u32 2, %s19
      %p475 = scmp.lt.s32.totalorder %s18, 1
      %s476 = scalar_select %p475, %s18, 1
      %p477 = scmp.lt.s32.totalorder %s474, 1
      %s478 = scalar_select %p477, %s474, 1
      %s479 = smul.addr %s476, 2
      %s480 = sadd.s32 %s478, %s479
      %s481 = smul.addr %s480, 8
      %s482 = scalar_lea.vmem %s3, %s481
      // Predicated region
      $region33: #{hrnet_forward.26} parent=31 // pred_check
        %p483 = pneg %p116
      $region34: #{hrnet_forward.26} parent=31 // pred_check_branch
        %485 = sbr.rel (%p483) target = $region36
      $region35: #{hrnet_forward.26} parent=31 // pred_region
        %s486 = smul.u32 2, %s19
      $region36: #{hrnet_forward.26} parent=31 // pred_fallthru
        _
    $region32: #{hrnet_forward.26} parent=5 // pred_fallthru
      _
    %p487 = scmp.le.s32.totalorder 2, %s9
    // Predicated region
    $region37: #{hrnet_forward.26} parent=5 // pred_check
      %p488 = pneg %p487
    $region38: #{hrnet_forward.26} parent=5 // pred_check_branch
      %490 = sbr.rel (%p488) target = $region40
    $region39: #{hrnet_forward.26} parent=5 // pred_region
      %s491 = ssub.s32 %s9, 2
      // Predicated region
      $region41: #{hrnet_forward.26} parent=39 // pred_check
        %p492 = pneg %p122
      $region42: #{hrnet_forward.26} parent=39 // pred_check_branch
        %494 = sbr.rel (%p492) target = $region44
      $region43: #{hrnet_forward.26} parent=39 // pred_region
        %s495 = smul.u32 2, %s21
        %p496 = scmp.lt.s32.totalorder %s20, 1
        %s497 = scalar_select %p496, %s20, 1
        %p498 = scmp.lt.s32.totalorder %s495, 1
        %s499 = scalar_select %p498, %s495, 1
        %s500 = smul.addr %s497, 2
        %s501 = sadd.s32 %s499, %s500
        %s502 = smul.addr %s501, 8
        %s503 = scalar_lea.vmem %s3, %s502
      $region44: #{hrnet_forward.26} parent=39 // pred_fallthru
        _
    $region40: #{hrnet_forward.26} parent=5 // pred_fallthru
      _
  $region6: #{hrnet_forward.26} parent=0 // loop_footer
    %s13 = sadd.s32 1, %s9
  $region7: #{hrnet_forward.26} parent=0 // loop_footer_branch
    %8 = sbr.rel target = $region3
  $region8: #{hrnet_forward.26} parent=0 // loop_exit
    _

// kernel: hrnet_forward.27
$region0: #{hrnet_forward.27}
  #allocation0 [shape = 'u32[]', space=smem, size = 0x4, offset = 0x4, fixed_abs, tag = 'smem constant byte address 0x4 - core index']
  #allocation1 [shape = 'u32[144,128]{1,0:T(1,128)}', space=vmem, size = 0x12000, scoped, tag = 'internal scratch']
  %s0 = inlined_call_operand.vmem [shape: bf16[2,72,256], index: 0, kind: input, shape index: {}]
  %s1 = inlined_call_operand.vmem [shape: bf16[8,72], index: 1, kind: input, shape index: {}]
  %s2 = inlined_call_operand.vmem [shape: f32[8,1], index: 2, kind: input, shape index: {}]
  %s3 = inlined_call_operand.vmem [shape: f32[2,8,256], index: 3, kind: output, shape index: {}]
  %s4 = sld [smem:[#allocation0]]
  $region45: #{hrnet_forward.27} parent=0
    _
  %s6 = ssub.s32 1, %s4
  %s7 = scalar_select 0, %s6, %s4
  loop: start=0, step=1, limit=4
  $region2: #{hrnet_forward.27} parent=0 // loop_pre_header
    _
  $region3: #{hrnet_forward.27} parent=0 // loop_header
    %s9 = sphi 0, %s13
    %p10 = scmp.ge.s32.totalorder %s9, 4
    %s16 = sphi 0, %s28
    %s17 = sphi 0, %s24
    %s18 = sphi 0, %s16
    %s19 = sphi 0, %s17
    %s20 = sphi 0, %s18
    %s21 = sphi 0, %s19
    %s33 = sphi 0, %s35
    %s36 = sphi 0, %s33
    %s37 = sphi 0, %s36
    %s53 = sphi 0, %s37
    %s57 = sphi 0, %s57
    %s59 = sphi 0, %s57
    %s60 = sphi 0, %s59
    %s74 = sphi 0, %s60
    %s78 = sphi 0, %s78
    %s80 = sphi 0, %s78
    %s81 = sphi 0, %s80
    %s95 = sphi 0, %s81
    %s103 = sphi 0, %s105
    %s106 = sphi 0, %s103
    %s107 = sphi 0, %s106
    %s123 = sphi 0, %s107
  $region4: #{hrnet_forward.27} parent=0 // loop_header_branch
    %12 = sbr.rel (%p10) target = $region8
  $region5: #{hrnet_forward.27} parent=0 // loop_body
    %s14 = ssub.s32 %s9, 1
    %s15 = ssub.s32 %s9, 2
    %s22 = sadd.s32 1, %s17
    %p23 = scmp.ge.s32.totalorder %s22, 1
    %s24 = scalar_select %p23, 0, %s22
    %s25 = sadd.s32 1, %s16
    %s26 = scalar_select %p23, %s25, %s16
    %p27 = scmp.ge.s32.totalorder %s26, 2
    %s28 = scalar_select %p27, 0, %s26
    %s29 = ssub.s32 %s16, %s28
    %s30 = ssub.s32 %s17, %s24
    %s31 = sor.u32 %s29, %s30
    %p32 = scmp.eq.s32.totalorder %s31, 0
    %s34 = sadd.s32 %s33, 1
    %s35 = scalar_select %p32, %s33, %s34
    %p38 = pneg %p32
    %p39 = scmp.eq.s32.totalorder %s9, 1
    %p40 = por %p38, %p39
    %p41 = scmp.ne.s32.totalorder %s33, %s36
    %p42 = scmp.eq.s32.totalorder %s9, 0
    %p43 = por %p41, %p42
    %p44 = scmp.ne.s32.totalorder %s33, %s36
    %p45 = scmp.eq.s32.totalorder %s14, 1
    %p46 = por %p44, %p45
    %p47 = scmp.ne.s32.totalorder %s36, %s37
    %p48 = scmp.eq.s32.totalorder %s14, 0
    %p49 = por %p47, %p48
    %p50 = scmp.ne.s32.totalorder %s36, %s37
    %p51 = scmp.eq.s32.totalorder %s15, 1
    %p52 = por %p50, %p51
    %p54 = scmp.ne.s32.totalorder %s37, %s53
    %p55 = scmp.eq.s32.totalorder %s15, 0
    %p56 = por %p54, %p55
    %s58 = sadd.s32 %s57, 1
    %p61 = scmp.eq.s32.totalorder %s9, 1
    %p62 = scmp.ne.s32.totalorder %s57, %s59
    %p63 = scmp.eq.s32.totalorder %s9, 0
    %p64 = por %p62, %p63
    %p65 = scmp.ne.s32.totalorder %s57, %s59
    %p66 = scmp.eq.s32.totalorder %s14, 1
    %p67 = por %p65, %p66
    %p68 = scmp.ne.s32.totalorder %s59, %s60
    %p69 = scmp.eq.s32.totalorder %s14, 0
    %p70 = por %p68, %p69
    %p71 = scmp.ne.s32.totalorder %s59, %s60
    %p72 = scmp.eq.s32.totalorder %s15, 1
    %p73 = por %p71, %p72
    %p75 = scmp.ne.s32.totalorder %s60, %s74
    %p76 = scmp.eq.s32.totalorder %s15, 0
    %p77 = por %p75, %p76
    %s79 = sadd.s32 %s78, 1
    %p82 = scmp.eq.s32.totalorder %s9, 1
    %p83 = scmp.ne.s32.totalorder %s78, %s80
    %p84 = scmp.eq.s32.totalorder %s9, 0
    %p85 = por %p83, %p84
    %p86 = scmp.ne.s32.totalorder %s78, %s80
    %p87 = scmp.eq.s32.totalorder %s14, 1
    %p88 = por %p86, %p87
    %p89 = scmp.ne.s32.totalorder %s80, %s81
    %p90 = scmp.eq.s32.totalorder %s14, 0
    %p91 = por %p89, %p90
    %p92 = scmp.ne.s32.totalorder %s80, %s81
    %p93 = scmp.eq.s32.totalorder %s15, 1
    %p94 = por %p92, %p93
    %p96 = scmp.ne.s32.totalorder %s81, %s95
    %p97 = scmp.eq.s32.totalorder %s15, 0
    %p98 = por %p96, %p97
    %s99 = ssub.s32 %s16, %s28
    %s100 = ssub.s32 %s17, %s24
    %s101 = sor.u32 %s99, %s100
    %p102 = scmp.eq.s32.totalorder %s101, 0
    %s104 = sadd.s32 %s103, 1
    %s105 = scalar_select %p102, %s103, %s104
    %p108 = pneg %p102
    %p109 = scmp.eq.s32.totalorder %s9, 1
    %p110 = por %p108, %p109
    %p111 = scmp.ne.s32.totalorder %s103, %s106
    %p112 = scmp.eq.s32.totalorder %s9, 0
    %p113 = por %p111, %p112
    %p114 = scmp.ne.s32.totalorder %s103, %s106
    %p115 = scmp.eq.s32.totalorder %s14, 1
    %p116 = por %p114, %p115
    %p117 = scmp.ne.s32.totalorder %s106, %s107
    %p118 = scmp.eq.s32.totalorder %s14, 0
    %p119 = por %p117, %p118
    %p120 = scmp.ne.s32.totalorder %s106, %s107
    %p121 = scmp.eq.s32.totalorder %s15, 1
    %p122 = por %p120, %p121
    %p124 = scmp.ne.s32.totalorder %s107, %s123
    %p125 = scmp.eq.s32.totalorder %s15, 0
    %p126 = por %p124, %p125
    %p127 = scmp.le.s32.totalorder 1, %s9
    %p128 = scmp.lt.s32.totalorder %s9, 3
    %p129 = pnand %p127, %p128
    %p130 = pneg %p129
    // Predicated region
    $region9: #{hrnet_forward.27} parent=5 // pred_check
      _
    $region10: #{hrnet_forward.27} parent=5 // pred_check_branch
      %132 = sbr.rel (%p129) target = $region12
    $region11: #{hrnet_forward.27} parent=5 // pred_region
      %s133 = ssub.s32 %s9, 1
      // Predicated region
      $region13: #{hrnet_forward.27} parent=11 // pred_check
        %p134 = pneg %p70
      $region14: #{hrnet_forward.27} parent=11 // pred_check_branch
        %136 = sbr.rel (%p134) target = $region16
      $region15: #{hrnet_forward.27} parent=11 // pred_region
        _
      $region16: #{hrnet_forward.27} parent=11 // pred_fallthru
        _
      // Predicated region
      $region17: #{hrnet_forward.27} parent=11 // pred_check
        %p137 = pneg %p91
      $region18: #{hrnet_forward.27} parent=11 // pred_check_branch
        %139 = sbr.rel (%p137) target = $region20
      $region19: #{hrnet_forward.27} parent=11 // pred_region
        _
      $region20: #{hrnet_forward.27} parent=11 // pred_fallthru
        _
    $region12: #{hrnet_forward.27} parent=5 // pred_fallthru
      _
    %p140 = scmp.lt.s32.totalorder %s9, 2
    // Predicated region
    $region21: #{hrnet_forward.27} parent=5 // pred_check
      %p141 = pneg %p140
    $region22: #{hrnet_forward.27} parent=5 // pred_check_branch
      %143 = sbr.rel (%p141) target = $region24
    $region23: #{hrnet_forward.27} parent=5 // pred_region
      // Predicated region
      $region25: #{hrnet_forward.27} parent=23 // pred_check
        %p144 = pneg %p43
      $region26: #{hrnet_forward.27} parent=23 // pred_check_branch
        %146 = sbr.rel (%p144) target = $region28
      $region27: #{hrnet_forward.27} parent=23 // pred_region
        %s147 = smul.u32 2, %s17
        %p148 = scmp.lt.s32.totalorder %s16, 1
        %s149 = scalar_select %p148, %s16, 1
        %p150 = scmp.lt.s32.totalorder %s147, 1
        %s151 = scalar_select %p150, %s147, 1
        %s152 = smul.addr %s149, 18
        %s153 = sadd.s32 %s151, %s152
        %s154 = smul.addr %s153, 4
        %s155 = scalar_lea.vmem %s0, %s154
        %s156 = smul.u32 2, %s17
      $region28: #{hrnet_forward.27} parent=23 // pred_fallthru
        _
    $region24: #{hrnet_forward.27} parent=5 // pred_fallthru
      _
    %p157 = scmp.le.s32.totalorder 1, %s9
    %p158 = scmp.lt.s32.totalorder %s9, 3
    %p159 = pnand %p157, %p158
    %p160 = pneg %p159
    // Predicated region
    $region29: #{hrnet_forward.27} parent=5 // pred_check
      _
    $region30: #{hrnet_forward.27} parent=5 // pred_check_branch
      %162 = sbr.rel (%p159) target = $region32
    $region31: #{hrnet_forward.27} parent=5 // pred_region
      %s163 = ssub.s32 %s9, 1
      %s164 = smul.u32 2, %s19
      %p165 = scmp.lt.s32.totalorder %s18, 1
      %s166 = scalar_select %p165, %s18, 1
      %p167 = scmp.lt.s32.totalorder %s164, 1
      %s168 = scalar_select %p167, %s164, 1
      %s169 = smul.addr %s166, 18
      %s170 = sadd.s32 %s168, %s169
      %s171 = smul.addr %s170, 4
      %s172 = scalar_lea.vmem %s0, %s171
      %p173 = pneg %p49
      %p174 = pneg %p46
      %p175 = pneg %p70
      %p176 = pneg %p67
      %p177 = pneg %p91
      %p178 = pneg %p88
      %p179 = pneg %p119
      %p180 = pneg %p116
      %s181 = smul.u32 2, %s19
      %p182 = scmp.lt.s32.totalorder %s18, 1
      %s183 = scalar_select %p182, %s18, 1
      %p184 = scmp.lt.s32.totalorder %s181, 1
      %s185 = scalar_select %p184, %s181, 1
      %s186 = smul.addr %s183, 2
      %s187 = sadd.s32 %s185, %s186
      %s188 = smul.addr %s187, 8
      %s189 = scalar_lea.vmem %s3, %s188
      %s190 = smul.u32 2, %s19
      %p191 = scmp.lt.s32.totalorder %s18, 1
      %s192 = scalar_select %p191, %s18, 1
      %p193 = scmp.lt.s32.totalorder %s190, 1
      %s194 = scalar_select %p193, %s190, 1
      %s195 = smul.addr %s192, 18
      %s196 = sadd.s32 %s194, %s195
      %s197 = smul.addr %s196, 4
      %s198 = scalar_lea.vmem %s0, %s197
      %s199 = smul.u32 2, %s19
      %s200 = smul.u32 2, %s19
      %p201 = scmp.lt.s32.totalorder %s18, 1
      %s202 = scalar_select %p201, %s18, 1
      %p203 = scmp.lt.s32.totalorder %s200, 1
      %s204 = scalar_select %p203, %s200, 1
      %s205 = smul.addr %s202, 2
      %s206 = sadd.s32 %s204, %s205
      %s207 = smul.addr %s206, 8
      %s208 = scalar_lea.vmem %s3, %s207
      %s209 = smul.u32 2, %s19
      %v211 = vld [vmem:[%s1] sm:$0xf]
      %v212 = vld [vmem:[%s198] sm:$0xff]
      %v213 = vld [vmem:[%s198 + $0x8] sm:$0xff]
      %v214 = vld [vmem:[%s198 + $0x10] sm:$0xff]
      %v215 = vld [vmem:[%s198 + $0x18] sm:$0xff]
      %v216 = vld [vmem:[%s198 + $0x20] sm:$0xff]
      %v217 = vld [vmem:[%s198 + $0x28] sm:$0xff]
      %v218 = vld [vmem:[%s198 + $0x30] sm:$0xff]
      %v219 = vld [vmem:[%s198 + $0x38] sm:$0xff]
      %v220 = vld [vmem:[%s198 + $0x40] sm:$0xff]
      %v221 = vld [vmem:[%s2] sm:$0xff]
      %223 = vset.pattern.permute.xlu0 0
      %224 = vperm.xlu0 %223, %v221
      %v225 = vpop.permute.xlu0 %224
      %v236 = vunpack.c.l.b16 %v212
      %v237 = vunpack.c.h.b16 %v212
      %v238 = vunpack.c.l.b16 %v213
      %v239 = vunpack.c.h.b16 %v213
      %v240 = vunpack.c.l.b16 %v214
      %v241 = vunpack.c.h.b16 %v214
      %v242 = vunpack.c.l.b16 %v215
      %v243 = vunpack.c.h.b16 %v215
      %v244 = vunpack.c.l.b16 %v216
      %v245 = vunpack.c.h.b16 %v216
      %v246 = vunpack.c.l.b16 %v217
      %v247 = vunpack.c.h.b16 %v217
      %v248 = vunpack.c.l.b16 %v218
      %v249 = vunpack.c.h.b16 %v218
      %v250 = vunpack.c.l.b16 %v219
      %v251 = vunpack.c.h.b16 %v219
      %v252 = vunpack.c.l.b16 %v220
      %v253 = vunpack.c.h.b16 %v220
      %v254 = vpack.c.b16 %v238, %v236
      %v255 = vpack.c.b16 %v239, %v237
      %v256 = vpack.c.b16 %v242, %v240
      %v257 = vpack.c.b16 %v243, %v241
      %v258 = vpack.c.b16 %v246, %v244
      %v259 = vpack.c.b16 %v247, %v245
      %v260 = vpack.c.b16 %v250, %v248
      %v261 = vpack.c.b16 %v251, %v249
      %v262 = vpack.c.b16 %v252, %v252
      %v263 = vpack.c.b16 %v253, %v253
      %vm272 = vcmask 588800
      %v274 = vsel %vm272, %v211, 0
      %vm276 = vcmask 1043456
      %v278 = vsel %vm276, %v262, 0
      %v281 = vsel %vm276, %v263, 0
      %283 = vmatprep.subr.bf16.mxu0 %v255
      %284 = vmatpush1.bf16.msra.mxu0 %v254
      %285 = vmatprep.subr.bf16.mxu0 %v257
      %286 = vmatpush1.bf16.msra.mxu0 %v256
      %287 = vmatprep.subr.bf16.mxu0 %v259
      %288 = vmatpush1.bf16.msra.mxu0 %v258
      %289 = vmatprep.subr.bf16.mxu0 %v261
      %290 = vmatpush1.bf16.msra.mxu0 %v260
      %291 = vmatprep.subr.bf16.mxu0 %v281
      %292 = vmatpush1.bf16.msra.mxu0 %v278
      %293 = vmatprep.subr.bf16.mxu0 0
      %294 = vmatpush1.bf16.msra.mxu0 0
      %295 = vmatprep.subr.bf16.mxu0 0
      %296 = vmatpush1.bf16.msra.mxu0 0
      %297 = vmatprep.subr.bf16.mxu0 0
      %298 = vmatpush1.bf16.msra.mxu0 0
      %299 = vmatprep.subr.bf16.mxu0 0
      %300 = vmatpush1.bf16.msra.mxu0 0
      %301 = vmatprep.subr.bf16.mxu0 0
      %302 = vmatpush1.bf16.msra.mxu0 0
      %303 = vmatprep.subr.bf16.mxu0 0
      %304 = vmatpush1.bf16.msra.mxu0 0
      %305 = vmatprep.subr.bf16.mxu0 0
      %306 = vmatpush1.bf16.msra.mxu0 0
      %307 = vmatprep.subr.bf16.mxu0 0
      %308 = vmatpush1.bf16.msra.mxu0 0
      %309 = vmatprep.subr.bf16.mxu0 0
      %310 = vmatpush1.bf16.msra.mxu0 0
      %311 = vmatprep.subr.bf16.mxu0 0
      %312 = vmatpush1.bf16.msra.mxu0 0
      %313 = vmatprep.subr.bf16.mxu0 0
      %314 = vmatpush1.bf16.msra.mxu0 0
      %315 = vmatprep.mubr.bf16.mxu0 0
      %316 = vmatmul.mubr.bf16.gmra.mrb[0].mxu0 %v274
      %v317 = vpop.f32.mrb[0].mxu0
      %v318 = vadd.f32 %v225, %v317
      %v319 = vpop.f32.mrb[0].mxu0
      %v320 = vadd.f32 %v225, %v319
      %v321 = vpop.f32.mrb[0].mxu0
      %v322 = vpop.f32.mrb[0].mxu0
      %323 = vdwg.mxu0
      %324 = vst [vmem:[%s208] sm:$0xff] %v318
      %325 = vst [vmem:[%s208 + $0x8] sm:$0xff] %v320
      %s326 = smul.u32 2, %s19
      %p327 = scmp.lt.s32.totalorder %s18, 1
      %s328 = scalar_select %p327, %s18, 1
      %p329 = scmp.lt.s32.totalorder %s326, 1
      %s330 = scalar_select %p329, %s326, 1
      %s331 = smul.addr %s328, 2
      %s332 = sadd.s32 %s330, %s331
      %s333 = smul.addr %s332, 8
      %s334 = scalar_lea.vmem %s3, %s333
      // Predicated region
      $region33: #{hrnet_forward.27} parent=31 // pred_check
        %p335 = pneg %p116
      $region34: #{hrnet_forward.27} parent=31 // pred_check_branch
        %337 = sbr.rel (%p335) target = $region36
      $region35: #{hrnet_forward.27} parent=31 // pred_region
        %s338 = smul.u32 2, %s19
      $region36: #{hrnet_forward.27} parent=31 // pred_fallthru
        _
    $region32: #{hrnet_forward.27} parent=5 // pred_fallthru
      _
    %p339 = scmp.le.s32.totalorder 2, %s9
    // Predicated region
    $region37: #{hrnet_forward.27} parent=5 // pred_check
      %p340 = pneg %p339
    $region38: #{hrnet_forward.27} parent=5 // pred_check_branch
      %342 = sbr.rel (%p340) target = $region40
    $region39: #{hrnet_forward.27} parent=5 // pred_region
      %s343 = ssub.s32 %s9, 2
      // Predicated region
      $region41: #{hrnet_forward.27} parent=39 // pred_check
        %p344 = pneg %p122
      $region42: #{hrnet_forward.27} parent=39 // pred_check_branch
        %346 = sbr.rel (%p344) target = $region44
      $region43: #{hrnet_forward.27} parent=39 // pred_region
        %s347 = smul.u32 2, %s21
        %p348 = scmp.lt.s32.totalorder %s20, 1
        %s349 = scalar_select %p348, %s20, 1
        %p350 = scmp.lt.s32.totalorder %s347, 1
        %s351 = scalar_select %p350, %s347, 1
        %s352 = smul.addr %s349, 2
        %s353 = sadd.s32 %s351, %s352
        %s354 = smul.addr %s353, 8
        %s355 = scalar_lea.vmem %s3, %s354
      $region44: #{hrnet_forward.27} parent=39 // pred_fallthru
        _
    $region40: #{hrnet_forward.27} parent=5 // pred_fallthru
      _
  $region6: #{hrnet_forward.27} parent=0 // loop_footer
    %s13 = sadd.s32 1, %s9
  $region7: #{hrnet_forward.27} parent=0 // loop_footer_branch
    %8 = sbr.rel target = $region3
  $region8: #{hrnet_forward.27} parent=0 // loop_exit
    _

</llo_original>
